<compile_context>
chip_gen: v7x
topology: tpu7x:2x2x1
jax: 0.10.0
libtpu: 0.0.40
codegen_flags: <defaults>
</compile_context>

<pallas_src>
import functools

import jax
import jax.numpy as jnp
from jax.experimental import pallas as pl
from jax.experimental.pallas import tpu as pltpu

NPAD = 128                        # lane-dense padded channel / class dimension
CONV_CHANNELS = (16, 32, 32, 32)  # real output channels of the 4-conv backbone
TM_MAX = 256                      # pooled rows per grid step (v6e could use 512)
VMEM_LIMIT = 32 * 1024 * 1024     # explicit scoped-VMEM budget (v5e default: 16 MiB)


def _round_up(x, m):
    return ((x + m - 1) // m) * m


def _choose_tiling(m, tm_max=TM_MAX):
    """M tile: multiple of 8, <= tm_max, never degenerate full-M when it can be
    split.  Splitting into >= 2 blocks lets the "parallel" grid axis shard
    across v7x's two TensorCores."""
    m8 = _round_up(m, 8)
    if m8 <= tm_max:
        tm = m8 // 2 if (m8 >= 16 and m8 % 16 == 0) else m8
    else:
        tm = tm_max
    return tm, _round_up(m8, tm)


# -----------------------------------------------------------------------------
# Pallas kernel 1: fused conv-GEMM + 2x2 max-pool + bias + ReLU
# -----------------------------------------------------------------------------
def _conv_pool_kernel(a_ref, w_ref, b_ref, o_ref):
    """a_ref: (4, tm, K) im2col rows, one slab per 2x2-pool window position.
    One long MXU pass over all four slabs, then a 4-way max + bias + ReLU."""
    p, tm, k = a_ref.shape
    a = a_ref[...].reshape(p * tm, k)                       # free: tm % 8 == 0
    acc = jnp.dot(a, w_ref[...], preferred_element_type=jnp.float32)  # (4tm,128)
    pooled = jnp.maximum(jnp.maximum(acc[0 * tm:1 * tm], acc[1 * tm:2 * tm]),
                         jnp.maximum(acc[2 * tm:3 * tm], acc[3 * tm:4 * tm]))
    o_ref[...] = jnp.maximum(pooled + b_ref[...], 0.0).astype(o_ref.dtype)


def conv_relu_pool(a_stack, w_pad, b_pad, out_dtype=jnp.bfloat16):
    """a_stack: (4, M, K) bf16 stacked im2col slabs.  w_pad: (K, 128) bf16.
    b_pad: (1, 128) f32.  Returns (M, 128) out_dtype."""
    p, m, k = a_stack.shape
    n = w_pad.shape[1]
    tm, m_pad = _choose_tiling(m)
    if m_pad != m:
        a_stack = jnp.pad(a_stack, ((0, 0), (0, m_pad - m), (0, 0)))
    grid = (m_pad // tm,)
    out = pl.pallas_call(
        _conv_pool_kernel,
        out_shape=jax.ShapeDtypeStruct((m_pad, n), out_dtype),
        grid=grid,
        in_specs=[pl.BlockSpec((p, tm, k), lambda i: (0, i, 0)),
                  pl.BlockSpec((k, n), lambda i: (0, 0)),
                  pl.BlockSpec((1, n), lambda i: (0, 0))],
        out_specs=pl.BlockSpec((tm, n), lambda i: (i, 0)),
        compiler_params=pltpu.CompilerParams(
            dimension_semantics=("parallel",),
            vmem_limit_bytes=VMEM_LIMIT),
    )(a_stack, w_pad, b_pad)
    return out[:m] if m_pad != m else out


# -----------------------------------------------------------------------------
# Pallas kernel 2: fused tail = conv4 + fc + cross-entropy + multi-kernel MMD
# -----------------------------------------------------------------------------
def _tail_kernel(a_ref, w4_ref, b4_ref, fcw_ref, fcb_ref, onehot_ref,
                 clf_ref, mmd_ref, *, batch, num_classes, kernel_mul, kernel_num):
    # ---- conv4 block (M = 2B is tiny, so four small matmuls are fine) -------
    w4 = w4_ref[...]
    acc = jnp.maximum(
        jnp.maximum(jnp.dot(a_ref[0], w4, preferred_element_type=jnp.float32),
                    jnp.dot(a_ref[1], w4, preferred_element_type=jnp.float32)),
        jnp.maximum(jnp.dot(a_ref[2], w4, preferred_element_type=jnp.float32),
                    jnp.dot(a_ref[3], w4, preferred_element_type=jnp.float32)))
    feat = jnp.maximum(acc + b4_ref[...], 0.0)       # (2B, 128) f32, pad lanes 0

    # ---- classifier head + stable masked cross-entropy ----------------------
    logits = jnp.dot(feat[0:batch, :], fcw_ref[...],
                     preferred_element_type=jnp.float32) + fcb_ref[...]
    lane = jax.lax.broadcasted_iota(jnp.int32, logits.shape, 1)
    masked = jnp.where(lane < num_classes, logits, jnp.float32(-1e30))
    m = jnp.max(masked, axis=-1, keepdims=True)
    lse = jnp.log(jnp.sum(jnp.exp(masked - m), axis=-1, keepdims=True)) + m
    nll = -jnp.sum(onehot_ref[...] * (masked - lse), axis=-1, keepdims=True)
    clf_ref[...] = jnp.sum(nll, axis=0, keepdims=True) * (1.0 / batch)

    # ---- multi-kernel Gaussian MMD (DAN formulation, biased estimator) ------
    n = 2 * batch
    sq = jnp.sum(feat * feat, axis=-1, keepdims=True)                  # (2B,1)
    gram = jax.lax.dot_general(feat, feat, (((1,), (1,)), ((), ())),
                               preferred_element_type=jnp.float32)     # (2B,2B)
    l2 = jnp.maximum(sq + sq.T - 2.0 * gram, 0.0)

    bw = jnp.sum(l2, axis=(0, 1), keepdims=True) / float(n * n - n)    # (1,1)
    bw = jnp.maximum(bw, 1e-12)
    bw_base = bw * (1.0 / (kernel_mul ** (kernel_num // 2)))           # smallest

    # +/-1 sign mask (same-domain pairs +1, cross-domain pairs -1).
    ri = jax.lax.broadcasted_iota(jnp.int32, l2.shape, 0)
    ci = jax.lax.broadcasted_iota(jnp.int32, l2.shape, 1)
    sign = jnp.where((ri < batch) == (ci < batch), 1.0, -1.0)

    acc_mmd = jnp.zeros((1, 1), jnp.float32)
    if kernel_mul == 2.0:
        # one EUP exp at the widest bandwidth, rest via repeated squaring (VPU)
        inv_widest = pl.reciprocal(bw_base * (kernel_mul ** (kernel_num - 1)),
                                   approx=True)
        cur = jnp.exp(-(l2 * inv_widest))
        for i in range(kernel_num):
            acc_mmd = acc_mmd + jnp.sum(sign * cur, axis=(0, 1), keepdims=True)
            if i + 1 < kernel_num:
                cur = cur * cur
    else:
        for i in range(kernel_num):
            inv_bw = pl.reciprocal(bw_base * (kernel_mul ** i), approx=True)
            acc_mmd = acc_mmd + jnp.sum(sign * jnp.exp(-(l2 * inv_bw)),
                                        axis=(0, 1), keepdims=True)
    mmd_ref[...] = acc_mmd * (1.0 / float(batch * batch))


def tail_losses(a_stack4, w4, b4, fc_w, fc_b, onehot, *, batch, num_classes,
                kernel_mul=2.0, kernel_num=5):
    vmem = pl.BlockSpec(memory_space=pltpu.MemorySpace.VMEM)
    clf, mmd = pl.pallas_call(
        functools.partial(_tail_kernel, batch=batch, num_classes=num_classes,
                          kernel_mul=kernel_mul, kernel_num=kernel_num),
        out_shape=(jax.ShapeDtypeStruct((1, 1), jnp.float32),
                   jax.ShapeDtypeStruct((1, 1), jnp.float32)),
        in_specs=[vmem] * 6,
        out_specs=(vmem, vmem),
        compiler_params=pltpu.CompilerParams(vmem_limit_bytes=VMEM_LIMIT),
    )(a_stack4, w4, b4, fc_w, fc_b, onehot)
    return clf[0, 0], mmd[0, 0]


# -----------------------------------------------------------------------------
# JAX glue: im2col, pool-position stacking, parameter init, forward
# -----------------------------------------------------------------------------
def im2col_3x3(x, k_pad):
    """x: (B,H,W,C) with only the REAL channels -> (B,H,W,k_pad) 3x3 patches
    (stride 1, pad 1), zero-padded on the last axis up to k_pad lanes."""
    b, h, w, c = x.shape
    xp = jnp.pad(x, ((0, 0), (1, 1), (1, 1), (0, 0)))
    patches = jnp.concatenate([xp[:, dh:dh + h, dw:dw + w, :]
                               for dh in range(3) for dw in range(3)], axis=-1)
    if k_pad > 9 * c:
        patches = jnp.pad(patches, ((0, 0), (0, 0), (0, 0), (0, k_pad - 9 * c)))
    return patches


def pool_position_stack(patches):
    """(B,H,W,K) -> (4, B*(H/2)*(W/2), K): one slab per 2x2-pool position."""
    b, h, w, k = patches.shape
    ho, wo = h // 2, w // 2
    slabs = [patches[:, ph::2, pw::2, :].reshape(b * ho * wo, k)
             for ph in range(2) for pw in range(2)]
    return jnp.stack(slabs, axis=0)


def init_params(key, in_ch=4, num_classes=8):
    """Conv weights hold only real-cin rows (K padded to a 128 multiple) and
    are padded to 128 output lanes; padded weight/bias entries are zero so the
    lane padding stays zero through conv/ReLU/pool."""
    chans = (in_ch,) + CONV_CHANNELS
    keys = jax.random.split(key, 5)
    conv_w, conv_b = [], []
    for i in range(4):
        cin, cout = chans[i], chans[i + 1]
        k_real = 9 * cin
        k_pad = _round_up(k_real, 128)
        w_real = jax.random.normal(keys[i], (k_real, cout), jnp.float32) * 0.1
        w = jnp.zeros((k_pad, NPAD), jnp.float32).at[:k_real, :cout].set(w_real)
        conv_w.append(w.astype(jnp.bfloat16))
        conv_b.append(jnp.zeros((1, NPAD), jnp.float32))
    fc_real = jax.random.normal(keys[4], (chans[-1], num_classes),
                                jnp.float32) * 0.1
    fc_w = jnp.zeros((NPAD, NPAD), jnp.float32).at[:chans[-1], :num_classes].set(fc_real)
    return {"conv_w": conv_w, "conv_b": conv_b,
            "fc_w": fc_w, "fc_b": jnp.zeros((1, NPAD), jnp.float32)}


def transfer_net_forward(params, source_data, target_data, source_label,
                         num_classes=8):
    """Mirrors TransferNet.forward with transfer_loss='mmd':
    single-pass backbone over concat(source, target), fc+CE+MMD fused tail."""
    b = source_data.shape[0]
    data = jnp.concatenate([source_data, target_data], axis=0)       # (2B,C,H,W)
    x = jnp.transpose(data, (0, 2, 3, 1)).astype(jnp.bfloat16)       # NHWC bf16

    # conv1..conv3: fused GEMM+pool+bias+ReLU pallas calls; de-pad channels
    # before each im2col so K stays at the real 9*cin (rounded to 128 lanes).
    for li in range(3):
        bsz, h, w, _ = x.shape
        k_pad = params["conv_w"][li].shape[0]
        a_stack = pool_position_stack(im2col_3x3(x, k_pad))
        y = conv_relu_pool(a_stack, params["conv_w"][li], params["conv_b"][li])
        x = y.reshape(bsz, h // 2, w // 2, NPAD)[..., :CONV_CHANNELS[li]]
        x = x.astype(jnp.bfloat16)

    # conv4 + fc + cross-entropy + MMD fused into one pallas_call.
    k_pad4 = params["conv_w"][3].shape[0]
    a_stack4 = pool_position_stack(im2col_3x3(x, k_pad4))            # (4,2B,K4)
    onehot = jax.nn.one_hot(source_label, NPAD, dtype=jnp.float32)   # (B,128)
    clf_loss, transfer_loss = tail_losses(
        a_stack4, params["conv_w"][3], params["conv_b"][3],
        params["fc_w"], params["fc_b"], onehot,
        batch=b, num_classes=num_classes)
    return clf_loss, transfer_loss, 0.0


# -----------------------------------------------------------------------------
# Driver
# -----------------------------------------------------------------------------
if __name__ == "__main__":
    B, C, H, W = 2, 4, 16, 16
    NUM_CLASSES = 8

    root = jax.random.PRNGKey(0)
    k_param, k_src, k_tgt, k_lbl = jax.random.split(root, 4)

    params = init_params(k_param, in_ch=C, num_classes=NUM_CLASSES)
    source_data = jax.random.normal(k_src, (B, C, H, W), jnp.float32)
    target_data = jax.random.normal(k_tgt, (B, C, H, W), jnp.float32)
    source_label = jax.random.randint(k_lbl, (B,), 0, NUM_CLASSES)

    clf_loss, mmd, adv = jax.jit(
        functools.partial(transfer_net_forward, num_classes=NUM_CLASSES)
    )(params, source_data, target_data, source_label)

    clf_loss = jax.block_until_ready(clf_loss)
    mmd = jax.block_until_ready(mmd)

    assert jnp.isfinite(clf_loss) and jnp.isfinite(mmd)
    print("KERNEL_OK")
</pallas_src>

<mosaic_0001>
module attributes {stable_mosaic.version = 11 : i64} {
  func.func @_conv_pool_kernel(%arg0: i32, %arg1: memref<4x128x128xbf16, #tpu.memory_space<vmem>>, %arg2: memref<128x128xbf16, #tpu.memory_space<vmem>>, %arg3: memref<1x128xf32, #tpu.memory_space<vmem>>, %arg4: memref<128x128xbf16, #tpu.memory_space<vmem>>) attributes {dimension_semantics = [#tpu.dimension_semantics<parallel>], iteration_bounds = array<i64: 2>, scalar_prefetch = 0 : i64, scratch_operands = 0 : i64, tpu.core_type = #tpu.core_type<tc>, window_params = [{transform_indices = @transform_0, window_bounds = array<i64: 4, 128, 128>}, {pipeline_mode = #tpu.pipeline_mode<synchronous>, transform_indices = @transform_1, window_bounds = array<i64: 128, 128>}, {pipeline_mode = #tpu.pipeline_mode<synchronous>, transform_indices = @transform_2, window_bounds = array<i64: 1, 128>}, {transform_indices = @transform_3, window_bounds = array<i64: 128, 128>}]} {
    %c0 = arith.constant 0 : index
    %c0_0 = arith.constant 0 : index
    %c0_1 = arith.constant 0 : index
    %0 = vector.load %arg1[%c0, %c0_0, %c0_1] : memref<4x128x128xbf16, #tpu.memory_space<vmem>>, vector<4x128x128xbf16>
    %1 = vector.shape_cast %0 : vector<4x128x128xbf16> to vector<512x128xbf16>
    %c0_2 = arith.constant 0 : index
    %c0_3 = arith.constant 0 : index
    %2 = vector.load %arg2[%c0_2, %c0_3] : memref<128x128xbf16, #tpu.memory_space<vmem>>, vector<128x128xbf16>
    %cst = arith.constant dense<0.000000e+00> : vector<512x128xf32>
    %3 = tpu.matmul %1, %2, %cst {dimension_numbers = #tpu.dot_dimension_numbers<[1], [0], [0], [1], [0, 0, 1, 1], [], []>} : vector<512x128xbf16>, vector<128x128xbf16>, vector<512x128xf32> -> vector<512x128xf32>
    %4 = vector.extract_strided_slice %3 {offsets = [0, 0], sizes = [128, 128], strides = [1, 1]} : vector<512x128xf32> to vector<128x128xf32>
    %5 = vector.extract_strided_slice %3 {offsets = [128, 0], sizes = [128, 128], strides = [1, 1]} : vector<512x128xf32> to vector<128x128xf32>
    %6 = arith.maximumf %4, %5 : vector<128x128xf32>
    %7 = vector.extract_strided_slice %3 {offsets = [256, 0], sizes = [128, 128], strides = [1, 1]} : vector<512x128xf32> to vector<128x128xf32>
    %8 = vector.extract_strided_slice %3 {offsets = [384, 0], sizes = [128, 128], strides = [1, 1]} : vector<512x128xf32> to vector<128x128xf32>
    %9 = arith.maximumf %7, %8 : vector<128x128xf32>
    %10 = arith.maximumf %6, %9 : vector<128x128xf32>
    %c0_4 = arith.constant 0 : index
    %c0_5 = arith.constant 0 : index
    %11 = vector.load %arg3[%c0_4, %c0_5] : memref<1x128xf32, #tpu.memory_space<vmem>>, vector<1x128xf32>
    %12 = vector.broadcast %11 : vector<1x128xf32> to vector<128x128xf32>
    %13 = arith.addf %10, %12 : vector<128x128xf32>
    %cst_6 = arith.constant 0.000000e+00 : f32
    %14 = vector.broadcast %cst_6 : f32 to vector<128x128xf32>
    %15 = arith.maximumf %13, %14 : vector<128x128xf32>
    %16 = arith.truncf %15 : vector<128x128xf32> to vector<128x128xbf16>
    %c0_7 = arith.constant 0 : index
    %c0_8 = arith.constant 0 : index
    %17 = vector.load %arg4[%c0_7, %c0_8] : memref<128x128xbf16, #tpu.memory_space<vmem>>, vector<128x128xbf16>
    tpu.vector_store %arg4[%c0_7, %c0_8], %16 {strides = array<i32>} : memref<128x128xbf16, #tpu.memory_space<vmem>>, vector<128x128xbf16>,
    return
  }
  func.func @transform_0(%arg0: i32) -> (i32, i32, i32) {
    %c0_i32 = arith.constant 0 : i32
    %c0_i32_0 = arith.constant 0 : i32
    %c0_i32_1 = arith.constant 0 : i32
    return %c0_i32, %arg0, %c0_i32_0 : i32, i32, i32
  }
  func.func @transform_1(%arg0: i32) -> (i32, i32) {
    %c0_i32 = arith.constant 0 : i32
    %c0_i32_0 = arith.constant 0 : i32
    %c0_i32_1 = arith.constant 0 : i32
    return %c0_i32, %c0_i32_0 : i32, i32
  }
  func.func @transform_2(%arg0: i32) -> (i32, i32) {
    %c0_i32 = arith.constant 0 : i32
    %c0_i32_0 = arith.constant 0 : i32
    %c0_i32_1 = arith.constant 0 : i32
    return %c0_i32, %c0_i32_0 : i32, i32
  }
  func.func @transform_3(%arg0: i32) -> (i32, i32) {
    %c0_i32 = arith.constant 0 : i32
    %c0_i32_0 = arith.constant 0 : i32
    return %arg0, %c0_i32 : i32, i32
  }
}

module attributes {stable_mosaic.version = 11 : i64} {
  func.func @_conv_pool_kernel(%arg0: i32, %arg1: memref<4x32x256xbf16, #tpu.memory_space<vmem>>, %arg2: memref<256x128xbf16, #tpu.memory_space<vmem>>, %arg3: memref<1x128xf32, #tpu.memory_space<vmem>>, %arg4: memref<32x128xbf16, #tpu.memory_space<vmem>>) attributes {dimension_semantics = [#tpu.dimension_semantics<parallel>], iteration_bounds = array<i64: 2>, scalar_prefetch = 0 : i64, scratch_operands = 0 : i64, tpu.core_type = #tpu.core_type<tc>, window_params = [{transform_indices = @transform_0, window_bounds = array<i64: 4, 32, 256>}, {pipeline_mode = #tpu.pipeline_mode<synchronous>, transform_indices = @transform_1, window_bounds = array<i64: 256, 128>}, {pipeline_mode = #tpu.pipeline_mode<synchronous>, transform_indices = @transform_2, window_bounds = array<i64: 1, 128>}, {transform_indices = @transform_3, window_bounds = array<i64: 32, 128>}]} {
    %c0 = arith.constant 0 : index
    %c0_0 = arith.constant 0 : index
    %c0_1 = arith.constant 0 : index
    %0 = vector.load %arg1[%c0, %c0_0, %c0_1] : memref<4x32x256xbf16, #tpu.memory_space<vmem>>, vector<4x32x256xbf16>
    %1 = vector.shape_cast %0 : vector<4x32x256xbf16> to vector<128x256xbf16>
    %c0_2 = arith.constant 0 : index
    %c0_3 = arith.constant 0 : index
    %2 = vector.load %arg2[%c0_2, %c0_3] : memref<256x128xbf16, #tpu.memory_space<vmem>>, vector<256x128xbf16>
    %cst = arith.constant dense<0.000000e+00> : vector<128x128xf32>
    %3 = tpu.matmul %1, %2, %cst {dimension_numbers = #tpu.dot_dimension_numbers<[1], [0], [0], [1], [0, 0, 1, 1], [], []>} : vector<128x256xbf16>, vector<256x128xbf16>, vector<128x128xf32> -> vector<128x128xf32>
    %4 = vector.extract_strided_slice %3 {offsets = [0, 0], sizes = [32, 128], strides = [1, 1]} : vector<128x128xf32> to vector<32x128xf32>
    %5 = vector.extract_strided_slice %3 {offsets = [32, 0], sizes = [32, 128], strides = [1, 1]} : vector<128x128xf32> to vector<32x128xf32>
    %6 = arith.maximumf %4, %5 : vector<32x128xf32>
    %7 = vector.extract_strided_slice %3 {offsets = [64, 0], sizes = [32, 128], strides = [1, 1]} : vector<128x128xf32> to vector<32x128xf32>
    %8 = vector.extract_strided_slice %3 {offsets = [96, 0], sizes = [32, 128], strides = [1, 1]} : vector<128x128xf32> to vector<32x128xf32>
    %9 = arith.maximumf %7, %8 : vector<32x128xf32>
    %10 = arith.maximumf %6, %9 : vector<32x128xf32>
    %c0_4 = arith.constant 0 : index
    %c0_5 = arith.constant 0 : index
    %11 = vector.load %arg3[%c0_4, %c0_5] : memref<1x128xf32, #tpu.memory_space<vmem>>, vector<1x128xf32>
    %12 = vector.broadcast %11 : vector<1x128xf32> to vector<32x128xf32>
    %13 = arith.addf %10, %12 : vector<32x128xf32>
    %cst_6 = arith.constant 0.000000e+00 : f32
    %14 = vector.broadcast %cst_6 : f32 to vector<32x128xf32>
    %15 = arith.maximumf %13, %14 : vector<32x128xf32>
    %16 = arith.truncf %15 : vector<32x128xf32> to vector<32x128xbf16>
    %c0_7 = arith.constant 0 : index
    %c0_8 = arith.constant 0 : index
    %17 = vector.load %arg4[%c0_7, %c0_8] : memref<32x128xbf16, #tpu.memory_space<vmem>>, vector<32x128xbf16>
    tpu.vector_store %arg4[%c0_7, %c0_8], %16 {strides = array<i32>} : memref<32x128xbf16, #tpu.memory_space<vmem>>, vector<32x128xbf16>,
    return
  }
  func.func @transform_0(%arg0: i32) -> (i32, i32, i32) {
    %c0_i32 = arith.constant 0 : i32
    %c0_i32_0 = arith.constant 0 : i32
    %c0_i32_1 = arith.constant 0 : i32
    return %c0_i32, %arg0, %c0_i32_0 : i32, i32, i32
  }
  func.func @transform_1(%arg0: i32) -> (i32, i32) {
    %c0_i32 = arith.constant 0 : i32
    %c0_i32_0 = arith.constant 0 : i32
    %c0_i32_1 = arith.constant 0 : i32
    return %c0_i32, %c0_i32_0 : i32, i32
  }
  func.func @transform_2(%arg0: i32) -> (i32, i32) {
    %c0_i32 = arith.constant 0 : i32
    %c0_i32_0 = arith.constant 0 : i32
    %c0_i32_1 = arith.constant 0 : i32
    return %c0_i32, %c0_i32_0 : i32, i32
  }
  func.func @transform_3(%arg0: i32) -> (i32, i32) {
    %c0_i32 = arith.constant 0 : i32
    %c0_i32_0 = arith.constant 0 : i32
    return %arg0, %c0_i32 : i32, i32
  }
}

module attributes {stable_mosaic.version = 11 : i64} {
  func.func @_conv_pool_kernel(%arg0: i32, %arg1: memref<4x8x384xbf16, #tpu.memory_space<vmem>>, %arg2: memref<384x128xbf16, #tpu.memory_space<vmem>>, %arg3: memref<1x128xf32, #tpu.memory_space<vmem>>, %arg4: memref<8x128xbf16, #tpu.memory_space<vmem>>) attributes {dimension_semantics = [#tpu.dimension_semantics<parallel>], iteration_bounds = array<i64: 2>, scalar_prefetch = 0 : i64, scratch_operands = 0 : i64, tpu.core_type = #tpu.core_type<tc>, window_params = [{transform_indices = @transform_0, window_bounds = array<i64: 4, 8, 384>}, {pipeline_mode = #tpu.pipeline_mode<synchronous>, transform_indices = @transform_1, window_bounds = array<i64: 384, 128>}, {pipeline_mode = #tpu.pipeline_mode<synchronous>, transform_indices = @transform_2, window_bounds = array<i64: 1, 128>}, {transform_indices = @transform_3, window_bounds = array<i64: 8, 128>}]} {
    %c0 = arith.constant 0 : index
    %c0_0 = arith.constant 0 : index
    %c0_1 = arith.constant 0 : index
    %0 = vector.load %arg1[%c0, %c0_0, %c0_1] : memref<4x8x384xbf16, #tpu.memory_space<vmem>>, vector<4x8x384xbf16>
    %1 = vector.shape_cast %0 : vector<4x8x384xbf16> to vector<32x384xbf16>
    %c0_2 = arith.constant 0 : index
    %c0_3 = arith.constant 0 : index
    %2 = vector.load %arg2[%c0_2, %c0_3] : memref<384x128xbf16, #tpu.memory_space<vmem>>, vector<384x128xbf16>
    %cst = arith.constant dense<0.000000e+00> : vector<32x128xf32>
    %3 = tpu.matmul %1, %2, %cst {dimension_numbers = #tpu.dot_dimension_numbers<[1], [0], [0], [1], [0, 0, 1, 1], [], []>} : vector<32x384xbf16>, vector<384x128xbf16>, vector<32x128xf32> -> vector<32x128xf32>
    %4 = vector.extract_strided_slice %3 {offsets = [0, 0], sizes = [8, 128], strides = [1, 1]} : vector<32x128xf32> to vector<8x128xf32>
    %5 = vector.extract_strided_slice %3 {offsets = [8, 0], sizes = [8, 128], strides = [1, 1]} : vector<32x128xf32> to vector<8x128xf32>
    %6 = arith.maximumf %4, %5 : vector<8x128xf32>
    %7 = vector.extract_strided_slice %3 {offsets = [16, 0], sizes = [8, 128], strides = [1, 1]} : vector<32x128xf32> to vector<8x128xf32>
    %8 = vector.extract_strided_slice %3 {offsets = [24, 0], sizes = [8, 128], strides = [1, 1]} : vector<32x128xf32> to vector<8x128xf32>
    %9 = arith.maximumf %7, %8 : vector<8x128xf32>
    %10 = arith.maximumf %6, %9 : vector<8x128xf32>
    %c0_4 = arith.constant 0 : index
    %c0_5 = arith.constant 0 : index
    %11 = vector.load %arg3[%c0_4, %c0_5] : memref<1x128xf32, #tpu.memory_space<vmem>>, vector<1x128xf32>
    %12 = vector.broadcast %11 : vector<1x128xf32> to vector<8x128xf32>
    %13 = arith.addf %10, %12 : vector<8x128xf32>
    %cst_6 = arith.constant 0.000000e+00 : f32
    %14 = vector.broadcast %cst_6 : f32 to vector<8x128xf32>
    %15 = arith.maximumf %13, %14 : vector<8x128xf32>
    %16 = arith.truncf %15 : vector<8x128xf32> to vector<8x128xbf16>
    %c0_7 = arith.constant 0 : index
    %c0_8 = arith.constant 0 : index
    %17 = vector.load %arg4[%c0_7, %c0_8] : memref<8x128xbf16, #tpu.memory_space<vmem>>, vector<8x128xbf16>
    tpu.vector_store %arg4[%c0_7, %c0_8], %16 {strides = array<i32>} : memref<8x128xbf16, #tpu.memory_space<vmem>>, vector<8x128xbf16>,
    return
  }
  func.func @transform_0(%arg0: i32) -> (i32, i32, i32) {
    %c0_i32 = arith.constant 0 : i32
    %c0_i32_0 = arith.constant 0 : i32
    %c0_i32_1 = arith.constant 0 : i32
    return %c0_i32, %arg0, %c0_i32_0 : i32, i32, i32
  }
  func.func @transform_1(%arg0: i32) -> (i32, i32) {
    %c0_i32 = arith.constant 0 : i32
    %c0_i32_0 = arith.constant 0 : i32
    %c0_i32_1 = arith.constant 0 : i32
    return %c0_i32, %c0_i32_0 : i32, i32
  }
  func.func @transform_2(%arg0: i32) -> (i32, i32) {
    %c0_i32 = arith.constant 0 : i32
    %c0_i32_0 = arith.constant 0 : i32
    %c0_i32_1 = arith.constant 0 : i32
    return %c0_i32, %c0_i32_0 : i32, i32
  }
  func.func @transform_3(%arg0: i32) -> (i32, i32) {
    %c0_i32 = arith.constant 0 : i32
    %c0_i32_0 = arith.constant 0 : i32
    return %arg0, %c0_i32 : i32, i32
  }
}

module attributes {stable_mosaic.version = 11 : i64} {
  func.func @_tail_kernel(%arg0: memref<4x4x384xbf16, #tpu.memory_space<vmem>>, %arg1: memref<384x128xbf16, #tpu.memory_space<vmem>>, %arg2: memref<1x128xf32, #tpu.memory_space<vmem>>, %arg3: memref<128x128xf32, #tpu.memory_space<vmem>>, %arg4: memref<1x128xf32, #tpu.memory_space<vmem>>, %arg5: memref<2x128xf32, #tpu.memory_space<vmem>>, %arg6: memref<1x1xf32, #tpu.memory_space<vmem>>, %arg7: memref<1x1xf32, #tpu.memory_space<vmem>>) attributes {dimension_semantics = [], scalar_prefetch = 0 : i64, scratch_operands = 0 : i64, tpu.core_type = #tpu.core_type<tc>} {
    %c0 = arith.constant 0 : index
    %c0_0 = arith.constant 0 : index
    %0 = vector.load %arg1[%c0, %c0_0] : memref<384x128xbf16, #tpu.memory_space<vmem>>, vector<384x128xbf16>
    %c0_1 = arith.constant 0 : index
    %c0_2 = arith.constant 0 : index
    %c0_3 = arith.constant 0 : index
    %1 = vector.load %arg0[%c0_1, %c0_2, %c0_3] : memref<4x4x384xbf16, #tpu.memory_space<vmem>>, vector<1x4x384xbf16>
    %2 = vector.shape_cast %1 : vector<1x4x384xbf16> to vector<4x384xbf16>
    %cst = arith.constant dense<0.000000e+00> : vector<4x128xf32>
    %3 = tpu.matmul %2, %0, %cst {dimension_numbers = #tpu.dot_dimension_numbers<[1], [0], [0], [1], [0, 0, 1, 1], [], []>} : vector<4x384xbf16>, vector<384x128xbf16>, vector<4x128xf32> -> vector<4x128xf32>
    %c1 = arith.constant 1 : index
    %c0_4 = arith.constant 0 : index
    %c0_5 = arith.constant 0 : index
    %4 = vector.load %arg0[%c1, %c0_4, %c0_5] : memref<4x4x384xbf16, #tpu.memory_space<vmem>>, vector<1x4x384xbf16>
    %5 = vector.shape_cast %4 : vector<1x4x384xbf16> to vector<4x384xbf16>
    %cst_6 = arith.constant dense<0.000000e+00> : vector<4x128xf32>
    %6 = tpu.matmul %5, %0, %cst_6 {dimension_numbers = #tpu.dot_dimension_numbers<[1], [0], [0], [1], [0, 0, 1, 1], [], []>} : vector<4x384xbf16>, vector<384x128xbf16>, vector<4x128xf32> -> vector<4x128xf32>
    %7 = arith.maximumf %3, %6 : vector<4x128xf32>
    %c2 = arith.constant 2 : index
    %c0_7 = arith.constant 0 : index
    %c0_8 = arith.constant 0 : index
    %8 = vector.load %arg0[%c2, %c0_7, %c0_8] : memref<4x4x384xbf16, #tpu.memory_space<vmem>>, vector<1x4x384xbf16>
    %9 = vector.shape_cast %8 : vector<1x4x384xbf16> to vector<4x384xbf16>
    %cst_9 = arith.constant dense<0.000000e+00> : vector<4x128xf32>
    %10 = tpu.matmul %9, %0, %cst_9 {dimension_numbers = #tpu.dot_dimension_numbers<[1], [0], [0], [1], [0, 0, 1, 1], [], []>} : vector<4x384xbf16>, vector<384x128xbf16>, vector<4x128xf32> -> vector<4x128xf32>
    %c3 = arith.constant 3 : index
    %c0_10 = arith.constant 0 : index
    %c0_11 = arith.constant 0 : index
    %11 = vector.load %arg0[%c3, %c0_10, %c0_11] : memref<4x4x384xbf16, #tpu.memory_space<vmem>>, vector<1x4x384xbf16>
    %12 = vector.shape_cast %11 : vector<1x4x384xbf16> to vector<4x384xbf16>
    %cst_12 = arith.constant dense<0.000000e+00> : vector<4x128xf32>
    %13 = tpu.matmul %12, %0, %cst_12 {dimension_numbers = #tpu.dot_dimension_numbers<[1], [0], [0], [1], [0, 0, 1, 1], [], []>} : vector<4x384xbf16>, vector<384x128xbf16>, vector<4x128xf32> -> vector<4x128xf32>
    %14 = arith.maximumf %10, %13 : vector<4x128xf32>
    %15 = arith.maximumf %7, %14 : vector<4x128xf32>
    %c0_13 = arith.constant 0 : index
    %c0_14 = arith.constant 0 : index
    %16 = vector.load %arg2[%c0_13, %c0_14] : memref<1x128xf32, #tpu.memory_space<vmem>>, vector<1x128xf32>
    %17 = vector.broadcast %16 : vector<1x128xf32> to vector<4x128xf32>
    %18 = arith.addf %15, %17 : vector<4x128xf32>
    %cst_15 = arith.constant 0.000000e+00 : f32
    %19 = vector.broadcast %cst_15 : f32 to vector<4x128xf32>
    %20 = arith.maximumf %18, %19 : vector<4x128xf32>
    %21 = vector.extract_strided_slice %20 {offsets = [0, 0], sizes = [2, 128], strides = [1, 1]} : vector<4x128xf32> to vector<2x128xf32>
    %c0_16 = arith.constant 0 : index
    %c0_17 = arith.constant 0 : index
    %22 = vector.load %arg3[%c0_16, %c0_17] : memref<128x128xf32, #tpu.memory_space<vmem>>, vector<128x128xf32>
    %cst_18 = arith.constant dense<0.000000e+00> : vector<2x128xf32>
    %23 = tpu.matmul %21, %22, %cst_18 {dimension_numbers = #tpu.dot_dimension_numbers<[1], [0], [0], [1], [0, 0, 1, 1], [], []>} : vector<2x128xf32>, vector<128x128xf32>, vector<2x128xf32> -> vector<2x128xf32>
    %c0_19 = arith.constant 0 : index
    %c0_20 = arith.constant 0 : index
    %24 = vector.load %arg4[%c0_19, %c0_20] : memref<1x128xf32, #tpu.memory_space<vmem>>, vector<1x128xf32>
    %25 = vector.broadcast %24 : vector<1x128xf32> to vector<2x128xf32>
    %26 = arith.addf %23, %25 : vector<2x128xf32>
    %27 = tpu.iota {dimensions = array<i32: 1>} : vector<2x128xi32>
    %c8_i32 = arith.constant 8 : i32
    %28 = vector.broadcast %c8_i32 : i32 to vector<2x128xi32>
    %29 = arith.cmpi slt, %27, %28 : vector<2x128xi32>
    %cst_21 = arith.constant -1.000000e+30 : f32
    %30 = vector.broadcast %cst_21 : f32 to vector<2x128xf32>
    %31 = arith.select %29, %26, %30 : vector<2x128xi1>, vector<2x128xf32>
    %cst_22 = arith.constant dense<0xFF800000> : vector<2xf32>
    %32 = vector.multi_reduction <maximumf>, %31, %cst_22 [1] : vector<2x128xf32> to vector<2xf32>
    %33 = vector.shape_cast %32 : vector<2xf32> to vector<2x1xf32>
    %34 = vector.broadcast %33 : vector<2x1xf32> to vector<2x128xf32>
    %35 = arith.subf %31, %34 : vector<2x128xf32>
    %36 = math.exp %35 : vector<2x128xf32>
    %cst_23 = arith.constant dense<0.000000e+00> : vector<2xf32>
    %37 = vector.multi_reduction <add>, %36, %cst_23 [1] : vector<2x128xf32> to vector<2xf32>
    %38 = vector.shape_cast %37 : vector<2xf32> to vector<2x1xf32>
    %39 = math.log %38 : vector<2x1xf32>
    %40 = arith.addf %39, %33 : vector<2x1xf32>
    %c0_24 = arith.constant 0 : index
    %c0_25 = arith.constant 0 : index
    %41 = vector.load %arg5[%c0_24, %c0_25] : memref<2x128xf32, #tpu.memory_space<vmem>>, vector<2x128xf32>
    %42 = vector.broadcast %40 : vector<2x1xf32> to vector<2x128xf32>
    %43 = arith.subf %31, %42 : vector<2x128xf32>
    %44 = arith.mulf %41, %43 : vector<2x128xf32>
    %cst_26 = arith.constant dense<0.000000e+00> : vector<2xf32>
    %45 = vector.multi_reduction <add>, %44, %cst_26 [1] : vector<2x128xf32> to vector<2xf32>
    %46 = vector.shape_cast %45 : vector<2xf32> to vector<2x1xf32>
    %cst_27 = arith.constant 0.000000e+00 : f32
    %47 = vector.broadcast %cst_27 : f32 to vector<2x1xf32>
    %48 = arith.subf %47, %46 : vector<2x1xf32>
    %cst_28 = arith.constant dense<0.000000e+00> : vector<1xf32>
    %49 = vector.multi_reduction <add>, %48, %cst_28 [0] : vector<2x1xf32> to vector<1xf32>
    %50 = vector.shape_cast %49 : vector<1xf32> to vector<1x1xf32>
    %cst_29 = arith.constant 5.000000e-01 : f32
    %51 = vector.broadcast %cst_29 : f32 to vector<1x1xf32>
    %52 = arith.mulf %50, %51 : vector<1x1xf32>
    %c0_30 = arith.constant 0 : index
    %c0_31 = arith.constant 0 : index
    %53 = vector.load %arg6[%c0_30, %c0_31] : memref<1x1xf32, #tpu.memory_space<vmem>>, vector<1x1xf32>
    tpu.vector_store %arg6[%c0_30, %c0_31], %52 {strides = array<i32>} : memref<1x1xf32, #tpu.memory_space<vmem>>, vector<1x1xf32>,
    %54 = arith.mulf %20, %20 : vector<4x128xf32>
    %cst_32 = arith.constant dense<0.000000e+00> : vector<4xf32>
    %55 = vector.multi_reduction <add>, %54, %cst_32 [1] : vector<4x128xf32> to vector<4xf32>
    %56 = vector.shape_cast %55 : vector<4xf32> to vector<4x1xf32>
    %cst_33 = arith.constant dense<0.000000e+00> : vector<4x4xf32>
    %57 = tpu.matmul %20, %20, %cst_33 {dimension_numbers = #tpu.dot_dimension_numbers<[1], [1], [0], [0], [0, 0, 1, 0], [], []>} : vector<4x128xf32>, vector<4x128xf32>, vector<4x4xf32> -> vector<4x4xf32>
    %58 = tpu.transpose %56, [1, 0] : vector<4x1xf32> -> vector<1x4xf32>
    %59 = vector.broadcast %56 : vector<4x1xf32> to vector<4x4xf32>
    %60 = vector.broadcast %58 : vector<1x4xf32> to vector<4x4xf32>
    %61 = arith.addf %59, %60 : vector<4x4xf32>
    %cst_34 = arith.constant 2.000000e+00 : f32
    %62 = vector.broadcast %cst_34 : f32 to vector<4x4xf32>
    %63 = arith.mulf %62, %57 : vector<4x4xf32>
    %64 = arith.subf %61, %63 : vector<4x4xf32>
    %cst_35 = arith.constant 0.000000e+00 : f32
    %65 = vector.broadcast %cst_35 : f32 to vector<4x4xf32>
    %66 = arith.maximumf %64, %65 : vector<4x4xf32>
    %67 = vector.shape_cast %66 : vector<4x4xf32> to vector<1x4x4xf32>
    %cst_36 = arith.constant dense<0.000000e+00> : vector<1xf32>
    %68 = vector.multi_reduction <add>, %67, %cst_36 [1, 2] : vector<1x4x4xf32> to vector<1xf32>
    %69 = vector.shape_cast %68 : vector<1xf32> to vector<1x1x1xf32>
    %70 = vector.extract %69[0, 0, 0] : f32 from vector<1x1x1xf32>
    %71 = vector.broadcast %70 : f32 to vector<1x1xf32>
    %cst_37 = arith.constant 1.200000e+01 : f32
    %72 = vector.broadcast %cst_37 : f32 to vector<1x1xf32>
    %73 = arith.divf %71, %72 : vector<1x1xf32>
    %cst_38 = arith.constant 9.99999996E-13 : f32
    %74 = vector.broadcast %cst_38 : f32 to vector<1x1xf32>
    %75 = arith.maximumf %73, %74 : vector<1x1xf32>
    %cst_39 = arith.constant 2.500000e-01 : f32
    %76 = vector.broadcast %cst_39 : f32 to vector<1x1xf32>
    %77 = arith.mulf %75, %76 : vector<1x1xf32>
    %78 = tpu.iota {dimensions = array<i32: 0>} : vector<4x4xi32>
    %79 = tpu.iota {dimensions = array<i32: 1>} : vector<4x4xi32>
    %c2_i32 = arith.constant 2 : i32
    %80 = vector.broadcast %c2_i32 : i32 to vector<4x4xi32>
    %81 = arith.cmpi slt, %78, %80 : vector<4x4xi32>
    %c2_i32_40 = arith.constant 2 : i32
    %82 = vector.broadcast %c2_i32_40 : i32 to vector<4x4xi32>
    %83 = arith.cmpi slt, %79, %82 : vector<4x4xi32>
    %84 = arith.xori %81, %83 : vector<4x4xi1>
    %cst_41 = arith.constant dense<true> : vector<4x4xi1>
    %85 = arith.xori %84, %cst_41 : vector<4x4xi1>
    %cst_42 = arith.constant 1.000000e+00 : f32
    %cst_43 = arith.constant -1.000000e+00 : f32
    %86 = vector.broadcast %cst_42 : f32 to vector<4x4xf32>
    %87 = vector.broadcast %cst_43 : f32 to vector<4x4xf32>
    %88 = arith.select %85, %86, %87 : vector<4x4xi1>, vector<4x4xf32>
    %cst_44 = arith.constant 0.000000e+00 : f32
    %89 = vector.broadcast %cst_44 : f32 to vector<1x1xf32>
    %cst_45 = arith.constant 1.600000e+01 : f32
    %90 = vector.broadcast %cst_45 : f32 to vector<1x1xf32>
    %91 = arith.mulf %77, %90 : vector<1x1xf32>
    %92 = tpu.reciprocal %91 {approx = true} : vector<1x1xf32> -> vector<1x1xf32>
    %93 = vector.broadcast %92 : vector<1x1xf32> to vector<4x4xf32>
    %94 = arith.mulf %66, %93 : vector<4x4xf32>
    %cst_46 = arith.constant 0.000000e+00 : f32
    %95 = vector.broadcast %cst_46 : f32 to vector<4x4xf32>
    %96 = arith.subf %95, %94 : vector<4x4xf32>
    %97 = math.exp %96 : vector<4x4xf32>
    %98 = arith.mulf %88, %97 : vector<4x4xf32>
    %99 = vector.shape_cast %98 : vector<4x4xf32> to vector<1x4x4xf32>
    %cst_47 = arith.constant dense<0.000000e+00> : vector<1xf32>
    %100 = vector.multi_reduction <add>, %99, %cst_47 [1, 2] : vector<1x4x4xf32> to vector<1xf32>
    %101 = vector.shape_cast %100 : vector<1xf32> to vector<1x1x1xf32>
    %102 = vector.extract %101[0, 0, 0] : f32 from vector<1x1x1xf32>
    %103 = vector.broadcast %102 : f32 to vector<1x1xf32>
    %104 = arith.addf %89, %103 : vector<1x1xf32>
    %105 = arith.mulf %97, %97 : vector<4x4xf32>
    %106 = arith.mulf %88, %105 : vector<4x4xf32>
    %107 = vector.shape_cast %106 : vector<4x4xf32> to vector<1x4x4xf32>
    %cst_48 = arith.constant dense<0.000000e+00> : vector<1xf32>
    %108 = vector.multi_reduction <add>, %107, %cst_48 [1, 2] : vector<1x4x4xf32> to vector<1xf32>
    %109 = vector.shape_cast %108 : vector<1xf32> to vector<1x1x1xf32>
    %110 = vector.extract %109[0, 0, 0] : f32 from vector<1x1x1xf32>
    %111 = vector.broadcast %110 : f32 to vector<1x1xf32>
    %112 = arith.addf %104, %111 : vector<1x1xf32>
    %113 = arith.mulf %105, %105 : vector<4x4xf32>
    %114 = arith.mulf %88, %113 : vector<4x4xf32>
    %115 = vector.shape_cast %114 : vector<4x4xf32> to vector<1x4x4xf32>
    %cst_49 = arith.constant dense<0.000000e+00> : vector<1xf32>
    %116 = vector.multi_reduction <add>, %115, %cst_49 [1, 2] : vector<1x4x4xf32> to vector<1xf32>
    %117 = vector.shape_cast %116 : vector<1xf32> to vector<1x1x1xf32>
    %118 = vector.extract %117[0, 0, 0] : f32 from vector<1x1x1xf32>
    %119 = vector.broadcast %118 : f32 to vector<1x1xf32>
    %120 = arith.addf %112, %119 : vector<1x1xf32>
    %121 = arith.mulf %113, %113 : vector<4x4xf32>
    %122 = arith.mulf %88, %121 : vector<4x4xf32>
    %123 = vector.shape_cast %122 : vector<4x4xf32> to vector<1x4x4xf32>
    %cst_50 = arith.constant dense<0.000000e+00> : vector<1xf32>
    %124 = vector.multi_reduction <add>, %123, %cst_50 [1, 2] : vector<1x4x4xf32> to vector<1xf32>
    %125 = vector.shape_cast %124 : vector<1xf32> to vector<1x1x1xf32>
    %126 = vector.extract %125[0, 0, 0] : f32 from vector<1x1x1xf32>
    %127 = vector.broadcast %126 : f32 to vector<1x1xf32>
    %128 = arith.addf %120, %127 : vector<1x1xf32>
    %129 = arith.mulf %121, %121 : vector<4x4xf32>
    %130 = arith.mulf %88, %129 : vector<4x4xf32>
    %131 = vector.shape_cast %130 : vector<4x4xf32> to vector<1x4x4xf32>
    %cst_51 = arith.constant dense<0.000000e+00> : vector<1xf32>
    %132 = vector.multi_reduction <add>, %131, %cst_51 [1, 2] : vector<1x4x4xf32> to vector<1xf32>
    %133 = vector.shape_cast %132 : vector<1xf32> to vector<1x1x1xf32>
    %134 = vector.extract %133[0, 0, 0] : f32 from vector<1x1x1xf32>
    %135 = vector.broadcast %134 : f32 to vector<1x1xf32>
    %136 = arith.addf %128, %135 : vector<1x1xf32>
    %cst_52 = arith.constant 2.500000e-01 : f32
    %137 = vector.broadcast %cst_52 : f32 to vector<1x1xf32>
    %138 = arith.mulf %136, %137 : vector<1x1xf32>
    %c0_53 = arith.constant 0 : index
    %c0_54 = arith.constant 0 : index
    %139 = vector.load %arg7[%c0_53, %c0_54] : memref<1x1xf32, #tpu.memory_space<vmem>>, vector<1x1xf32>
    tpu.vector_store %arg7[%c0_53, %c0_54], %138 {strides = array<i32>} : memref<1x1xf32, #tpu.memory_space<vmem>>, vector<1x1xf32>,
    return
  }
}

</mosaic_0001>

<llo_original>
// kernel: transfer_net_forward.4
$region0: #{transfer_net_forward.4}
  #allocation0 [shape = 'u32[]', space=smem, size = 0x4, offset = 0x4, fixed_abs, tag = 'smem constant byte address 0x4 - core index']
  #allocation1 [shape = 'u32[144,128]{1,0:T(1,128)}', space=vmem, size = 0x12000, scoped, tag = 'internal scratch']
  %s0 = inlined_call_operand.vmem [shape: bf16[4,256,128], index: 0, kind: input, shape index: {}]
  %s1 = inlined_call_operand.vmem [shape: bf16[128,128], index: 1, kind: input, shape index: {}]
  %s2 = inlined_call_operand.vmem [shape: f32[1,128], index: 2, kind: input, shape index: {}]
  %s3 = inlined_call_operand.vmem [shape: bf16[256,128], index: 3, kind: output, shape index: {}]
  %s4 = sld [smem:[#allocation0]]
  $region86: #{transfer_net_forward.4} parent=0
    _
  %s6 = ssub.s32 1, %s4
  %s7 = scalar_select 0, %s6, %s4
  $region1: #{transfer_net_forward.4} parent=0
    #allocation2 [shape = 'u8[262144]{0}', space=vmem, size = 0x40000, scoped, tag = 'input window, operand 0']
    loop: start=0, step=1, limit=4
    $region2: #{transfer_net_forward.4} parent=1 // loop_pre_header
      _
    $region3: #{transfer_net_forward.4} parent=1 // loop_header
      %s9 = sphi 0, %s13
      %p10 = scmp.ge.s32.totalorder %s9, 4
      %s19 = sphi 0, %s21
      %s22 = sphi 0, %s19
      %s23 = sphi 0, %s22
      %s39 = sphi 0, %s23
      %s43 = sphi 0, %s43
      %s45 = sphi 0, %s43
      %s46 = sphi 0, %s45
      %s60 = sphi 0, %s46
      %s64 = sphi 0, %s64
      %s66 = sphi 0, %s64
      %s67 = sphi 0, %s66
      %s81 = sphi 0, %s67
      %s87 = sphi 0, %s89
      %s90 = sphi 0, %s87
      %s91 = sphi 0, %s90
      %s107 = sphi 0, %s91
    $region4: #{transfer_net_forward.4} parent=1 // loop_header_branch
      %12 = sbr.rel (%p10) target = $region8
    $region5: #{transfer_net_forward.4} parent=1 // loop_body
      %s14 = ssub.s32 %s9, 1
      %s15 = ssub.s32 %s9, 2
      %s16 = sadd.s32 %s9, 1
      %s17 = ssub.s32 %s9, %s16
      %p18 = scmp.eq.s32.totalorder %s17, 0
      %s20 = sadd.s32 %s19, 1
      %s21 = scalar_select %p18, %s19, %s20
      %p24 = pneg %p18
      %p25 = scmp.eq.s32.totalorder %s9, 1
      %p26 = por %p24, %p25
      %p27 = scmp.ne.s32.totalorder %s19, %s22
      %p28 = scmp.eq.s32.totalorder %s9, 0
      %p29 = por %p27, %p28
      %p30 = scmp.ne.s32.totalorder %s19, %s22
      %p31 = scmp.eq.s32.totalorder %s14, 1
      %p32 = por %p30, %p31
      %p33 = scmp.ne.s32.totalorder %s22, %s23
      %p34 = scmp.eq.s32.totalorder %s14, 0
      %p35 = por %p33, %p34
      %p36 = scmp.ne.s32.totalorder %s22, %s23
      %p37 = scmp.eq.s32.totalorder %s15, 1
      %p38 = por %p36, %p37
      %p40 = scmp.ne.s32.totalorder %s23, %s39
      %p41 = scmp.eq.s32.totalorder %s15, 0
      %p42 = por %p40, %p41
      %s44 = sadd.s32 %s43, 1
      %p47 = scmp.eq.s32.totalorder %s9, 1
      %p48 = scmp.ne.s32.totalorder %s43, %s45
      %p49 = scmp.eq.s32.totalorder %s9, 0
      %p50 = por %p48, %p49
      %p51 = scmp.ne.s32.totalorder %s43, %s45
      %p52 = scmp.eq.s32.totalorder %s14, 1
      %p53 = por %p51, %p52
      %p54 = scmp.ne.s32.totalorder %s45, %s46
      %p55 = scmp.eq.s32.totalorder %s14, 0
      %p56 = por %p54, %p55
      %p57 = scmp.ne.s32.totalorder %s45, %s46
      %p58 = scmp.eq.s32.totalorder %s15, 1
      %p59 = por %p57, %p58
      %p61 = scmp.ne.s32.totalorder %s46, %s60
      %p62 = scmp.eq.s32.totalorder %s15, 0
      %p63 = por %p61, %p62
      %s65 = sadd.s32 %s64, 1
      %p68 = scmp.eq.s32.totalorder %s9, 1
      %p69 = scmp.ne.s32.totalorder %s64, %s66
      %p70 = scmp.eq.s32.totalorder %s9, 0
      %p71 = por %p69, %p70
      %p72 = scmp.ne.s32.totalorder %s64, %s66
      %p73 = scmp.eq.s32.totalorder %s14, 1
      %p74 = por %p72, %p73
      %p75 = scmp.ne.s32.totalorder %s66, %s67
      %p76 = scmp.eq.s32.totalorder %s14, 0
      %p77 = por %p75, %p76
      %p78 = scmp.ne.s32.totalorder %s66, %s67
      %p79 = scmp.eq.s32.totalorder %s15, 1
      %p80 = por %p78, %p79
      %p82 = scmp.ne.s32.totalorder %s67, %s81
      %p83 = scmp.eq.s32.totalorder %s15, 0
      %p84 = por %p82, %p83
      %s85 = ssub.s32 %s9, %s16
      %p86 = scmp.eq.s32.totalorder %s85, 0
      %s88 = sadd.s32 %s87, 1
      %s89 = scalar_select %p86, %s87, %s88
      %p92 = pneg %p86
      %p93 = scmp.eq.s32.totalorder %s9, 1
      %p94 = por %p92, %p93
      %p95 = scmp.ne.s32.totalorder %s87, %s90
      %p96 = scmp.eq.s32.totalorder %s9, 0
      %p97 = por %p95, %p96
      %p98 = scmp.ne.s32.totalorder %s87, %s90
      %p99 = scmp.eq.s32.totalorder %s14, 1
      %p100 = por %p98, %p99
      %p101 = scmp.ne.s32.totalorder %s90, %s91
      %p102 = scmp.eq.s32.totalorder %s14, 0
      %p103 = por %p101, %p102
      %p104 = scmp.ne.s32.totalorder %s90, %s91
      %p105 = scmp.eq.s32.totalorder %s15, 1
      %p106 = por %p104, %p105
      %p108 = scmp.ne.s32.totalorder %s91, %s107
      %p109 = scmp.eq.s32.totalorder %s15, 0
      %p110 = por %p108, %p109
      %p111 = scmp.le.s32.totalorder 1, %s9
      %p112 = scmp.lt.s32.totalorder %s9, 3
      %p113 = pnand %p111, %p112
      %p114 = pneg %p113
      // Predicated region
      $region9: #{transfer_net_forward.4} parent=5 // pred_check
        _
      $region10: #{transfer_net_forward.4} parent=5 // pred_check_branch
        %116 = sbr.rel (%p113) target = $region12
      $region11: #{transfer_net_forward.4} parent=5 // pred_region
        %s117 = ssub.s32 %s9, 1
        // Predicated region
        $region13: #{transfer_net_forward.4} parent=11 // pred_check
          %p118 = pneg %p56
        $region14: #{transfer_net_forward.4} parent=11 // pred_check_branch
          %120 = sbr.rel (%p118) target = $region16
        $region15: #{transfer_net_forward.4} parent=11 // pred_region
          _
        $region16: #{transfer_net_forward.4} parent=11 // pred_fallthru
          _
        // Predicated region
        $region17: #{transfer_net_forward.4} parent=11 // pred_check
          %p121 = pneg %p77
        $region18: #{transfer_net_forward.4} parent=11 // pred_check_branch
          %123 = sbr.rel (%p121) target = $region20
        $region19: #{transfer_net_forward.4} parent=11 // pred_region
          _
        $region20: #{transfer_net_forward.4} parent=11 // pred_fallthru
          _
      $region12: #{transfer_net_forward.4} parent=5 // pred_fallthru
        _
      %p124 = scmp.lt.s32.totalorder %s9, 2
      // Predicated region
      $region21: #{transfer_net_forward.4} parent=5 // pred_check
        %p125 = pneg %p124
      $region22: #{transfer_net_forward.4} parent=5 // pred_check_branch
        %127 = sbr.rel (%p125) target = $region24
      $region23: #{transfer_net_forward.4} parent=5 // pred_region
        // Predicated region
        $region25: #{transfer_net_forward.4} parent=23 // pred_check
          %p128 = pneg %p29
        $region26: #{transfer_net_forward.4} parent=23 // pred_check_branch
          %130 = sbr.rel (%p128) target = $region28
        $region27: #{transfer_net_forward.4} parent=23 // pred_region
          %s131 = sand.u32 %s19, 1
          %s132 = sand.u32 %s19, 1
          %s133 = smul.addr %s132, 256
          %s134 = scalar_lea.vmem [#allocation2], %s133
          %s135 = smul.u32 16, %s9
          %s136 = smul.addr %s135, 4
          %s137 = scalar_lea.vmem %s0, %s136
          // Predicated region
          $region29: #{transfer_net_forward.4} parent=27 // pred_check
            _
          $region30: #{transfer_net_forward.4} parent=27 // pred_check_branch
            %139 = sbr.rel (0) target = $region32
          $region31: #{transfer_net_forward.4} parent=27 // pred_region
            // Predicated region
            $region33: #{transfer_net_forward.4} parent=31 // pred_check
              _
            $region34: #{transfer_net_forward.4} parent=31 // pred_check_branch
              %141 = sbr.rel target = $region36
            $region35: #{transfer_net_forward.4} parent=31 // pred_region
              // Predicated region
              $region48: #{transfer_net_forward.4} parent=35 // pred_check
                _
              $region49: #{transfer_net_forward.4} parent=35 // pred_check_branch
                %282 = sbr.rel (0) target = $region51
              $region50: #{transfer_net_forward.4} parent=35 // pred_region
                loop: start=0, step=1, limit=1
                $region52: #{transfer_net_forward.4} parent=50 // loop_pre_header
                  _
                $region53: #{transfer_net_forward.4} parent=50 // loop_header
                  %s284 = sphi 0, %s288
                  %p285 = scmp.ge.s32.totalorder %s284, 1
                  %s289 = sphi %s137, %s137
                  %s290 = sphi %s134, %s134
                $region54: #{transfer_net_forward.4} parent=50 // loop_header_branch
                  %287 = sbr.rel (%p285) target = $region58
                $region55: #{transfer_net_forward.4} parent=50 // loop_body
                  _
                $region56: #{transfer_net_forward.4} parent=50 // loop_footer
                  %s288 = sadd.s32 1, %s284
                $region57: #{transfer_net_forward.4} parent=50 // loop_footer_branch
                  %283 = sbr.rel target = $region53
                $region58: #{transfer_net_forward.4} parent=50 // loop_exit
                  _
                loop: start=0, step=1, limit=1
                $region59: #{transfer_net_forward.4} parent=50 // loop_pre_header
                  _
                $region60: #{transfer_net_forward.4} parent=50 // loop_header
                  %s293 = sphi 0, %s297
                  %p294 = scmp.ge.s32.totalorder %s293, 1
                  %s298 = sphi %s137, %s137
                  %s299 = sphi %s134, %s134
                $region61: #{transfer_net_forward.4} parent=50 // loop_header_branch
                  %296 = sbr.rel (%p294) target = $region65
                $region62: #{transfer_net_forward.4} parent=50 // loop_body
                  %v300 = vld [vmem:[%s298] sm:$0xf]
                  %301 = vst [vmem:[%s299] sm:$0xf] %v300
                  %v302 = vld [vmem:[%s298 + $0x4] sm:$0xf]
                  %303 = vst [vmem:[%s299 + $0x4] sm:$0xf] %v302
                  %v304 = vld [vmem:[%s298 + $0x8] sm:$0xf]
                  %305 = vst [vmem:[%s299 + $0x8] sm:$0xf] %v304
                  %v306 = vld [vmem:[%s298 + $0xc] sm:$0xf]
                  %307 = vst [vmem:[%s299 + $0xc] sm:$0xf] %v306
                  %v308 = vld [vmem:[%s298 + $0x10] sm:$0xf]
                  %309 = vst [vmem:[%s299 + $0x10] sm:$0xf] %v308
                  %v310 = vld [vmem:[%s298 + $0x14] sm:$0xf]
                  %311 = vst [vmem:[%s299 + $0x14] sm:$0xf] %v310
                  %v312 = vld [vmem:[%s298 + $0x18] sm:$0xf]
                  %313 = vst [vmem:[%s299 + $0x18] sm:$0xf] %v312
                  %v314 = vld [vmem:[%s298 + $0x1c] sm:$0xf]
                  %315 = vst [vmem:[%s299 + $0x1c] sm:$0xf] %v314
                  %v316 = vld [vmem:[%s298 + $0x20] sm:$0xf]
                  %317 = vst [vmem:[%s299 + $0x20] sm:$0xf] %v316
                  %v318 = vld [vmem:[%s298 + $0x24] sm:$0xf]
                  %319 = vst [vmem:[%s299 + $0x24] sm:$0xf] %v318
                  %v320 = vld [vmem:[%s298 + $0x28] sm:$0xf]
                  %321 = vst [vmem:[%s299 + $0x28] sm:$0xf] %v320
                  %v322 = vld [vmem:[%s298 + $0x2c] sm:$0xf]
                  %323 = vst [vmem:[%s299 + $0x2c] sm:$0xf] %v322
                  %v324 = vld [vmem:[%s298 + $0x30] sm:$0xf]
                  %325 = vst [vmem:[%s299 + $0x30] sm:$0xf] %v324
                  %v326 = vld [vmem:[%s298 + $0x34] sm:$0xf]
                  %327 = vst [vmem:[%s299 + $0x34] sm:$0xf] %v326
                  %v328 = vld [vmem:[%s298 + $0x38] sm:$0xf]
                  %329 = vst [vmem:[%s299 + $0x38] sm:$0xf] %v328
                  %v330 = vld [vmem:[%s298 + $0x3c] sm:$0xf]
                  %331 = vst [vmem:[%s299 + $0x3c] sm:$0xf] %v330
                  %v332 = vld [vmem:[%s298 + $0x80] sm:$0xf]
                  %333 = vst [vmem:[%s299 + $0x40] sm:$0xf] %v332
                  %v334 = vld [vmem:[%s298 + $0x84] sm:$0xf]
                  %335 = vst [vmem:[%s299 + $0x44] sm:$0xf] %v334
                  %v336 = vld [vmem:[%s298 + $0x88] sm:$0xf]
                  %337 = vst [vmem:[%s299 + $0x48] sm:$0xf] %v336
                  %v338 = vld [vmem:[%s298 + $0x8c] sm:$0xf]
                  %339 = vst [vmem:[%s299 + $0x4c] sm:$0xf] %v338
                  %v340 = vld [vmem:[%s298 + $0x90] sm:$0xf]
                  %341 = vst [vmem:[%s299 + $0x50] sm:$0xf] %v340
                  %v342 = vld [vmem:[%s298 + $0x94] sm:$0xf]
                  %343 = vst [vmem:[%s299 + $0x54] sm:$0xf] %v342
                  %v344 = vld [vmem:[%s298 + $0x98] sm:$0xf]
                  %345 = vst [vmem:[%s299 + $0x58] sm:$0xf] %v344
                  %v346 = vld [vmem:[%s298 + $0x9c] sm:$0xf]
                  %347 = vst [vmem:[%s299 + $0x5c] sm:$0xf] %v346
                  %v348 = vld [vmem:[%s298 + $0xa0] sm:$0xf]
                  %349 = vst [vmem:[%s299 + $0x60] sm:$0xf] %v348
                  %v350 = vld [vmem:[%s298 + $0xa4] sm:$0xf]
                  %351 = vst [vmem:[%s299 + $0x64] sm:$0xf] %v350
                  %v352 = vld [vmem:[%s298 + $0xa8] sm:$0xf]
                  %353 = vst [vmem:[%s299 + $0x68] sm:$0xf] %v352
                  %v354 = vld [vmem:[%s298 + $0xac] sm:$0xf]
                  %355 = vst [vmem:[%s299 + $0x6c] sm:$0xf] %v354
                  %v356 = vld [vmem:[%s298 + $0xb0] sm:$0xf]
                  %357 = vst [vmem:[%s299 + $0x70] sm:$0xf] %v356
                  %v358 = vld [vmem:[%s298 + $0xb4] sm:$0xf]
                  %359 = vst [vmem:[%s299 + $0x74] sm:$0xf] %v358
                  %v360 = vld [vmem:[%s298 + $0xb8] sm:$0xf]
                  %361 = vst [vmem:[%s299 + $0x78] sm:$0xf] %v360
                  %v362 = vld [vmem:[%s298 + $0xbc] sm:$0xf]
                  %363 = vst [vmem:[%s299 + $0x7c] sm:$0xf] %v362
                  %v364 = vld [vmem:[%s298 + $0x100] sm:$0xf]
                  %365 = vst [vmem:[%s299 + $0x80] sm:$0xf] %v364
                  %v366 = vld [vmem:[%s298 + $0x104] sm:$0xf]
                  %367 = vst [vmem:[%s299 + $0x84] sm:$0xf] %v366
                  %v368 = vld [vmem:[%s298 + $0x108] sm:$0xf]
                  %369 = vst [vmem:[%s299 + $0x88] sm:$0xf] %v368
                  %v370 = vld [vmem:[%s298 + $0x10c] sm:$0xf]
                  %371 = vst [vmem:[%s299 + $0x8c] sm:$0xf] %v370
                  %v372 = vld [vmem:[%s298 + $0x110] sm:$0xf]
                  %373 = vst [vmem:[%s299 + $0x90] sm:$0xf] %v372
                  %v374 = vld [vmem:[%s298 + $0x114] sm:$0xf]
                  %375 = vst [vmem:[%s299 + $0x94] sm:$0xf] %v374
                  %v376 = vld [vmem:[%s298 + $0x118] sm:$0xf]
                  %377 = vst [vmem:[%s299 + $0x98] sm:$0xf] %v376
                  %v378 = vld [vmem:[%s298 + $0x11c] sm:$0xf]
                  %379 = vst [vmem:[%s299 + $0x9c] sm:$0xf] %v378
                  %v380 = vld [vmem:[%s298 + $0x120] sm:$0xf]
                  %381 = vst [vmem:[%s299 + $0xa0] sm:$0xf] %v380
                  %v382 = vld [vmem:[%s298 + $0x124] sm:$0xf]
                  %383 = vst [vmem:[%s299 + $0xa4] sm:$0xf] %v382
                  %v384 = vld [vmem:[%s298 + $0x128] sm:$0xf]
                  %385 = vst [vmem:[%s299 + $0xa8] sm:$0xf] %v384
                  %v386 = vld [vmem:[%s298 + $0x12c] sm:$0xf]
                  %387 = vst [vmem:[%s299 + $0xac] sm:$0xf] %v386
                  %v388 = vld [vmem:[%s298 + $0x130] sm:$0xf]
                  %389 = vst [vmem:[%s299 + $0xb0] sm:$0xf] %v388
                  %v390 = vld [vmem:[%s298 + $0x134] sm:$0xf]
                  %391 = vst [vmem:[%s299 + $0xb4] sm:$0xf] %v390
                  %v392 = vld [vmem:[%s298 + $0x138] sm:$0xf]
                  %393 = vst [vmem:[%s299 + $0xb8] sm:$0xf] %v392
                  %v394 = vld [vmem:[%s298 + $0x13c] sm:$0xf]
                  %395 = vst [vmem:[%s299 + $0xbc] sm:$0xf] %v394
                  %v396 = vld [vmem:[%s298 + $0x180] sm:$0xf]
                  %397 = vst [vmem:[%s299 + $0xc0] sm:$0xf] %v396
                  %v398 = vld [vmem:[%s298 + $0x184] sm:$0xf]
                  %399 = vst [vmem:[%s299 + $0xc4] sm:$0xf] %v398
                  %v400 = vld [vmem:[%s298 + $0x188] sm:$0xf]
                  %401 = vst [vmem:[%s299 + $0xc8] sm:$0xf] %v400
                  %v402 = vld [vmem:[%s298 + $0x18c] sm:$0xf]
                  %403 = vst [vmem:[%s299 + $0xcc] sm:$0xf] %v402
                  %v404 = vld [vmem:[%s298 + $0x190] sm:$0xf]
                  %405 = vst [vmem:[%s299 + $0xd0] sm:$0xf] %v404
                  %v406 = vld [vmem:[%s298 + $0x194] sm:$0xf]
                  %407 = vst [vmem:[%s299 + $0xd4] sm:$0xf] %v406
                  %v408 = vld [vmem:[%s298 + $0x198] sm:$0xf]
                  %409 = vst [vmem:[%s299 + $0xd8] sm:$0xf] %v408
                  %v410 = vld [vmem:[%s298 + $0x19c] sm:$0xf]
                  %411 = vst [vmem:[%s299 + $0xdc] sm:$0xf] %v410
                  %v412 = vld [vmem:[%s298 + $0x1a0] sm:$0xf]
                  %413 = vst [vmem:[%s299 + $0xe0] sm:$0xf] %v412
                  %v414 = vld [vmem:[%s298 + $0x1a4] sm:$0xf]
                  %415 = vst [vmem:[%s299 + $0xe4] sm:$0xf] %v414
                  %v416 = vld [vmem:[%s298 + $0x1a8] sm:$0xf]
                  %417 = vst [vmem:[%s299 + $0xe8] sm:$0xf] %v416
                  %v418 = vld [vmem:[%s298 + $0x1ac] sm:$0xf]
                  %419 = vst [vmem:[%s299 + $0xec] sm:$0xf] %v418
                  %v420 = vld [vmem:[%s298 + $0x1b0] sm:$0xf]
                  %421 = vst [vmem:[%s299 + $0xf0] sm:$0xf] %v420
                  %v422 = vld [vmem:[%s298 + $0x1b4] sm:$0xf]
                  %423 = vst [vmem:[%s299 + $0xf4] sm:$0xf] %v422
                  %v424 = vld [vmem:[%s298 + $0x1b8] sm:$0xf]
                  %425 = vst [vmem:[%s299 + $0xf8] sm:$0xf] %v424
                  %v426 = vld [vmem:[%s298 + $0x1bc] sm:$0xf]
                  %427 = vst [vmem:[%s299 + $0xfc] sm:$0xf] %v426
                $region63: #{transfer_net_forward.4} parent=50 // loop_footer
                  %s297 = sadd.s32 1, %s293
                $region64: #{transfer_net_forward.4} parent=50 // loop_footer_branch
                  %292 = sbr.rel target = $region60
                $region65: #{transfer_net_forward.4} parent=50 // loop_exit
                  _
              $region51: #{transfer_net_forward.4} parent=35 // pred_fallthru
                _
            $region36: #{transfer_net_forward.4} parent=31 // pred_fallthru
              _
            // Predicated region
            $region37: #{transfer_net_forward.4} parent=31 // pred_check
              _
            $region38: #{transfer_net_forward.4} parent=31 // pred_check_branch
              %143 = sbr.rel (0) target = $region40
            $region39: #{transfer_net_forward.4} parent=31 // pred_region
              loop: start=0, step=1, limit=1
              $region41: #{transfer_net_forward.4} parent=39 // loop_pre_header
                _
              $region42: #{transfer_net_forward.4} parent=39 // loop_header
                %s146 = sphi 0, %s150
                %p147 = scmp.ge.s32.totalorder %s146, 1
                %s151 = sphi %s137, %s137
                %s152 = sphi %s134, %s134
              $region43: #{transfer_net_forward.4} parent=39 // loop_header_branch
                %149 = sbr.rel (%p147) target = $region47
              $region44: #{transfer_net_forward.4} parent=39 // loop_body
                %v153 = vld [vmem:[%s151] sm:$0xf]
                %154 = vst [vmem:[%s152] sm:$0xf] %v153
                %v155 = vld [vmem:[%s151 + $0x4] sm:$0xf]
                %156 = vst [vmem:[%s152 + $0x4] sm:$0xf] %v155
                %v157 = vld [vmem:[%s151 + $0x8] sm:$0xf]
                %158 = vst [vmem:[%s152 + $0x8] sm:$0xf] %v157
                %v159 = vld [vmem:[%s151 + $0xc] sm:$0xf]
                %160 = vst [vmem:[%s152 + $0xc] sm:$0xf] %v159
                %v161 = vld [vmem:[%s151 + $0x10] sm:$0xf]
                %162 = vst [vmem:[%s152 + $0x10] sm:$0xf] %v161
                %v163 = vld [vmem:[%s151 + $0x14] sm:$0xf]
                %164 = vst [vmem:[%s152 + $0x14] sm:$0xf] %v163
                %v165 = vld [vmem:[%s151 + $0x18] sm:$0xf]
                %166 = vst [vmem:[%s152 + $0x18] sm:$0xf] %v165
                %v167 = vld [vmem:[%s151 + $0x1c] sm:$0xf]
                %168 = vst [vmem:[%s152 + $0x1c] sm:$0xf] %v167
                %v169 = vld [vmem:[%s151 + $0x20] sm:$0xf]
                %170 = vst [vmem:[%s152 + $0x20] sm:$0xf] %v169
                %v171 = vld [vmem:[%s151 + $0x24] sm:$0xf]
                %172 = vst [vmem:[%s152 + $0x24] sm:$0xf] %v171
                %v173 = vld [vmem:[%s151 + $0x28] sm:$0xf]
                %174 = vst [vmem:[%s152 + $0x28] sm:$0xf] %v173
                %v175 = vld [vmem:[%s151 + $0x2c] sm:$0xf]
                %176 = vst [vmem:[%s152 + $0x2c] sm:$0xf] %v175
                %v177 = vld [vmem:[%s151 + $0x30] sm:$0xf]
                %178 = vst [vmem:[%s152 + $0x30] sm:$0xf] %v177
                %v179 = vld [vmem:[%s151 + $0x34] sm:$0xf]
                %180 = vst [vmem:[%s152 + $0x34] sm:$0xf] %v179
                %v181 = vld [vmem:[%s151 + $0x38] sm:$0xf]
                %182 = vst [vmem:[%s152 + $0x38] sm:$0xf] %v181
                %v183 = vld [vmem:[%s151 + $0x3c] sm:$0xf]
                %184 = vst [vmem:[%s152 + $0x3c] sm:$0xf] %v183
                %v185 = vld [vmem:[%s151 + $0x80] sm:$0xf]
                %186 = vst [vmem:[%s152 + $0x40] sm:$0xf] %v185
                %v187 = vld [vmem:[%s151 + $0x84] sm:$0xf]
                %188 = vst [vmem:[%s152 + $0x44] sm:$0xf] %v187
                %v189 = vld [vmem:[%s151 + $0x88] sm:$0xf]
                %190 = vst [vmem:[%s152 + $0x48] sm:$0xf] %v189
                %v191 = vld [vmem:[%s151 + $0x8c] sm:$0xf]
                %192 = vst [vmem:[%s152 + $0x4c] sm:$0xf] %v191
                %v193 = vld [vmem:[%s151 + $0x90] sm:$0xf]
                %194 = vst [vmem:[%s152 + $0x50] sm:$0xf] %v193
                %v195 = vld [vmem:[%s151 + $0x94] sm:$0xf]
                %196 = vst [vmem:[%s152 + $0x54] sm:$0xf] %v195
                %v197 = vld [vmem:[%s151 + $0x98] sm:$0xf]
                %198 = vst [vmem:[%s152 + $0x58] sm:$0xf] %v197
                %v199 = vld [vmem:[%s151 + $0x9c] sm:$0xf]
                %200 = vst [vmem:[%s152 + $0x5c] sm:$0xf] %v199
                %v201 = vld [vmem:[%s151 + $0xa0] sm:$0xf]
                %202 = vst [vmem:[%s152 + $0x60] sm:$0xf] %v201
                %v203 = vld [vmem:[%s151 + $0xa4] sm:$0xf]
                %204 = vst [vmem:[%s152 + $0x64] sm:$0xf] %v203
                %v205 = vld [vmem:[%s151 + $0xa8] sm:$0xf]
                %206 = vst [vmem:[%s152 + $0x68] sm:$0xf] %v205
                %v207 = vld [vmem:[%s151 + $0xac] sm:$0xf]
                %208 = vst [vmem:[%s152 + $0x6c] sm:$0xf] %v207
                %v209 = vld [vmem:[%s151 + $0xb0] sm:$0xf]
                %210 = vst [vmem:[%s152 + $0x70] sm:$0xf] %v209
                %v211 = vld [vmem:[%s151 + $0xb4] sm:$0xf]
                %212 = vst [vmem:[%s152 + $0x74] sm:$0xf] %v211
                %v213 = vld [vmem:[%s151 + $0xb8] sm:$0xf]
                %214 = vst [vmem:[%s152 + $0x78] sm:$0xf] %v213
                %v215 = vld [vmem:[%s151 + $0xbc] sm:$0xf]
                %216 = vst [vmem:[%s152 + $0x7c] sm:$0xf] %v215
                %v217 = vld [vmem:[%s151 + $0x100] sm:$0xf]
                %218 = vst [vmem:[%s152 + $0x80] sm:$0xf] %v217
                %v219 = vld [vmem:[%s151 + $0x104] sm:$0xf]
                %220 = vst [vmem:[%s152 + $0x84] sm:$0xf] %v219
                %v221 = vld [vmem:[%s151 + $0x108] sm:$0xf]
                %222 = vst [vmem:[%s152 + $0x88] sm:$0xf] %v221
                %v223 = vld [vmem:[%s151 + $0x10c] sm:$0xf]
                %224 = vst [vmem:[%s152 + $0x8c] sm:$0xf] %v223
                %v225 = vld [vmem:[%s151 + $0x110] sm:$0xf]
                %226 = vst [vmem:[%s152 + $0x90] sm:$0xf] %v225
                %v227 = vld [vmem:[%s151 + $0x114] sm:$0xf]
                %228 = vst [vmem:[%s152 + $0x94] sm:$0xf] %v227
                %v229 = vld [vmem:[%s151 + $0x118] sm:$0xf]
                %230 = vst [vmem:[%s152 + $0x98] sm:$0xf] %v229
                %v231 = vld [vmem:[%s151 + $0x11c] sm:$0xf]
                %232 = vst [vmem:[%s152 + $0x9c] sm:$0xf] %v231
                %v233 = vld [vmem:[%s151 + $0x120] sm:$0xf]
                %234 = vst [vmem:[%s152 + $0xa0] sm:$0xf] %v233
                %v235 = vld [vmem:[%s151 + $0x124] sm:$0xf]
                %236 = vst [vmem:[%s152 + $0xa4] sm:$0xf] %v235
                %v237 = vld [vmem:[%s151 + $0x128] sm:$0xf]
                %238 = vst [vmem:[%s152 + $0xa8] sm:$0xf] %v237
                %v239 = vld [vmem:[%s151 + $0x12c] sm:$0xf]
                %240 = vst [vmem:[%s152 + $0xac] sm:$0xf] %v239
                %v241 = vld [vmem:[%s151 + $0x130] sm:$0xf]
                %242 = vst [vmem:[%s152 + $0xb0] sm:$0xf] %v241
                %v243 = vld [vmem:[%s151 + $0x134] sm:$0xf]
                %244 = vst [vmem:[%s152 + $0xb4] sm:$0xf] %v243
                %v245 = vld [vmem:[%s151 + $0x138] sm:$0xf]
                %246 = vst [vmem:[%s152 + $0xb8] sm:$0xf] %v245
                %v247 = vld [vmem:[%s151 + $0x13c] sm:$0xf]
                %248 = vst [vmem:[%s152 + $0xbc] sm:$0xf] %v247
                %v249 = vld [vmem:[%s151 + $0x180] sm:$0xf]
                %250 = vst [vmem:[%s152 + $0xc0] sm:$0xf] %v249
                %v251 = vld [vmem:[%s151 + $0x184] sm:$0xf]
                %252 = vst [vmem:[%s152 + $0xc4] sm:$0xf] %v251
                %v253 = vld [vmem:[%s151 + $0x188] sm:$0xf]
                %254 = vst [vmem:[%s152 + $0xc8] sm:$0xf] %v253
                %v255 = vld [vmem:[%s151 + $0x18c] sm:$0xf]
                %256 = vst [vmem:[%s152 + $0xcc] sm:$0xf] %v255
                %v257 = vld [vmem:[%s151 + $0x190] sm:$0xf]
                %258 = vst [vmem:[%s152 + $0xd0] sm:$0xf] %v257
                %v259 = vld [vmem:[%s151 + $0x194] sm:$0xf]
                %260 = vst [vmem:[%s152 + $0xd4] sm:$0xf] %v259
                %v261 = vld [vmem:[%s151 + $0x198] sm:$0xf]
                %262 = vst [vmem:[%s152 + $0xd8] sm:$0xf] %v261
                %v263 = vld [vmem:[%s151 + $0x19c] sm:$0xf]
                %264 = vst [vmem:[%s152 + $0xdc] sm:$0xf] %v263
                %v265 = vld [vmem:[%s151 + $0x1a0] sm:$0xf]
                %266 = vst [vmem:[%s152 + $0xe0] sm:$0xf] %v265
                %v267 = vld [vmem:[%s151 + $0x1a4] sm:$0xf]
                %268 = vst [vmem:[%s152 + $0xe4] sm:$0xf] %v267
                %v269 = vld [vmem:[%s151 + $0x1a8] sm:$0xf]
                %270 = vst [vmem:[%s152 + $0xe8] sm:$0xf] %v269
                %v271 = vld [vmem:[%s151 + $0x1ac] sm:$0xf]
                %272 = vst [vmem:[%s152 + $0xec] sm:$0xf] %v271
                %v273 = vld [vmem:[%s151 + $0x1b0] sm:$0xf]
                %274 = vst [vmem:[%s152 + $0xf0] sm:$0xf] %v273
                %v275 = vld [vmem:[%s151 + $0x1b4] sm:$0xf]
                %276 = vst [vmem:[%s152 + $0xf4] sm:$0xf] %v275
                %v277 = vld [vmem:[%s151 + $0x1b8] sm:$0xf]
                %278 = vst [vmem:[%s152 + $0xf8] sm:$0xf] %v277
                %v279 = vld [vmem:[%s151 + $0x1bc] sm:$0xf]
                %280 = vst [vmem:[%s152 + $0xfc] sm:$0xf] %v279
              $region45: #{transfer_net_forward.4} parent=39 // loop_footer
                %s150 = sadd.s32 1, %s146
              $region46: #{transfer_net_forward.4} parent=39 // loop_footer_branch
                %145 = sbr.rel target = $region42
              $region47: #{transfer_net_forward.4} parent=39 // loop_exit
                _
            $region40: #{transfer_net_forward.4} parent=31 // pred_fallthru
              _
          $region32: #{transfer_net_forward.4} parent=27 // pred_fallthru
            _
          %428 = vnop
        $region28: #{transfer_net_forward.4} parent=23 // pred_fallthru
          _
      $region24: #{transfer_net_forward.4} parent=5 // pred_fallthru
        _
      %p429 = scmp.le.s32.totalorder 1, %s9
      %p430 = scmp.lt.s32.totalorder %s9, 3
      %p431 = pnand %p429, %p430
      %p432 = pneg %p431
      // Predicated region
      $region66: #{transfer_net_forward.4} parent=5 // pred_check
        _
      $region67: #{transfer_net_forward.4} parent=5 // pred_check_branch
        %434 = sbr.rel (%p431) target = $region69
      $region68: #{transfer_net_forward.4} parent=5 // pred_region
        %s435 = ssub.s32 %s9, 1
        %s436 = sand.u32 %s22, 1
        %s437 = sand.u32 %s22, 1
        %s438 = smul.addr %s437, 256
        %s439 = scalar_lea.vmem [#allocation2], %s438
        // Predicated region
        $region70: #{transfer_net_forward.4} parent=68 // pred_check
          %p440 = pneg %p35
        $region71: #{transfer_net_forward.4} parent=68 // pred_check_branch
          %442 = sbr.rel (%p440) target = $region73
        $region72: #{transfer_net_forward.4} parent=68 // pred_region
          _
        $region73: #{transfer_net_forward.4} parent=68 // pred_fallthru
          _
        %s443 = sand.u32 %s22, 1
        %s444 = sand.u32 %s22, 1
        %s445 = smul.addr %s444, 256
        %s446 = scalar_lea.vmem [#allocation2], %s445
        %p447 = pneg %p35
        %p448 = pneg %p32
        %p449 = pneg %p56
        %p450 = pneg %p53
        %p451 = pneg %p77
        %p452 = pneg %p74
        %p453 = pneg %p103
        %p454 = pneg %p100
        %s455 = smul.u32 16, %s14
        %p456 = scmp.lt.s32.totalorder %s455, 31
        %s457 = scalar_select %p456, %s455, 31
        %s458 = smul.addr %s457, 4
        %s459 = scalar_lea.vmem %s3, %s458
        %s460 = smul.u32 16, %s14
        %s461 = smul.u32 16, %s14
        %p462 = scmp.lt.s32.totalorder %s461, 31
        %s463 = scalar_select %p462, %s461, 31
        %s464 = smul.addr %s463, 4
        %s465 = scalar_lea.vmem %s3, %s464
        %s466 = smul.u32 16, %s14
        %v468 = vld [vmem:[%s439] sm:$0xf]
        %v469 = vld [vmem:[%s439 + $0x4] sm:$0xf]
        %v470 = vld [vmem:[%s439 + $0x8] sm:$0xf]
        %v471 = vld [vmem:[%s439 + $0xc] sm:$0xf]
        %v472 = vld [vmem:[%s439 + $0x10] sm:$0xf]
        %v473 = vld [vmem:[%s439 + $0x14] sm:$0xf]
        %v474 = vld [vmem:[%s439 + $0x18] sm:$0xf]
        %v475 = vld [vmem:[%s439 + $0x1c] sm:$0xf]
        %v476 = vld [vmem:[%s439 + $0x20] sm:$0xf]
        %v477 = vld [vmem:[%s439 + $0x24] sm:$0xf]
        %v478 = vld [vmem:[%s439 + $0x28] sm:$0xf]
        %v479 = vld [vmem:[%s439 + $0x2c] sm:$0xf]
        %v480 = vld [vmem:[%s439 + $0x30] sm:$0xf]
        %v481 = vld [vmem:[%s439 + $0x34] sm:$0xf]
        %v482 = vld [vmem:[%s439 + $0x38] sm:$0xf]
        %v483 = vld [vmem:[%s439 + $0x3c] sm:$0xf]
        %v484 = vld [vmem:[%s439 + $0x40] sm:$0xf]
        %v485 = vld [vmem:[%s439 + $0x44] sm:$0xf]
        %v486 = vld [vmem:[%s439 + $0x48] sm:$0xf]
        %v487 = vld [vmem:[%s439 + $0x4c] sm:$0xf]
        %v488 = vld [vmem:[%s439 + $0x50] sm:$0xf]
        %v489 = vld [vmem:[%s439 + $0x54] sm:$0xf]
        %v490 = vld [vmem:[%s439 + $0x58] sm:$0xf]
        %v491 = vld [vmem:[%s439 + $0x5c] sm:$0xf]
        %v492 = vld [vmem:[%s439 + $0x60] sm:$0xf]
        %v493 = vld [vmem:[%s439 + $0x64] sm:$0xf]
        %v494 = vld [vmem:[%s439 + $0x68] sm:$0xf]
        %v495 = vld [vmem:[%s439 + $0x6c] sm:$0xf]
        %v496 = vld [vmem:[%s439 + $0x70] sm:$0xf]
        %v497 = vld [vmem:[%s439 + $0x74] sm:$0xf]
        %v498 = vld [vmem:[%s439 + $0x78] sm:$0xf]
        %v499 = vld [vmem:[%s439 + $0x7c] sm:$0xf]
        %v500 = vld [vmem:[%s439 + $0x80] sm:$0xf]
        %v501 = vld [vmem:[%s439 + $0x84] sm:$0xf]
        %v502 = vld [vmem:[%s439 + $0x88] sm:$0xf]
        %v503 = vld [vmem:[%s439 + $0x8c] sm:$0xf]
        %v504 = vld [vmem:[%s439 + $0x90] sm:$0xf]
        %v505 = vld [vmem:[%s439 + $0x94] sm:$0xf]
        %v506 = vld [vmem:[%s439 + $0x98] sm:$0xf]
        %v507 = vld [vmem:[%s439 + $0x9c] sm:$0xf]
        %v508 = vld [vmem:[%s439 + $0xa0] sm:$0xf]
        %v509 = vld [vmem:[%s439 + $0xa4] sm:$0xf]
        %v510 = vld [vmem:[%s439 + $0xa8] sm:$0xf]
        %v511 = vld [vmem:[%s439 + $0xac] sm:$0xf]
        %v512 = vld [vmem:[%s439 + $0xb0] sm:$0xf]
        %v513 = vld [vmem:[%s439 + $0xb4] sm:$0xf]
        %v514 = vld [vmem:[%s439 + $0xb8] sm:$0xf]
        %v515 = vld [vmem:[%s439 + $0xbc] sm:$0xf]
        %v516 = vld [vmem:[%s439 + $0xc0] sm:$0xf]
        %v517 = vld [vmem:[%s439 + $0xc4] sm:$0xf]
        %v518 = vld [vmem:[%s439 + $0xc8] sm:$0xf]
        %v519 = vld [vmem:[%s439 + $0xcc] sm:$0xf]
        %v520 = vld [vmem:[%s439 + $0xd0] sm:$0xf]
        %v521 = vld [vmem:[%s439 + $0xd4] sm:$0xf]
        %v522 = vld [vmem:[%s439 + $0xd8] sm:$0xf]
        %v523 = vld [vmem:[%s439 + $0xdc] sm:$0xf]
        %v524 = vld [vmem:[%s439 + $0xe0] sm:$0xf]
        %v525 = vld [vmem:[%s439 + $0xe4] sm:$0xf]
        %v526 = vld [vmem:[%s439 + $0xe8] sm:$0xf]
        %v527 = vld [vmem:[%s439 + $0xec] sm:$0xf]
        %v528 = vld [vmem:[%s439 + $0xf0] sm:$0xf]
        %v529 = vld [vmem:[%s439 + $0xf4] sm:$0xf]
        %v530 = vld [vmem:[%s439 + $0xf8] sm:$0xf]
        %v531 = vld [vmem:[%s439 + $0xfc] sm:$0xf]
        %v532 = vld [vmem:[%s1] sm:$0xf]
        %v533 = vld [vmem:[%s1 + $0x4] sm:$0xf]
        %v534 = vld [vmem:[%s1 + $0x8] sm:$0xf]
        %v535 = vld [vmem:[%s1 + $0xc] sm:$0xf]
        %v536 = vld [vmem:[%s1 + $0x10] sm:$0xf]
        %v537 = vld [vmem:[%s1 + $0x14] sm:$0xf]
        %v538 = vld [vmem:[%s1 + $0x18] sm:$0xf]
        %v539 = vld [vmem:[%s1 + $0x1c] sm:$0xf]
        %v540 = vld [vmem:[%s1 + $0x20] sm:$0xf]
        %v541 = vld [vmem:[%s1 + $0x24] sm:$0xf]
        %v542 = vld [vmem:[%s1 + $0x28] sm:$0xf]
        %v543 = vld [vmem:[%s1 + $0x2c] sm:$0xf]
        %v544 = vld [vmem:[%s1 + $0x30] sm:$0xf]
        %v545 = vld [vmem:[%s1 + $0x34] sm:$0xf]
        %v546 = vld [vmem:[%s1 + $0x38] sm:$0xf]
        %v547 = vld [vmem:[%s1 + $0x3c] sm:$0xf]
        %v612 = vunpack.c.l.b16 %v468
        %v613 = vunpack.c.l.b16 %v469
        %v614 = vunpack.c.l.b16 %v470
        %v615 = vunpack.c.l.b16 %v471
        %v616 = vunpack.c.l.b16 %v472
        %v617 = vunpack.c.l.b16 %v473
        %v618 = vunpack.c.l.b16 %v474
        %v619 = vunpack.c.l.b16 %v475
        %v620 = vunpack.c.l.b16 %v476
        %v621 = vunpack.c.l.b16 %v477
        %v622 = vunpack.c.l.b16 %v478
        %v623 = vunpack.c.l.b16 %v479
        %v624 = vunpack.c.l.b16 %v480
        %v625 = vunpack.c.l.b16 %v481
        %v626 = vunpack.c.l.b16 %v482
        %v627 = vunpack.c.l.b16 %v483
        %v628 = vunpack.c.l.b16 %v484
        %v629 = vunpack.c.l.b16 %v485
        %v630 = vunpack.c.l.b16 %v486
        %v631 = vunpack.c.l.b16 %v487
        %v632 = vunpack.c.l.b16 %v488
        %v633 = vunpack.c.l.b16 %v489
        %v634 = vunpack.c.l.b16 %v490
        %v635 = vunpack.c.l.b16 %v491
        %v636 = vunpack.c.l.b16 %v492
        %v637 = vunpack.c.l.b16 %v493
        %v638 = vunpack.c.l.b16 %v494
        %v639 = vunpack.c.l.b16 %v495
        %v640 = vunpack.c.l.b16 %v496
        %v641 = vunpack.c.l.b16 %v497
        %v642 = vunpack.c.l.b16 %v498
        %v643 = vunpack.c.l.b16 %v499
        %v644 = vunpack.c.l.b16 %v500
        %v645 = vunpack.c.l.b16 %v501
        %v646 = vunpack.c.l.b16 %v502
        %v647 = vunpack.c.l.b16 %v503
        %v648 = vunpack.c.l.b16 %v504
        %v649 = vunpack.c.l.b16 %v505
        %v650 = vunpack.c.l.b16 %v506
        %v651 = vunpack.c.l.b16 %v507
        %v652 = vunpack.c.l.b16 %v508
        %v653 = vunpack.c.l.b16 %v509
        %v654 = vunpack.c.l.b16 %v510
        %v655 = vunpack.c.l.b16 %v511
        %v656 = vunpack.c.l.b16 %v512
        %v657 = vunpack.c.l.b16 %v513
        %v658 = vunpack.c.l.b16 %v514
        %v659 = vunpack.c.l.b16 %v515
        %v660 = vunpack.c.l.b16 %v516
        %v661 = vunpack.c.l.b16 %v517
        %v662 = vunpack.c.l.b16 %v518
        %v663 = vunpack.c.l.b16 %v519
        %v664 = vunpack.c.l.b16 %v520
        %v665 = vunpack.c.l.b16 %v521
        %v666 = vunpack.c.l.b16 %v522
        %v667 = vunpack.c.l.b16 %v523
        %v668 = vunpack.c.l.b16 %v524
        %v669 = vunpack.c.l.b16 %v525
        %v670 = vunpack.c.l.b16 %v526
        %v671 = vunpack.c.l.b16 %v527
        %v672 = vunpack.c.l.b16 %v528
        %v673 = vunpack.c.l.b16 %v529
        %v674 = vunpack.c.l.b16 %v530
        %v675 = vunpack.c.l.b16 %v531
        %v676 = vpack.c.b16 %v613, %v612
        %v677 = vpack.c.b16 %v615, %v614
        %v678 = vpack.c.b16 %v617, %v616
        %v679 = vpack.c.b16 %v619, %v618
        %v680 = vpack.c.b16 %v621, %v620
        %v681 = vpack.c.b16 %v623, %v622
        %v682 = vpack.c.b16 %v625, %v624
        %v683 = vpack.c.b16 %v627, %v626
        %v684 = vpack.c.b16 %v629, %v628
        %v685 = vpack.c.b16 %v631, %v630
        %v686 = vpack.c.b16 %v633, %v632
        %v687 = vpack.c.b16 %v635, %v634
        %v688 = vpack.c.b16 %v637, %v636
        %v689 = vpack.c.b16 %v639, %v638
        %v690 = vpack.c.b16 %v641, %v640
        %v691 = vpack.c.b16 %v643, %v642
        %v692 = vpack.c.b16 %v645, %v644
        %v693 = vpack.c.b16 %v647, %v646
        %v694 = vpack.c.b16 %v649, %v648
        %v695 = vpack.c.b16 %v651, %v650
        %v696 = vpack.c.b16 %v653, %v652
        %v697 = vpack.c.b16 %v655, %v654
        %v698 = vpack.c.b16 %v657, %v656
        %v699 = vpack.c.b16 %v659, %v658
        %v700 = vpack.c.b16 %v661, %v660
        %v701 = vpack.c.b16 %v663, %v662
        %v702 = vpack.c.b16 %v665, %v664
        %v703 = vpack.c.b16 %v667, %v666
        %v704 = vpack.c.b16 %v669, %v668
        %v705 = vpack.c.b16 %v671, %v670
        %v706 = vpack.c.b16 %v673, %v672
        %v707 = vpack.c.b16 %v675, %v674
        %v756 = vunpack.c.l.b16 %v532
        %v757 = vunpack.c.l.b16 %v533
        %v758 = vunpack.c.l.b16 %v534
        %v759 = vunpack.c.l.b16 %v535
        %v760 = vunpack.c.l.b16 %v536
        %v761 = vunpack.c.l.b16 %v537
        %v762 = vunpack.c.l.b16 %v538
        %v763 = vunpack.c.l.b16 %v539
        %v764 = vunpack.c.l.b16 %v540
        %v765 = vunpack.c.l.b16 %v541
        %v766 = vunpack.c.l.b16 %v542
        %v767 = vunpack.c.l.b16 %v543
        %v768 = vunpack.c.l.b16 %v544
        %v769 = vunpack.c.l.b16 %v545
        %v770 = vunpack.c.l.b16 %v546
        %v771 = vunpack.c.l.b16 %v547
        %v772 = vpack.c.b16 %v757, %v756
        %v773 = vpack.c.b16 %v759, %v758
        %v774 = vpack.c.b16 %v761, %v760
        %v775 = vpack.c.b16 %v763, %v762
        %v776 = vpack.c.b16 %v765, %v764
        %v777 = vpack.c.b16 %v767, %v766
        %v778 = vpack.c.b16 %v769, %v768
        %v779 = vpack.c.b16 %v771, %v770
        %788 = vmatprep.subr.bf16.mxu0 0
        %789 = vmatpush1.bf16.msra.mxu0 %v772
        %790 = vmatprep.subr.bf16.mxu0 0
        %791 = vmatpush1.bf16.msra.mxu0 %v773
        %792 = vmatprep.subr.bf16.mxu0 0
        %793 = vmatpush1.bf16.msra.mxu0 %v774
        %794 = vmatprep.subr.bf16.mxu0 0
        %795 = vmatpush1.bf16.msra.mxu0 %v775
        %796 = vmatprep.subr.bf16.mxu0 0
        %797 = vmatpush1.bf16.msra.mxu0 %v776
        %798 = vmatprep.subr.bf16.mxu0 0
        %799 = vmatpush1.bf16.msra.mxu0 %v777
        %800 = vmatprep.subr.bf16.mxu0 0
        %801 = vmatpush1.bf16.msra.mxu0 %v778
        %802 = vmatprep.subr.bf16.mxu0 0
        %803 = vmatpush1.bf16.msra.mxu0 %v779
        %804 = vmatprep.subr.bf16.mxu0 0
        %805 = vmatpush1.bf16.msra.mxu0 0
        %806 = vmatprep.subr.bf16.mxu0 0
        %807 = vmatpush1.bf16.msra.mxu0 0
        %808 = vmatprep.subr.bf16.mxu0 0
        %809 = vmatpush1.bf16.msra.mxu0 0
        %810 = vmatprep.subr.bf16.mxu0 0
        %811 = vmatpush1.bf16.msra.mxu0 0
        %812 = vmatprep.subr.bf16.mxu0 0
        %813 = vmatpush1.bf16.msra.mxu0 0
        %814 = vmatprep.subr.bf16.mxu0 0
        %815 = vmatpush1.bf16.msra.mxu0 0
        %816 = vmatprep.subr.bf16.mxu0 0
        %817 = vmatpush1.bf16.msra.mxu0 0
        %818 = vmatprep.subr.bf16.mxu0 0
        %819 = vmatpush1.bf16.msra.mxu0 0
        %820 = vmatprep.mubr.bf16.mxu0 0
        %821 = vmatmul.mubr.bf16.gmra.mrb[0].mxu0 %v676
        %v822 = vpop.f32.mrb[0].mxu0
        %v823 = vadd.f32 0.0, %v822
        %v824 = vpop.f32.mrb[0].mxu0
        %v825 = vpop.f32.mrb[0].mxu0
        %v826 = vadd.f32 0.0, %v825
        %v827 = vpop.f32.mrb[0].mxu0
        %828 = vmatprep.mubr.bf16.mxu0 0
        %829 = vmatmul.mubr.bf16.gmra.mrb[0].mxu0 %v677
        %v830 = vpop.f32.mrb[0].mxu0
        %v831 = vadd.f32 0.0, %v830
        %v832 = vpop.f32.mrb[0].mxu0
        %v833 = vpop.f32.mrb[0].mxu0
        %v834 = vadd.f32 0.0, %v833
        %v835 = vpop.f32.mrb[0].mxu0
        %836 = vmatprep.mubr.bf16.mxu0 0
        %837 = vmatmul.mubr.bf16.gmra.mrb[0].mxu0 %v678
        %v838 = vpop.f32.mrb[0].mxu0
        %v839 = vadd.f32 0.0, %v838
        %v840 = vpop.f32.mrb[0].mxu0
        %v841 = vpop.f32.mrb[0].mxu0
        %v842 = vadd.f32 0.0, %v841
        %v843 = vpop.f32.mrb[0].mxu0
        %844 = vmatprep.mubr.bf16.mxu0 0
        %845 = vmatmul.mubr.bf16.gmra.mrb[0].mxu0 %v679
        %v846 = vpop.f32.mrb[0].mxu0
        %v847 = vadd.f32 0.0, %v846
        %v848 = vpop.f32.mrb[0].mxu0
        %v849 = vpop.f32.mrb[0].mxu0
        %v850 = vadd.f32 0.0, %v849
        %v851 = vpop.f32.mrb[0].mxu0
        %852 = vmatprep.mubr.bf16.mxu0 0
        %853 = vmatmul.mubr.bf16.gmra.mrb[0].mxu0 %v680
        %v854 = vpop.f32.mrb[0].mxu0
        %v855 = vadd.f32 0.0, %v854
        %v856 = vpop.f32.mrb[0].mxu0
        %v857 = vpop.f32.mrb[0].mxu0
        %v858 = vadd.f32 0.0, %v857
        %v859 = vpop.f32.mrb[0].mxu0
        %860 = vmatprep.mubr.bf16.mxu0 0
        %861 = vmatmul.mubr.bf16.gmra.mrb[0].mxu0 %v681
        %v862 = vpop.f32.mrb[0].mxu0
        %v863 = vadd.f32 0.0, %v862
        %v864 = vpop.f32.mrb[0].mxu0
        %v865 = vpop.f32.mrb[0].mxu0
        %v866 = vadd.f32 0.0, %v865
        %v867 = vpop.f32.mrb[0].mxu0
        %868 = vmatprep.mubr.bf16.mxu0 0
        %869 = vmatmul.mubr.bf16.gmra.mrb[0].mxu0 %v682
        %v870 = vpop.f32.mrb[0].mxu0
        %v871 = vadd.f32 0.0, %v870
        %v872 = vpop.f32.mrb[0].mxu0
        %v873 = vpop.f32.mrb[0].mxu0
        %v874 = vadd.f32 0.0, %v873
        %v875 = vpop.f32.mrb[0].mxu0
        %876 = vmatprep.mubr.bf16.mxu0 0
        %877 = vmatmul.mubr.bf16.gmra.mrb[0].mxu0 %v683
        %v878 = vpop.f32.mrb[0].mxu0
        %v879 = vadd.f32 0.0, %v878
        %v880 = vpop.f32.mrb[0].mxu0
        %v881 = vpop.f32.mrb[0].mxu0
        %v882 = vadd.f32 0.0, %v881
        %v883 = vpop.f32.mrb[0].mxu0
        %884 = vmatprep.mubr.bf16.mxu0 0
        %885 = vmatmul.mubr.bf16.gmra.mrb[0].mxu0 %v684
        %v886 = vpop.f32.mrb[0].mxu0
        %v887 = vadd.f32 0.0, %v886
        %v888 = vpop.f32.mrb[0].mxu0
        %v889 = vpop.f32.mrb[0].mxu0
        %v890 = vadd.f32 0.0, %v889
        %v891 = vpop.f32.mrb[0].mxu0
        %892 = vmatprep.mubr.bf16.mxu0 0
        %893 = vmatmul.mubr.bf16.gmra.mrb[0].mxu0 %v685
        %v894 = vpop.f32.mrb[0].mxu0
        %v895 = vadd.f32 0.0, %v894
        %v896 = vpop.f32.mrb[0].mxu0
        %v897 = vpop.f32.mrb[0].mxu0
        %v898 = vadd.f32 0.0, %v897
        %v899 = vpop.f32.mrb[0].mxu0
        %900 = vmatprep.mubr.bf16.mxu0 0
        %901 = vmatmul.mubr.bf16.gmra.mrb[0].mxu0 %v686
        %v902 = vpop.f32.mrb[0].mxu0
        %v903 = vadd.f32 0.0, %v902
        %v904 = vpop.f32.mrb[0].mxu0
        %v905 = vpop.f32.mrb[0].mxu0
        %v906 = vadd.f32 0.0, %v905
        %v907 = vpop.f32.mrb[0].mxu0
        %908 = vmatprep.mubr.bf16.mxu0 0
        %909 = vmatmul.mubr.bf16.gmra.mrb[0].mxu0 %v687
        %v910 = vpop.f32.mrb[0].mxu0
        %v911 = vadd.f32 0.0, %v910
        %v912 = vpop.f32.mrb[0].mxu0
        %v913 = vpop.f32.mrb[0].mxu0
        %v914 = vadd.f32 0.0, %v913
        %v915 = vpop.f32.mrb[0].mxu0
        %916 = vmatprep.mubr.bf16.mxu0 0
        %917 = vmatmul.mubr.bf16.gmra.mrb[0].mxu0 %v688
        %v918 = vpop.f32.mrb[0].mxu0
        %v919 = vadd.f32 0.0, %v918
        %v920 = vpop.f32.mrb[0].mxu0
        %v921 = vpop.f32.mrb[0].mxu0
        %v922 = vadd.f32 0.0, %v921
        %v923 = vpop.f32.mrb[0].mxu0
        %924 = vmatprep.mubr.bf16.mxu0 0
        %925 = vmatmul.mubr.bf16.gmra.mrb[0].mxu0 %v689
        %v926 = vpop.f32.mrb[0].mxu0
        %v927 = vadd.f32 0.0, %v926
        %v928 = vpop.f32.mrb[0].mxu0
        %v929 = vpop.f32.mrb[0].mxu0
        %v930 = vadd.f32 0.0, %v929
        %v931 = vpop.f32.mrb[0].mxu0
        %932 = vmatprep.mubr.bf16.mxu0 0
        %933 = vmatmul.mubr.bf16.gmra.mrb[0].mxu0 %v690
        %v934 = vpop.f32.mrb[0].mxu0
        %v935 = vadd.f32 0.0, %v934
        %v936 = vpop.f32.mrb[0].mxu0
        %v937 = vpop.f32.mrb[0].mxu0
        %v938 = vadd.f32 0.0, %v937
        %v939 = vpop.f32.mrb[0].mxu0
        %940 = vmatprep.mubr.bf16.mxu0 0
        %941 = vmatmul.mubr.bf16.gmra.mrb[0].mxu0 %v691
        %v942 = vpop.f32.mrb[0].mxu0
        %v943 = vadd.f32 0.0, %v942
        %v944 = vpop.f32.mrb[0].mxu0
        %v945 = vpop.f32.mrb[0].mxu0
        %v946 = vadd.f32 0.0, %v945
        %v947 = vpop.f32.mrb[0].mxu0
        %948 = vmatprep.mubr.bf16.mxu0 0
        %949 = vmatmul.mubr.bf16.gmra.mrb[0].mxu0 %v692
        %v950 = vpop.f32.mrb[0].mxu0
        %v951 = vadd.f32 0.0, %v950
        %v952 = vpop.f32.mrb[0].mxu0
        %v953 = vpop.f32.mrb[0].mxu0
        %v954 = vadd.f32 0.0, %v953
        %v955 = vpop.f32.mrb[0].mxu0
        %956 = vmatprep.mubr.bf16.mxu0 0
        %957 = vmatmul.mubr.bf16.gmra.mrb[0].mxu0 %v693
        %v958 = vpop.f32.mrb[0].mxu0
        %v959 = vadd.f32 0.0, %v958
        %v960 = vpop.f32.mrb[0].mxu0
        %v961 = vpop.f32.mrb[0].mxu0
        %v962 = vadd.f32 0.0, %v961
        %v963 = vpop.f32.mrb[0].mxu0
        %964 = vmatprep.mubr.bf16.mxu0 0
        %965 = vmatmul.mubr.bf16.gmra.mrb[0].mxu0 %v694
        %v966 = vpop.f32.mrb[0].mxu0
        %v967 = vadd.f32 0.0, %v966
        %v968 = vpop.f32.mrb[0].mxu0
        %v969 = vpop.f32.mrb[0].mxu0
        %v970 = vadd.f32 0.0, %v969
        %v971 = vpop.f32.mrb[0].mxu0
        %972 = vmatprep.mubr.bf16.mxu0 0
        %973 = vmatmul.mubr.bf16.gmra.mrb[0].mxu0 %v695
        %v974 = vpop.f32.mrb[0].mxu0
        %v975 = vadd.f32 0.0, %v974
        %v976 = vpop.f32.mrb[0].mxu0
        %v977 = vpop.f32.mrb[0].mxu0
        %v978 = vadd.f32 0.0, %v977
        %v979 = vpop.f32.mrb[0].mxu0
        %980 = vmatprep.mubr.bf16.mxu0 0
        %981 = vmatmul.mubr.bf16.gmra.mrb[0].mxu0 %v696
        %v982 = vpop.f32.mrb[0].mxu0
        %v983 = vadd.f32 0.0, %v982
        %v984 = vpop.f32.mrb[0].mxu0
        %v985 = vpop.f32.mrb[0].mxu0
        %v986 = vadd.f32 0.0, %v985
        %v987 = vpop.f32.mrb[0].mxu0
        %988 = vmatprep.mubr.bf16.mxu0 0
        %989 = vmatmul.mubr.bf16.gmra.mrb[0].mxu0 %v697
        %v990 = vpop.f32.mrb[0].mxu0
        %v991 = vadd.f32 0.0, %v990
        %v992 = vpop.f32.mrb[0].mxu0
        %v993 = vpop.f32.mrb[0].mxu0
        %v994 = vadd.f32 0.0, %v993
        %v995 = vpop.f32.mrb[0].mxu0
        %996 = vmatprep.mubr.bf16.mxu0 0
        %997 = vmatmul.mubr.bf16.gmra.mrb[0].mxu0 %v698
        %v998 = vpop.f32.mrb[0].mxu0
        %v999 = vadd.f32 0.0, %v998
        %v1000 = vpop.f32.mrb[0].mxu0
        %v1001 = vpop.f32.mrb[0].mxu0
        %v1002 = vadd.f32 0.0, %v1001
        %v1003 = vpop.f32.mrb[0].mxu0
        %1004 = vmatprep.mubr.bf16.mxu0 0
        %1005 = vmatmul.mubr.bf16.gmra.mrb[0].mxu0 %v699
        %v1006 = vpop.f32.mrb[0].mxu0
        %v1007 = vadd.f32 0.0, %v1006
        %v1008 = vpop.f32.mrb[0].mxu0
        %v1009 = vpop.f32.mrb[0].mxu0
        %v1010 = vadd.f32 0.0, %v1009
        %v1011 = vpop.f32.mrb[0].mxu0
        %1012 = vmatprep.mubr.bf16.mxu0 0
        %1013 = vmatmul.mubr.bf16.gmra.mrb[0].mxu0 %v700
        %v1014 = vpop.f32.mrb[0].mxu0
        %v1015 = vadd.f32 0.0, %v1014
        %v1016 = vpop.f32.mrb[0].mxu0
        %v1017 = vpop.f32.mrb[0].mxu0
        %v1018 = vadd.f32 0.0, %v1017
        %v1019 = vpop.f32.mrb[0].mxu0
        %1020 = vmatprep.mubr.bf16.mxu0 0
        %1021 = vmatmul.mubr.bf16.gmra.mrb[0].mxu0 %v701
        %v1022 = vpop.f32.mrb[0].mxu0
        %v1023 = vadd.f32 0.0, %v1022
        %v1024 = vpop.f32.mrb[0].mxu0
        %v1025 = vpop.f32.mrb[0].mxu0
        %v1026 = vadd.f32 0.0, %v1025
        %v1027 = vpop.f32.mrb[0].mxu0
        %1028 = vmatprep.mubr.bf16.mxu0 0
        %1029 = vmatmul.mubr.bf16.gmra.mrb[0].mxu0 %v702
        %v1030 = vpop.f32.mrb[0].mxu0
        %v1031 = vadd.f32 0.0, %v1030
        %v1032 = vpop.f32.mrb[0].mxu0
        %v1033 = vpop.f32.mrb[0].mxu0
        %v1034 = vadd.f32 0.0, %v1033
        %v1035 = vpop.f32.mrb[0].mxu0
        %1036 = vmatprep.mubr.bf16.mxu0 0
        %1037 = vmatmul.mubr.bf16.gmra.mrb[0].mxu0 %v703
        %v1038 = vpop.f32.mrb[0].mxu0
        %v1039 = vadd.f32 0.0, %v1038
        %v1040 = vpop.f32.mrb[0].mxu0
        %v1041 = vpop.f32.mrb[0].mxu0
        %v1042 = vadd.f32 0.0, %v1041
        %v1043 = vpop.f32.mrb[0].mxu0
        %1044 = vmatprep.mubr.bf16.mxu0 0
        %1045 = vmatmul.mubr.bf16.gmra.mrb[0].mxu0 %v704
        %v1046 = vpop.f32.mrb[0].mxu0
        %v1047 = vadd.f32 0.0, %v1046
        %v1048 = vpop.f32.mrb[0].mxu0
        %v1049 = vpop.f32.mrb[0].mxu0
        %v1050 = vadd.f32 0.0, %v1049
        %v1051 = vpop.f32.mrb[0].mxu0
        %1052 = vmatprep.mubr.bf16.mxu0 0
        %1053 = vmatmul.mubr.bf16.gmra.mrb[0].mxu0 %v705
        %v1054 = vpop.f32.mrb[0].mxu0
        %v1055 = vadd.f32 0.0, %v1054
        %v1056 = vpop.f32.mrb[0].mxu0
        %v1057 = vpop.f32.mrb[0].mxu0
        %v1058 = vadd.f32 0.0, %v1057
        %v1059 = vpop.f32.mrb[0].mxu0
        %1060 = vmatprep.mubr.bf16.mxu0 0
        %1061 = vmatmul.mubr.bf16.gmra.mrb[0].mxu0 %v706
        %v1062 = vpop.f32.mrb[0].mxu0
        %v1063 = vadd.f32 0.0, %v1062
        %v1064 = vpop.f32.mrb[0].mxu0
        %v1065 = vpop.f32.mrb[0].mxu0
        %v1066 = vadd.f32 0.0, %v1065
        %v1067 = vpop.f32.mrb[0].mxu0
        %1068 = vmatprep.mubr.bf16.mxu0 0
        %1069 = vmatmul.mubr.bf16.gmra.mrb[0].mxu0 %v707
        %v1070 = vpop.f32.mrb[0].mxu0
        %v1071 = vadd.f32 0.0, %v1070
        %v1072 = vpop.f32.mrb[0].mxu0
        %v1073 = vpop.f32.mrb[0].mxu0
        %v1074 = vadd.f32 0.0, %v1073
        %v1075 = vpop.f32.mrb[0].mxu0
        %1076 = vdwg.mxu0
        %v1077 = vmax.f32 %v823, %v887
        %v1078 = vmax.f32 %v826, %v890
        %v1079 = vmax.f32 %v831, %v895
        %v1080 = vmax.f32 %v834, %v898
        %v1081 = vmax.f32 %v839, %v903
        %v1082 = vmax.f32 %v842, %v906
        %v1083 = vmax.f32 %v847, %v911
        %v1084 = vmax.f32 %v850, %v914
        %v1085 = vmax.f32 %v855, %v919
        %v1086 = vmax.f32 %v858, %v922
        %v1087 = vmax.f32 %v863, %v927
        %v1088 = vmax.f32 %v866, %v930
        %v1089 = vmax.f32 %v871, %v935
        %v1090 = vmax.f32 %v874, %v938
        %v1091 = vmax.f32 %v879, %v943
        %v1092 = vmax.f32 %v882, %v946
        %v1093 = vmax.f32 %v951, %v1015
        %v1094 = vmax.f32 %v954, %v1018
        %v1095 = vmax.f32 %v959, %v1023
        %v1096 = vmax.f32 %v962, %v1026
        %v1097 = vmax.f32 %v967, %v1031
        %v1098 = vmax.f32 %v970, %v1034
        %v1099 = vmax.f32 %v975, %v1039
        %v1100 = vmax.f32 %v978, %v1042
        %v1101 = vmax.f32 %v983, %v1047
        %v1102 = vmax.f32 %v986, %v1050
        %v1103 = vmax.f32 %v991, %v1055
        %v1104 = vmax.f32 %v994, %v1058
        %v1105 = vmax.f32 %v999, %v1063
        %v1106 = vmax.f32 %v1002, %v1066
        %v1107 = vmax.f32 %v1007, %v1071
        %v1108 = vmax.f32 %v1010, %v1074
        %v1109 = vmax.f32 %v1077, %v1093
        %v1110 = vmax.f32 %v1078, %v1094
        %v1111 = vmax.f32 %v1079, %v1095
        %v1112 = vmax.f32 %v1080, %v1096
        %v1113 = vmax.f32 %v1081, %v1097
        %v1114 = vmax.f32 %v1082, %v1098
        %v1115 = vmax.f32 %v1083, %v1099
        %v1116 = vmax.f32 %v1084, %v1100
        %v1117 = vmax.f32 %v1085, %v1101
        %v1118 = vmax.f32 %v1086, %v1102
        %v1119 = vmax.f32 %v1087, %v1103
        %v1120 = vmax.f32 %v1088, %v1104
        %v1121 = vmax.f32 %v1089, %v1105
        %v1122 = vmax.f32 %v1090, %v1106
        %v1123 = vmax.f32 %v1091, %v1107
        %v1124 = vmax.f32 %v1092, %v1108
        %v1125 = vld [vmem:[%s2] sm:$0x1]
        %v1127 = vlaneseq
        %v1128 = vshrl.u32 %v1127, 7
        %v1129 = vsub.s32 0, %v1128
        %v1130 = vrot.slane %v1125, %v1129
        %v1132 = vadd.f32 %v1109, %v1130
        %v1133 = vadd.f32 %v1110, %v1130
        %v1134 = vadd.f32 %v1111, %v1130
        %v1135 = vadd.f32 %v1112, %v1130
        %v1136 = vadd.f32 %v1113, %v1130
        %v1137 = vadd.f32 %v1114, %v1130
        %v1138 = vadd.f32 %v1115, %v1130
        %v1139 = vadd.f32 %v1116, %v1130
        %v1140 = vadd.f32 %v1117, %v1130
        %v1141 = vadd.f32 %v1118, %v1130
        %v1142 = vadd.f32 %v1119, %v1130
        %v1143 = vadd.f32 %v1120, %v1130
        %v1144 = vadd.f32 %v1121, %v1130
        %v1145 = vadd.f32 %v1122, %v1130
        %v1146 = vadd.f32 %v1123, %v1130
        %v1147 = vadd.f32 %v1124, %v1130
        %v1148 = vmax.f32 %v1132, 0.0
        %v1149 = vmax.f32 %v1133, 0.0
        %v1150 = vmax.f32 %v1134, 0.0
        %v1151 = vmax.f32 %v1135, 0.0
        %v1152 = vmax.f32 %v1136, 0.0
        %v1153 = vmax.f32 %v1137, 0.0
        %v1154 = vmax.f32 %v1138, 0.0
        %v1155 = vmax.f32 %v1139, 0.0
        %v1156 = vmax.f32 %v1140, 0.0
        %v1157 = vmax.f32 %v1141, 0.0
        %v1158 = vmax.f32 %v1142, 0.0
        %v1159 = vmax.f32 %v1143, 0.0
        %v1160 = vmax.f32 %v1144, 0.0
        %v1161 = vmax.f32 %v1145, 0.0
        %v1162 = vmax.f32 %v1146, 0.0
        %v1163 = vmax.f32 %v1147, 0.0
        %v1164 = vpack.c.bf16 %v1149, %v1148
        %v1165 = vpack.c.bf16 %v1151, %v1150
        %v1166 = vpack.c.bf16 %v1153, %v1152
        %v1167 = vpack.c.bf16 %v1155, %v1154
        %v1168 = vpack.c.bf16 %v1157, %v1156
        %v1169 = vpack.c.bf16 %v1159, %v1158
        %v1170 = vpack.c.bf16 %v1161, %v1160
        %v1171 = vpack.c.bf16 %v1163, %v1162
        %v1180 = vunpack.c.l.b16 %v1164
        %v1181 = vunpack.c.h.b16 %v1164
        %v1182 = vunpack.c.l.b16 %v1165
        %v1183 = vunpack.c.h.b16 %v1165
        %v1184 = vunpack.c.l.b16 %v1166
        %v1185 = vunpack.c.h.b16 %v1166
        %v1186 = vunpack.c.l.b16 %v1167
        %v1187 = vunpack.c.h.b16 %v1167
        %v1188 = vunpack.c.l.b16 %v1168
        %v1189 = vunpack.c.h.b16 %v1168
        %v1190 = vunpack.c.l.b16 %v1169
        %v1191 = vunpack.c.h.b16 %v1169
        %v1192 = vunpack.c.l.b16 %v1170
        %v1193 = vunpack.c.h.b16 %v1170
        %v1194 = vunpack.c.l.b16 %v1171
        %v1195 = vunpack.c.h.b16 %v1171
        %v1196 = vpack.c.b16 %v1180, %v1180
        %v1197 = vpack.c.b16 %v1181, %v1181
        %v1198 = vpack.c.b16 %v1182, %v1182
        %v1199 = vpack.c.b16 %v1183, %v1183
        %v1200 = vpack.c.b16 %v1184, %v1184
        %v1201 = vpack.c.b16 %v1185, %v1185
        %v1202 = vpack.c.b16 %v1186, %v1186
        %v1203 = vpack.c.b16 %v1187, %v1187
        %v1204 = vpack.c.b16 %v1188, %v1188
        %v1205 = vpack.c.b16 %v1189, %v1189
        %v1206 = vpack.c.b16 %v1190, %v1190
        %v1207 = vpack.c.b16 %v1191, %v1191
        %v1208 = vpack.c.b16 %v1192, %v1192
        %v1209 = vpack.c.b16 %v1193, %v1193
        %v1210 = vpack.c.b16 %v1194, %v1194
        %v1211 = vpack.c.b16 %v1195, %v1195
        %1228 = vst [vmem:[%s465] sm:$0xf] %v1196
        %1229 = vst [vmem:[%s465 + $0x4] sm:$0xf] %v1197
        %1230 = vst [vmem:[%s465 + $0x8] sm:$0xf] %v1198
        %1231 = vst [vmem:[%s465 + $0xc] sm:$0xf] %v1199
        %1232 = vst [vmem:[%s465 + $0x10] sm:$0xf] %v1200
        %1233 = vst [vmem:[%s465 + $0x14] sm:$0xf] %v1201
        %1234 = vst [vmem:[%s465 + $0x18] sm:$0xf] %v1202
        %1235 = vst [vmem:[%s465 + $0x1c] sm:$0xf] %v1203
        %1236 = vst [vmem:[%s465 + $0x20] sm:$0xf] %v1204
        %1237 = vst [vmem:[%s465 + $0x24] sm:$0xf] %v1205
        %1238 = vst [vmem:[%s465 + $0x28] sm:$0xf] %v1206
        %1239 = vst [vmem:[%s465 + $0x2c] sm:$0xf] %v1207
        %1240 = vst [vmem:[%s465 + $0x30] sm:$0xf] %v1208
        %1241 = vst [vmem:[%s465 + $0x34] sm:$0xf] %v1209
        %1242 = vst [vmem:[%s465 + $0x38] sm:$0xf] %v1210
        %1243 = vst [vmem:[%s465 + $0x3c] sm:$0xf] %v1211
        %s1244 = smul.u32 16, %s14
        %p1245 = scmp.lt.s32.totalorder %s1244, 31
        %s1246 = scalar_select %p1245, %s1244, 31
        %s1247 = smul.addr %s1246, 4
        %s1248 = scalar_lea.vmem %s3, %s1247
        // Predicated region
        $region74: #{transfer_net_forward.4} parent=68 // pred_check
          %p1249 = pneg %p100
        $region75: #{transfer_net_forward.4} parent=68 // pred_check_branch
          %1251 = sbr.rel (%p1249) target = $region77
        $region76: #{transfer_net_forward.4} parent=68 // pred_region
          %s1252 = smul.u32 16, %s14
        $region77: #{transfer_net_forward.4} parent=68 // pred_fallthru
          _
      $region69: #{transfer_net_forward.4} parent=5 // pred_fallthru
        _
      %p1253 = scmp.le.s32.totalorder 2, %s9
      // Predicated region
      $region78: #{transfer_net_forward.4} parent=5 // pred_check
        %p1254 = pneg %p1253
      $region79: #{transfer_net_forward.4} parent=5 // pred_check_branch
        %1256 = sbr.rel (%p1254) target = $region81
      $region80: #{transfer_net_forward.4} parent=5 // pred_region
        %s1257 = ssub.s32 %s9, 2
        // Predicated region
        $region82: #{transfer_net_forward.4} parent=80 // pred_check
          %p1258 = pneg %p106
        $region83: #{transfer_net_forward.4} parent=80 // pred_check_branch
          %1260 = sbr.rel (%p1258) target = $region85
        $region84: #{transfer_net_forward.4} parent=80 // pred_region
          %s1261 = smul.u32 16, %s15
          %p1262 = scmp.lt.s32.totalorder %s1261, 31
          %s1263 = scalar_select %p1262, %s1261, 31
          %s1264 = smul.addr %s1263, 4
          %s1265 = scalar_lea.vmem %s3, %s1264
        $region85: #{transfer_net_forward.4} parent=80 // pred_fallthru
          _
      $region81: #{transfer_net_forward.4} parent=5 // pred_fallthru
        _
    $region6: #{transfer_net_forward.4} parent=1 // loop_footer
      %s13 = sadd.s32 1, %s9
    $region7: #{transfer_net_forward.4} parent=1 // loop_footer_branch
      %8 = sbr.rel target = $region3
    $region8: #{transfer_net_forward.4} parent=1 // loop_exit
      _

// kernel: transfer_net_forward.5
$region0: #{transfer_net_forward.5}
  #allocation0 [shape = 'u32[]', space=smem, size = 0x4, offset = 0x4, fixed_abs, tag = 'smem constant byte address 0x4 - core index']
  #allocation1 [shape = 'u32[144,128]{1,0:T(1,128)}', space=vmem, size = 0x12000, scoped, tag = 'internal scratch']
  %s0 = inlined_call_operand.vmem [shape: bf16[4,64,256], index: 0, kind: input, shape index: {}]
  %s1 = inlined_call_operand.vmem [shape: bf16[256,128], index: 1, kind: input, shape index: {}]
  %s2 = inlined_call_operand.vmem [shape: f32[1,128], index: 2, kind: input, shape index: {}]
  %s3 = inlined_call_operand.vmem [shape: bf16[64,128], index: 3, kind: output, shape index: {}]
  %s4 = sld [smem:[#allocation0]]
  $region83: #{transfer_net_forward.5} parent=0
    _
  %s6 = ssub.s32 1, %s4
  %s7 = scalar_select 0, %s6, %s4
  $region1: #{transfer_net_forward.5} parent=0
    #allocation2 [shape = 'u8[131072]{0}', space=vmem, size = 0x20000, scoped, tag = 'input window, operand 0']
    loop: start=0, step=1, limit=4
    $region2: #{transfer_net_forward.5} parent=1 // loop_pre_header
      _
    $region3: #{transfer_net_forward.5} parent=1 // loop_header
      %s9 = sphi 0, %s13
      %p10 = scmp.ge.s32.totalorder %s9, 4
      %s19 = sphi 0, %s21
      %s22 = sphi 0, %s19
      %s23 = sphi 0, %s22
      %s39 = sphi 0, %s23
      %s43 = sphi 0, %s43
      %s45 = sphi 0, %s43
      %s46 = sphi 0, %s45
      %s60 = sphi 0, %s46
      %s64 = sphi 0, %s64
      %s66 = sphi 0, %s64
      %s67 = sphi 0, %s66
      %s81 = sphi 0, %s67
      %s87 = sphi 0, %s89
      %s90 = sphi 0, %s87
      %s91 = sphi 0, %s90
      %s107 = sphi 0, %s91
    $region4: #{transfer_net_forward.5} parent=1 // loop_header_branch
      %12 = sbr.rel (%p10) target = $region8
    $region5: #{transfer_net_forward.5} parent=1 // loop_body
      %s14 = ssub.s32 %s9, 1
      %s15 = ssub.s32 %s9, 2
      %s16 = sadd.s32 %s9, 1
      %s17 = ssub.s32 %s9, %s16
      %p18 = scmp.eq.s32.totalorder %s17, 0
      %s20 = sadd.s32 %s19, 1
      %s21 = scalar_select %p18, %s19, %s20
      %p24 = pneg %p18
      %p25 = scmp.eq.s32.totalorder %s9, 1
      %p26 = por %p24, %p25
      %p27 = scmp.ne.s32.totalorder %s19, %s22
      %p28 = scmp.eq.s32.totalorder %s9, 0
      %p29 = por %p27, %p28
      %p30 = scmp.ne.s32.totalorder %s19, %s22
      %p31 = scmp.eq.s32.totalorder %s14, 1
      %p32 = por %p30, %p31
      %p33 = scmp.ne.s32.totalorder %s22, %s23
      %p34 = scmp.eq.s32.totalorder %s14, 0
      %p35 = por %p33, %p34
      %p36 = scmp.ne.s32.totalorder %s22, %s23
      %p37 = scmp.eq.s32.totalorder %s15, 1
      %p38 = por %p36, %p37
      %p40 = scmp.ne.s32.totalorder %s23, %s39
      %p41 = scmp.eq.s32.totalorder %s15, 0
      %p42 = por %p40, %p41
      %s44 = sadd.s32 %s43, 1
      %p47 = scmp.eq.s32.totalorder %s9, 1
      %p48 = scmp.ne.s32.totalorder %s43, %s45
      %p49 = scmp.eq.s32.totalorder %s9, 0
      %p50 = por %p48, %p49
      %p51 = scmp.ne.s32.totalorder %s43, %s45
      %p52 = scmp.eq.s32.totalorder %s14, 1
      %p53 = por %p51, %p52
      %p54 = scmp.ne.s32.totalorder %s45, %s46
      %p55 = scmp.eq.s32.totalorder %s14, 0
      %p56 = por %p54, %p55
      %p57 = scmp.ne.s32.totalorder %s45, %s46
      %p58 = scmp.eq.s32.totalorder %s15, 1
      %p59 = por %p57, %p58
      %p61 = scmp.ne.s32.totalorder %s46, %s60
      %p62 = scmp.eq.s32.totalorder %s15, 0
      %p63 = por %p61, %p62
      %s65 = sadd.s32 %s64, 1
      %p68 = scmp.eq.s32.totalorder %s9, 1
      %p69 = scmp.ne.s32.totalorder %s64, %s66
      %p70 = scmp.eq.s32.totalorder %s9, 0
      %p71 = por %p69, %p70
      %p72 = scmp.ne.s32.totalorder %s64, %s66
      %p73 = scmp.eq.s32.totalorder %s14, 1
      %p74 = por %p72, %p73
      %p75 = scmp.ne.s32.totalorder %s66, %s67
      %p76 = scmp.eq.s32.totalorder %s14, 0
      %p77 = por %p75, %p76
      %p78 = scmp.ne.s32.totalorder %s66, %s67
      %p79 = scmp.eq.s32.totalorder %s15, 1
      %p80 = por %p78, %p79
      %p82 = scmp.ne.s32.totalorder %s67, %s81
      %p83 = scmp.eq.s32.totalorder %s15, 0
      %p84 = por %p82, %p83
      %s85 = ssub.s32 %s9, %s16
      %p86 = scmp.eq.s32.totalorder %s85, 0
      %s88 = sadd.s32 %s87, 1
      %s89 = scalar_select %p86, %s87, %s88
      %p92 = pneg %p86
      %p93 = scmp.eq.s32.totalorder %s9, 1
      %p94 = por %p92, %p93
      %p95 = scmp.ne.s32.totalorder %s87, %s90
      %p96 = scmp.eq.s32.totalorder %s9, 0
      %p97 = por %p95, %p96
      %p98 = scmp.ne.s32.totalorder %s87, %s90
      %p99 = scmp.eq.s32.totalorder %s14, 1
      %p100 = por %p98, %p99
      %p101 = scmp.ne.s32.totalorder %s90, %s91
      %p102 = scmp.eq.s32.totalorder %s14, 0
      %p103 = por %p101, %p102
      %p104 = scmp.ne.s32.totalorder %s90, %s91
      %p105 = scmp.eq.s32.totalorder %s15, 1
      %p106 = por %p104, %p105
      %p108 = scmp.ne.s32.totalorder %s91, %s107
      %p109 = scmp.eq.s32.totalorder %s15, 0
      %p110 = por %p108, %p109
      %p111 = scmp.le.s32.totalorder 1, %s9
      %p112 = scmp.lt.s32.totalorder %s9, 3
      %p113 = pnand %p111, %p112
      %p114 = pneg %p113
      // Predicated region
      $region9: #{transfer_net_forward.5} parent=5 // pred_check
        _
      $region10: #{transfer_net_forward.5} parent=5 // pred_check_branch
        %116 = sbr.rel (%p113) target = $region12
      $region11: #{transfer_net_forward.5} parent=5 // pred_region
        %s117 = ssub.s32 %s9, 1
        // Predicated region
        $region13: #{transfer_net_forward.5} parent=11 // pred_check
          %p118 = pneg %p56
        $region14: #{transfer_net_forward.5} parent=11 // pred_check_branch
          %120 = sbr.rel (%p118) target = $region16
        $region15: #{transfer_net_forward.5} parent=11 // pred_region
          _
        $region16: #{transfer_net_forward.5} parent=11 // pred_fallthru
          _
        // Predicated region
        $region17: #{transfer_net_forward.5} parent=11 // pred_check
          %p121 = pneg %p77
        $region18: #{transfer_net_forward.5} parent=11 // pred_check_branch
          %123 = sbr.rel (%p121) target = $region20
        $region19: #{transfer_net_forward.5} parent=11 // pred_region
          _
        $region20: #{transfer_net_forward.5} parent=11 // pred_fallthru
          _
      $region12: #{transfer_net_forward.5} parent=5 // pred_fallthru
        _
      %p124 = scmp.lt.s32.totalorder %s9, 2
      // Predicated region
      $region21: #{transfer_net_forward.5} parent=5 // pred_check
        %p125 = pneg %p124
      $region22: #{transfer_net_forward.5} parent=5 // pred_check_branch
        %127 = sbr.rel (%p125) target = $region24
      $region23: #{transfer_net_forward.5} parent=5 // pred_region
        // Predicated region
        $region25: #{transfer_net_forward.5} parent=23 // pred_check
          %p128 = pneg %p29
        $region26: #{transfer_net_forward.5} parent=23 // pred_check_branch
          %130 = sbr.rel (%p128) target = $region28
        $region27: #{transfer_net_forward.5} parent=23 // pred_region
          %s131 = sand.u32 %s19, 1
          %s132 = sand.u32 %s19, 1
          %s133 = smul.addr %s132, 128
          %s134 = scalar_lea.vmem [#allocation2], %s133
          %s135 = smul.u32 4, %s9
          %s136 = smul.addr %s135, 2
          %s137 = smul.addr %s136, 4
          %s138 = scalar_lea.vmem %s0, %s137
          // Predicated region
          $region29: #{transfer_net_forward.5} parent=27 // pred_check
            _
          $region30: #{transfer_net_forward.5} parent=27 // pred_check_branch
            %140 = sbr.rel (0) target = $region32
          $region31: #{transfer_net_forward.5} parent=27 // pred_region
            // Predicated region
            $region33: #{transfer_net_forward.5} parent=31 // pred_check
              _
            $region34: #{transfer_net_forward.5} parent=31 // pred_check_branch
              %142 = sbr.rel (0) target = $region36
            $region35: #{transfer_net_forward.5} parent=31 // pred_region
              // Predicated region
              $region48: #{transfer_net_forward.5} parent=35 // pred_check
                _
              $region49: #{transfer_net_forward.5} parent=35 // pred_check_branch
                %187 = sbr.rel (0) target = $region51
              $region50: #{transfer_net_forward.5} parent=35 // pred_region
                loop: start=0, step=1, limit=1
                $region52: #{transfer_net_forward.5} parent=50 // loop_pre_header
                  _
                $region53: #{transfer_net_forward.5} parent=50 // loop_header
                  %s189 = sphi 0, %s193
                  %p190 = scmp.ge.s32.totalorder %s189, 1
                  %s194 = sphi %s138, %s138
                  %s195 = sphi %s134, %s134
                $region54: #{transfer_net_forward.5} parent=50 // loop_header_branch
                  %192 = sbr.rel (%p190) target = $region58
                $region55: #{transfer_net_forward.5} parent=50 // loop_body
                  %v196 = vld [vmem:[%s194] sm:$0xff]
                  %197 = vst [vmem:[%s195] sm:$0xff] %v196
                  %v198 = vld [vmem:[%s194 + $0x8] sm:$0xff]
                  %199 = vst [vmem:[%s195 + $0x8] sm:$0xff] %v198
                  %v200 = vld [vmem:[%s194 + $0x10] sm:$0xff]
                  %201 = vst [vmem:[%s195 + $0x10] sm:$0xff] %v200
                  %v202 = vld [vmem:[%s194 + $0x18] sm:$0xff]
                  %203 = vst [vmem:[%s195 + $0x18] sm:$0xff] %v202
                  %v204 = vld [vmem:[%s194 + $0x40] sm:$0xff]
                  %205 = vst [vmem:[%s195 + $0x20] sm:$0xff] %v204
                  %v206 = vld [vmem:[%s194 + $0x48] sm:$0xff]
                  %207 = vst [vmem:[%s195 + $0x28] sm:$0xff] %v206
                  %v208 = vld [vmem:[%s194 + $0x50] sm:$0xff]
                  %209 = vst [vmem:[%s195 + $0x30] sm:$0xff] %v208
                  %v210 = vld [vmem:[%s194 + $0x58] sm:$0xff]
                  %211 = vst [vmem:[%s195 + $0x38] sm:$0xff] %v210
                  %v212 = vld [vmem:[%s194 + $0x80] sm:$0xff]
                  %213 = vst [vmem:[%s195 + $0x40] sm:$0xff] %v212
                  %v214 = vld [vmem:[%s194 + $0x88] sm:$0xff]
                  %215 = vst [vmem:[%s195 + $0x48] sm:$0xff] %v214
                  %v216 = vld [vmem:[%s194 + $0x90] sm:$0xff]
                  %217 = vst [vmem:[%s195 + $0x50] sm:$0xff] %v216
                  %v218 = vld [vmem:[%s194 + $0x98] sm:$0xff]
                  %219 = vst [vmem:[%s195 + $0x58] sm:$0xff] %v218
                  %v220 = vld [vmem:[%s194 + $0xc0] sm:$0xff]
                  %221 = vst [vmem:[%s195 + $0x60] sm:$0xff] %v220
                  %v222 = vld [vmem:[%s194 + $0xc8] sm:$0xff]
                  %223 = vst [vmem:[%s195 + $0x68] sm:$0xff] %v222
                  %v224 = vld [vmem:[%s194 + $0xd0] sm:$0xff]
                  %225 = vst [vmem:[%s195 + $0x70] sm:$0xff] %v224
                  %v226 = vld [vmem:[%s194 + $0xd8] sm:$0xff]
                  %227 = vst [vmem:[%s195 + $0x78] sm:$0xff] %v226
                $region56: #{transfer_net_forward.5} parent=50 // loop_footer
                  %s193 = sadd.s32 1, %s189
                $region57: #{transfer_net_forward.5} parent=50 // loop_footer_branch
                  %188 = sbr.rel target = $region53
                $region58: #{transfer_net_forward.5} parent=50 // loop_exit
                  _
              $region51: #{transfer_net_forward.5} parent=35 // pred_fallthru
                _
              // Predicated region
              $region59: #{transfer_net_forward.5} parent=35 // pred_check
                _
              $region60: #{transfer_net_forward.5} parent=35 // pred_check_branch
                %229 = sbr.rel target = $region62
              $region61: #{transfer_net_forward.5} parent=35 // pred_region
                _
              $region62: #{transfer_net_forward.5} parent=35 // pred_fallthru
                _
            $region36: #{transfer_net_forward.5} parent=31 // pred_fallthru
              _
            // Predicated region
            $region37: #{transfer_net_forward.5} parent=31 // pred_check
              _
            $region38: #{transfer_net_forward.5} parent=31 // pred_check_branch
              %144 = sbr.rel target = $region40
            $region39: #{transfer_net_forward.5} parent=31 // pred_region
              loop: start=0, step=1, limit=1
              $region41: #{transfer_net_forward.5} parent=39 // loop_pre_header
                _
              $region42: #{transfer_net_forward.5} parent=39 // loop_header
                %s147 = sphi 0, %s151
                %p148 = scmp.ge.s32.totalorder %s147, 1
                %s152 = sphi %s138, %s138
                %s153 = sphi %s134, %s134
              $region43: #{transfer_net_forward.5} parent=39 // loop_header_branch
                %150 = sbr.rel (%p148) target = $region47
              $region44: #{transfer_net_forward.5} parent=39 // loop_body
                %v154 = vld [vmem:[%s152] sm:$0xff]
                %155 = vst [vmem:[%s153] sm:$0xff] %v154
                %v156 = vld [vmem:[%s152 + $0x8] sm:$0xff]
                %157 = vst [vmem:[%s153 + $0x8] sm:$0xff] %v156
                %v158 = vld [vmem:[%s152 + $0x10] sm:$0xff]
                %159 = vst [vmem:[%s153 + $0x10] sm:$0xff] %v158
                %v160 = vld [vmem:[%s152 + $0x18] sm:$0xff]
                %161 = vst [vmem:[%s153 + $0x18] sm:$0xff] %v160
                %v162 = vld [vmem:[%s152 + $0x40] sm:$0xff]
                %163 = vst [vmem:[%s153 + $0x20] sm:$0xff] %v162
                %v164 = vld [vmem:[%s152 + $0x48] sm:$0xff]
                %165 = vst [vmem:[%s153 + $0x28] sm:$0xff] %v164
                %v166 = vld [vmem:[%s152 + $0x50] sm:$0xff]
                %167 = vst [vmem:[%s153 + $0x30] sm:$0xff] %v166
                %v168 = vld [vmem:[%s152 + $0x58] sm:$0xff]
                %169 = vst [vmem:[%s153 + $0x38] sm:$0xff] %v168
                %v170 = vld [vmem:[%s152 + $0x80] sm:$0xff]
                %171 = vst [vmem:[%s153 + $0x40] sm:$0xff] %v170
                %v172 = vld [vmem:[%s152 + $0x88] sm:$0xff]
                %173 = vst [vmem:[%s153 + $0x48] sm:$0xff] %v172
                %v174 = vld [vmem:[%s152 + $0x90] sm:$0xff]
                %175 = vst [vmem:[%s153 + $0x50] sm:$0xff] %v174
                %v176 = vld [vmem:[%s152 + $0x98] sm:$0xff]
                %177 = vst [vmem:[%s153 + $0x58] sm:$0xff] %v176
                %v178 = vld [vmem:[%s152 + $0xc0] sm:$0xff]
                %179 = vst [vmem:[%s153 + $0x60] sm:$0xff] %v178
                %v180 = vld [vmem:[%s152 + $0xc8] sm:$0xff]
                %181 = vst [vmem:[%s153 + $0x68] sm:$0xff] %v180
                %v182 = vld [vmem:[%s152 + $0xd0] sm:$0xff]
                %183 = vst [vmem:[%s153 + $0x70] sm:$0xff] %v182
                %v184 = vld [vmem:[%s152 + $0xd8] sm:$0xff]
                %185 = vst [vmem:[%s153 + $0x78] sm:$0xff] %v184
              $region45: #{transfer_net_forward.5} parent=39 // loop_footer
                %s151 = sadd.s32 1, %s147
              $region46: #{transfer_net_forward.5} parent=39 // loop_footer_branch
                %146 = sbr.rel target = $region42
              $region47: #{transfer_net_forward.5} parent=39 // loop_exit
                _
            $region40: #{transfer_net_forward.5} parent=31 // pred_fallthru
              _
          $region32: #{transfer_net_forward.5} parent=27 // pred_fallthru
            _
          %230 = vnop
        $region28: #{transfer_net_forward.5} parent=23 // pred_fallthru
          _
      $region24: #{transfer_net_forward.5} parent=5 // pred_fallthru
        _
      %p231 = scmp.le.s32.totalorder 1, %s9
      %p232 = scmp.lt.s32.totalorder %s9, 3
      %p233 = pnand %p231, %p232
      %p234 = pneg %p233
      // Predicated region
      $region63: #{transfer_net_forward.5} parent=5 // pred_check
        _
      $region64: #{transfer_net_forward.5} parent=5 // pred_check_branch
        %236 = sbr.rel (%p233) target = $region66
      $region65: #{transfer_net_forward.5} parent=5 // pred_region
        %s237 = ssub.s32 %s9, 1
        %s238 = sand.u32 %s22, 1
        %s239 = sand.u32 %s22, 1
        %s240 = smul.addr %s239, 128
        %s241 = scalar_lea.vmem [#allocation2], %s240
        // Predicated region
        $region67: #{transfer_net_forward.5} parent=65 // pred_check
          %p242 = pneg %p35
        $region68: #{transfer_net_forward.5} parent=65 // pred_check_branch
          %244 = sbr.rel (%p242) target = $region70
        $region69: #{transfer_net_forward.5} parent=65 // pred_region
          _
        $region70: #{transfer_net_forward.5} parent=65 // pred_fallthru
          _
        %s245 = sand.u32 %s22, 1
        %s246 = sand.u32 %s22, 1
        %s247 = smul.addr %s246, 128
        %s248 = scalar_lea.vmem [#allocation2], %s247
        %p249 = pneg %p35
        %p250 = pneg %p32
        %p251 = pneg %p56
        %p252 = pneg %p53
        %p253 = pneg %p77
        %p254 = pneg %p74
        %p255 = pneg %p103
        %p256 = pneg %p100
        %s257 = smul.u32 4, %s14
        %p258 = scmp.lt.s32.totalorder %s257, 7
        %s259 = scalar_select %p258, %s257, 7
        %s260 = smul.addr %s259, 4
        %s261 = scalar_lea.vmem %s3, %s260
        %s262 = smul.u32 4, %s14
        %s263 = smul.u32 4, %s14
        %p264 = scmp.lt.s32.totalorder %s263, 7
        %s265 = scalar_select %p264, %s263, 7
        %s266 = smul.addr %s265, 4
        %s267 = scalar_lea.vmem %s3, %s266
        %s268 = smul.u32 4, %s14
        %v270 = vld [vmem:[%s241] sm:$0xff]
        %v271 = vld [vmem:[%s241 + $0x8] sm:$0xff]
        %v272 = vld [vmem:[%s241 + $0x10] sm:$0xff]
        %v273 = vld [vmem:[%s241 + $0x18] sm:$0xff]
        %v274 = vld [vmem:[%s241 + $0x20] sm:$0xff]
        %v275 = vld [vmem:[%s241 + $0x28] sm:$0xff]
        %v276 = vld [vmem:[%s241 + $0x30] sm:$0xff]
        %v277 = vld [vmem:[%s241 + $0x38] sm:$0xff]
        %v278 = vld [vmem:[%s241 + $0x40] sm:$0xff]
        %v279 = vld [vmem:[%s241 + $0x48] sm:$0xff]
        %v280 = vld [vmem:[%s241 + $0x50] sm:$0xff]
        %v281 = vld [vmem:[%s241 + $0x58] sm:$0xff]
        %v282 = vld [vmem:[%s241 + $0x60] sm:$0xff]
        %v283 = vld [vmem:[%s241 + $0x68] sm:$0xff]
        %v284 = vld [vmem:[%s241 + $0x70] sm:$0xff]
        %v285 = vld [vmem:[%s241 + $0x78] sm:$0xff]
        %v286 = vld [vmem:[%s1] sm:$0xf]
        %v287 = vld [vmem:[%s1 + $0x4] sm:$0xf]
        %v288 = vld [vmem:[%s1 + $0x8] sm:$0xf]
        %v289 = vld [vmem:[%s1 + $0xc] sm:$0xf]
        %v290 = vld [vmem:[%s1 + $0x10] sm:$0xf]
        %v291 = vld [vmem:[%s1 + $0x14] sm:$0xf]
        %v292 = vld [vmem:[%s1 + $0x18] sm:$0xf]
        %v293 = vld [vmem:[%s1 + $0x1c] sm:$0xf]
        %v294 = vld [vmem:[%s1 + $0x20] sm:$0xf]
        %v295 = vld [vmem:[%s1 + $0x24] sm:$0xf]
        %v296 = vld [vmem:[%s1 + $0x28] sm:$0xf]
        %v297 = vld [vmem:[%s1 + $0x2c] sm:$0xf]
        %v298 = vld [vmem:[%s1 + $0x30] sm:$0xf]
        %v299 = vld [vmem:[%s1 + $0x34] sm:$0xf]
        %v300 = vld [vmem:[%s1 + $0x38] sm:$0xf]
        %v301 = vld [vmem:[%s1 + $0x3c] sm:$0xf]
        %v302 = vld [vmem:[%s1 + $0x40] sm:$0xf]
        %v303 = vld [vmem:[%s1 + $0x44] sm:$0xf]
        %v304 = vld [vmem:[%s1 + $0x48] sm:$0xf]
        %v305 = vld [vmem:[%s1 + $0x4c] sm:$0xf]
        %v306 = vld [vmem:[%s1 + $0x50] sm:$0xf]
        %v307 = vld [vmem:[%s1 + $0x54] sm:$0xf]
        %v308 = vld [vmem:[%s1 + $0x58] sm:$0xf]
        %v309 = vld [vmem:[%s1 + $0x5c] sm:$0xf]
        %v310 = vld [vmem:[%s1 + $0x60] sm:$0xf]
        %v311 = vld [vmem:[%s1 + $0x64] sm:$0xf]
        %v312 = vld [vmem:[%s1 + $0x68] sm:$0xf]
        %v313 = vld [vmem:[%s1 + $0x6c] sm:$0xf]
        %v314 = vld [vmem:[%s1 + $0x70] sm:$0xf]
        %v315 = vld [vmem:[%s1 + $0x74] sm:$0xf]
        %v316 = vld [vmem:[%s1 + $0x78] sm:$0xf]
        %v317 = vld [vmem:[%s1 + $0x7c] sm:$0xf]
        %v334 = vunpack.c.l.b16 %v270
        %v335 = vunpack.c.h.b16 %v270
        %v336 = vunpack.c.l.b16 %v271
        %v337 = vunpack.c.h.b16 %v271
        %v338 = vunpack.c.l.b16 %v272
        %v339 = vunpack.c.h.b16 %v272
        %v340 = vunpack.c.l.b16 %v273
        %v341 = vunpack.c.h.b16 %v273
        %v342 = vunpack.c.l.b16 %v274
        %v343 = vunpack.c.h.b16 %v274
        %v344 = vunpack.c.l.b16 %v275
        %v345 = vunpack.c.h.b16 %v275
        %v346 = vunpack.c.l.b16 %v276
        %v347 = vunpack.c.h.b16 %v276
        %v348 = vunpack.c.l.b16 %v277
        %v349 = vunpack.c.h.b16 %v277
        %v350 = vunpack.c.l.b16 %v278
        %v351 = vunpack.c.h.b16 %v278
        %v352 = vunpack.c.l.b16 %v279
        %v353 = vunpack.c.h.b16 %v279
        %v354 = vunpack.c.l.b16 %v280
        %v355 = vunpack.c.h.b16 %v280
        %v356 = vunpack.c.l.b16 %v281
        %v357 = vunpack.c.h.b16 %v281
        %v358 = vunpack.c.l.b16 %v282
        %v359 = vunpack.c.h.b16 %v282
        %v360 = vunpack.c.l.b16 %v283
        %v361 = vunpack.c.h.b16 %v283
        %v362 = vunpack.c.l.b16 %v284
        %v363 = vunpack.c.h.b16 %v284
        %v364 = vunpack.c.l.b16 %v285
        %v365 = vunpack.c.h.b16 %v285
        %v366 = vpack.c.b16 %v336, %v334
        %v367 = vpack.c.b16 %v337, %v335
        %v368 = vpack.c.b16 %v340, %v338
        %v369 = vpack.c.b16 %v341, %v339
        %v370 = vpack.c.b16 %v344, %v342
        %v371 = vpack.c.b16 %v345, %v343
        %v372 = vpack.c.b16 %v348, %v346
        %v373 = vpack.c.b16 %v349, %v347
        %v374 = vpack.c.b16 %v352, %v350
        %v375 = vpack.c.b16 %v353, %v351
        %v376 = vpack.c.b16 %v356, %v354
        %v377 = vpack.c.b16 %v357, %v355
        %v378 = vpack.c.b16 %v360, %v358
        %v379 = vpack.c.b16 %v361, %v359
        %v380 = vpack.c.b16 %v364, %v362
        %v381 = vpack.c.b16 %v365, %v363
        %v430 = vunpack.c.l.b16 %v286
        %v431 = vunpack.c.l.b16 %v287
        %v432 = vunpack.c.l.b16 %v288
        %v433 = vunpack.c.l.b16 %v289
        %v434 = vunpack.c.l.b16 %v290
        %v435 = vunpack.c.l.b16 %v291
        %v436 = vunpack.c.l.b16 %v292
        %v437 = vunpack.c.l.b16 %v293
        %v438 = vunpack.c.l.b16 %v294
        %v439 = vunpack.c.l.b16 %v295
        %v440 = vunpack.c.l.b16 %v296
        %v441 = vunpack.c.l.b16 %v297
        %v442 = vunpack.c.l.b16 %v298
        %v443 = vunpack.c.l.b16 %v299
        %v444 = vunpack.c.l.b16 %v300
        %v445 = vunpack.c.l.b16 %v301
        %v446 = vunpack.c.l.b16 %v302
        %v447 = vunpack.c.l.b16 %v303
        %v448 = vunpack.c.l.b16 %v304
        %v449 = vunpack.c.l.b16 %v305
        %v450 = vunpack.c.l.b16 %v306
        %v451 = vunpack.c.l.b16 %v307
        %v452 = vunpack.c.l.b16 %v308
        %v453 = vunpack.c.l.b16 %v309
        %v454 = vunpack.c.l.b16 %v310
        %v455 = vunpack.c.l.b16 %v311
        %v456 = vunpack.c.l.b16 %v312
        %v457 = vunpack.c.l.b16 %v313
        %v458 = vunpack.c.l.b16 %v314
        %v459 = vunpack.c.l.b16 %v315
        %v460 = vunpack.c.l.b16 %v316
        %v461 = vunpack.c.l.b16 %v317
        %v462 = vpack.c.b16 %v431, %v430
        %v463 = vpack.c.b16 %v433, %v432
        %v464 = vpack.c.b16 %v435, %v434
        %v465 = vpack.c.b16 %v437, %v436
        %v466 = vpack.c.b16 %v439, %v438
        %v467 = vpack.c.b16 %v441, %v440
        %v468 = vpack.c.b16 %v443, %v442
        %v469 = vpack.c.b16 %v445, %v444
        %v470 = vpack.c.b16 %v447, %v446
        %v471 = vpack.c.b16 %v449, %v448
        %v472 = vpack.c.b16 %v451, %v450
        %v473 = vpack.c.b16 %v453, %v452
        %v474 = vpack.c.b16 %v455, %v454
        %v475 = vpack.c.b16 %v457, %v456
        %v476 = vpack.c.b16 %v459, %v458
        %v477 = vpack.c.b16 %v461, %v460
        %494 = vmatprep.subr.bf16.mxu0 0
        %495 = vmatpush1.bf16.msra.mxu0 %v462
        %496 = vmatprep.subr.bf16.mxu0 0
        %497 = vmatpush1.bf16.msra.mxu0 %v463
        %498 = vmatprep.subr.bf16.mxu0 0
        %499 = vmatpush1.bf16.msra.mxu0 %v464
        %500 = vmatprep.subr.bf16.mxu0 0
        %501 = vmatpush1.bf16.msra.mxu0 %v465
        %502 = vmatprep.subr.bf16.mxu0 0
        %503 = vmatpush1.bf16.msra.mxu0 %v466
        %504 = vmatprep.subr.bf16.mxu0 0
        %505 = vmatpush1.bf16.msra.mxu0 %v467
        %506 = vmatprep.subr.bf16.mxu0 0
        %507 = vmatpush1.bf16.msra.mxu0 %v468
        %508 = vmatprep.subr.bf16.mxu0 0
        %509 = vmatpush1.bf16.msra.mxu0 %v469
        %510 = vmatprep.subr.bf16.mxu0 0
        %511 = vmatpush1.bf16.msra.mxu0 %v470
        %512 = vmatprep.subr.bf16.mxu0 0
        %513 = vmatpush1.bf16.msra.mxu0 %v471
        %514 = vmatprep.subr.bf16.mxu0 0
        %515 = vmatpush1.bf16.msra.mxu0 %v472
        %516 = vmatprep.subr.bf16.mxu0 0
        %517 = vmatpush1.bf16.msra.mxu0 %v473
        %518 = vmatprep.subr.bf16.mxu0 0
        %519 = vmatpush1.bf16.msra.mxu0 %v474
        %520 = vmatprep.subr.bf16.mxu0 0
        %521 = vmatpush1.bf16.msra.mxu0 %v475
        %522 = vmatprep.subr.bf16.mxu0 0
        %523 = vmatpush1.bf16.msra.mxu0 %v476
        %524 = vmatprep.subr.bf16.mxu0 0
        %525 = vmatpush1.bf16.msra.mxu0 %v477
        %526 = vmatprep.mubr.bf16.mxu0 %v367
        %527 = vmatmul.mubr.bf16.gmra.mrb[0].mxu0 %v366
        %v528 = vpop.f32.mrb[0].mxu0
        %v529 = vadd.f32 0.0, %v528
        %v530 = vpop.f32.mrb[0].mxu0
        %v531 = vpop.f32.mrb[0].mxu0
        %v532 = vadd.f32 0.0, %v531
        %v533 = vpop.f32.mrb[0].mxu0
        %534 = vmatprep.mubr.bf16.mxu0 %v369
        %535 = vmatmul.mubr.bf16.gmra.mrb[0].mxu0 %v368
        %v536 = vpop.f32.mrb[0].mxu0
        %v537 = vadd.f32 0.0, %v536
        %v538 = vpop.f32.mrb[0].mxu0
        %v539 = vpop.f32.mrb[0].mxu0
        %v540 = vadd.f32 0.0, %v539
        %v541 = vpop.f32.mrb[0].mxu0
        %542 = vmatprep.mubr.bf16.mxu0 %v371
        %543 = vmatmul.mubr.bf16.gmra.mrb[0].mxu0 %v370
        %v544 = vpop.f32.mrb[0].mxu0
        %v545 = vadd.f32 0.0, %v544
        %v546 = vpop.f32.mrb[0].mxu0
        %v547 = vpop.f32.mrb[0].mxu0
        %v548 = vadd.f32 0.0, %v547
        %v549 = vpop.f32.mrb[0].mxu0
        %550 = vmatprep.mubr.bf16.mxu0 %v373
        %551 = vmatmul.mubr.bf16.gmra.mrb[0].mxu0 %v372
        %v552 = vpop.f32.mrb[0].mxu0
        %v553 = vadd.f32 0.0, %v552
        %v554 = vpop.f32.mrb[0].mxu0
        %v555 = vpop.f32.mrb[0].mxu0
        %v556 = vadd.f32 0.0, %v555
        %v557 = vpop.f32.mrb[0].mxu0
        %558 = vmatprep.mubr.bf16.mxu0 %v375
        %559 = vmatmul.mubr.bf16.gmra.mrb[0].mxu0 %v374
        %v560 = vpop.f32.mrb[0].mxu0
        %v561 = vadd.f32 0.0, %v560
        %v562 = vpop.f32.mrb[0].mxu0
        %v563 = vpop.f32.mrb[0].mxu0
        %v564 = vadd.f32 0.0, %v563
        %v565 = vpop.f32.mrb[0].mxu0
        %566 = vmatprep.mubr.bf16.mxu0 %v377
        %567 = vmatmul.mubr.bf16.gmra.mrb[0].mxu0 %v376
        %v568 = vpop.f32.mrb[0].mxu0
        %v569 = vadd.f32 0.0, %v568
        %v570 = vpop.f32.mrb[0].mxu0
        %v571 = vpop.f32.mrb[0].mxu0
        %v572 = vadd.f32 0.0, %v571
        %v573 = vpop.f32.mrb[0].mxu0
        %574 = vmatprep.mubr.bf16.mxu0 %v379
        %575 = vmatmul.mubr.bf16.gmra.mrb[0].mxu0 %v378
        %v576 = vpop.f32.mrb[0].mxu0
        %v577 = vadd.f32 0.0, %v576
        %v578 = vpop.f32.mrb[0].mxu0
        %v579 = vpop.f32.mrb[0].mxu0
        %v580 = vadd.f32 0.0, %v579
        %v581 = vpop.f32.mrb[0].mxu0
        %582 = vmatprep.mubr.bf16.mxu0 %v381
        %583 = vmatmul.mubr.bf16.gmra.mrb[0].mxu0 %v380
        %v584 = vpop.f32.mrb[0].mxu0
        %v585 = vadd.f32 0.0, %v584
        %v586 = vpop.f32.mrb[0].mxu0
        %v587 = vpop.f32.mrb[0].mxu0
        %v588 = vadd.f32 0.0, %v587
        %v589 = vpop.f32.mrb[0].mxu0
        %590 = vdwg.mxu0
        %v591 = vmax.f32 %v529, %v545
        %v592 = vmax.f32 %v532, %v548
        %v593 = vmax.f32 %v537, %v553
        %v594 = vmax.f32 %v540, %v556
        %v595 = vmax.f32 %v561, %v577
        %v596 = vmax.f32 %v564, %v580
        %v597 = vmax.f32 %v569, %v585
        %v598 = vmax.f32 %v572, %v588
        %v599 = vmax.f32 %v591, %v595
        %v600 = vmax.f32 %v592, %v596
        %v601 = vmax.f32 %v593, %v597
        %v602 = vmax.f32 %v594, %v598
        %v603 = vld [vmem:[%s2] sm:$0x1]
        %v605 = vlaneseq
        %v606 = vshrl.u32 %v605, 7
        %v607 = vsub.s32 0, %v606
        %v608 = vrot.slane %v603, %v607
        %v610 = vadd.f32 %v599, %v608
        %v611 = vadd.f32 %v600, %v608
        %v612 = vadd.f32 %v601, %v608
        %v613 = vadd.f32 %v602, %v608
        %v614 = vmax.f32 %v610, 0.0
        %v615 = vmax.f32 %v611, 0.0
        %v616 = vmax.f32 %v612, 0.0
        %v617 = vmax.f32 %v613, 0.0
        %v618 = vpack.c.bf16 %v615, %v614
        %v619 = vpack.c.bf16 %v617, %v616
        %v622 = vunpack.c.l.b16 %v618
        %v623 = vunpack.c.h.b16 %v618
        %v624 = vunpack.c.l.b16 %v619
        %v625 = vunpack.c.h.b16 %v619
        %v626 = vpack.c.b16 %v622, %v622
        %v627 = vpack.c.b16 %v623, %v623
        %v628 = vpack.c.b16 %v624, %v624
        %v629 = vpack.c.b16 %v625, %v625
        %634 = vst [vmem:[%s267] sm:$0xf] %v626
        %635 = vst [vmem:[%s267 + $0x4] sm:$0xf] %v627
        %636 = vst [vmem:[%s267 + $0x8] sm:$0xf] %v628
        %637 = vst [vmem:[%s267 + $0xc] sm:$0xf] %v629
        %s638 = smul.u32 4, %s14
        %p639 = scmp.lt.s32.totalorder %s638, 7
        %s640 = scalar_select %p639, %s638, 7
        %s641 = smul.addr %s640, 4
        %s642 = scalar_lea.vmem %s3, %s641
        // Predicated region
        $region71: #{transfer_net_forward.5} parent=65 // pred_check
          %p643 = pneg %p100
        $region72: #{transfer_net_forward.5} parent=65 // pred_check_branch
          %645 = sbr.rel (%p643) target = $region74
        $region73: #{transfer_net_forward.5} parent=65 // pred_region
          %s646 = smul.u32 4, %s14
        $region74: #{transfer_net_forward.5} parent=65 // pred_fallthru
          _
      $region66: #{transfer_net_forward.5} parent=5 // pred_fallthru
        _
      %p647 = scmp.le.s32.totalorder 2, %s9
      // Predicated region
      $region75: #{transfer_net_forward.5} parent=5 // pred_check
        %p648 = pneg %p647
      $region76: #{transfer_net_forward.5} parent=5 // pred_check_branch
        %650 = sbr.rel (%p648) target = $region78
      $region77: #{transfer_net_forward.5} parent=5 // pred_region
        %s651 = ssub.s32 %s9, 2
        // Predicated region
        $region79: #{transfer_net_forward.5} parent=77 // pred_check
          %p652 = pneg %p106
        $region80: #{transfer_net_forward.5} parent=77 // pred_check_branch
          %654 = sbr.rel (%p652) target = $region82
        $region81: #{transfer_net_forward.5} parent=77 // pred_region
          %s655 = smul.u32 4, %s15
          %p656 = scmp.lt.s32.totalorder %s655, 7
          %s657 = scalar_select %p656, %s655, 7
          %s658 = smul.addr %s657, 4
          %s659 = scalar_lea.vmem %s3, %s658
        $region82: #{transfer_net_forward.5} parent=77 // pred_fallthru
          _
      $region78: #{transfer_net_forward.5} parent=5 // pred_fallthru
        _
    $region6: #{transfer_net_forward.5} parent=1 // loop_footer
      %s13 = sadd.s32 1, %s9
    $region7: #{transfer_net_forward.5} parent=1 // loop_footer_branch
      %8 = sbr.rel target = $region3
    $region8: #{transfer_net_forward.5} parent=1 // loop_exit
      _

// kernel: transfer_net_forward.6
$region0: #{transfer_net_forward.6}
  #allocation0 [shape = 'u32[]', space=smem, size = 0x4, offset = 0x4, fixed_abs, tag = 'smem constant byte address 0x4 - core index']
  #allocation1 [shape = 'u32[144,128]{1,0:T(1,128)}', space=vmem, size = 0x12000, scoped, tag = 'internal scratch']
  %s0 = inlined_call_operand.vmem [shape: bf16[4,16,384], index: 0, kind: input, shape index: {}]
  %s1 = inlined_call_operand.vmem [shape: bf16[384,128], index: 1, kind: input, shape index: {}]
  %s2 = inlined_call_operand.vmem [shape: f32[1,128], index: 2, kind: input, shape index: {}]
  %s3 = inlined_call_operand.vmem [shape: bf16[16,128], index: 3, kind: output, shape index: {}]
  %s4 = sld [smem:[#allocation0]]
  $region71: #{transfer_net_forward.6} parent=0
    _
  %s6 = ssub.s32 1, %s4
  %s7 = scalar_select 0, %s6, %s4
  $region1: #{transfer_net_forward.6} parent=0
    #allocation2 [shape = 'u8[49152]{0}', space=vmem, size = 0xc000, scoped, tag = 'input window, operand 0']
    loop: start=0, step=1, limit=4
    $region2: #{transfer_net_forward.6} parent=1 // loop_pre_header
      _
    $region3: #{transfer_net_forward.6} parent=1 // loop_header
      %s9 = sphi 0, %s13
      %p10 = scmp.ge.s32.totalorder %s9, 4
      %s19 = sphi 0, %s21
      %s22 = sphi 0, %s19
      %s23 = sphi 0, %s22
      %s39 = sphi 0, %s23
      %s43 = sphi 0, %s43
      %s45 = sphi 0, %s43
      %s46 = sphi 0, %s45
      %s60 = sphi 0, %s46
      %s64 = sphi 0, %s64
      %s66 = sphi 0, %s64
      %s67 = sphi 0, %s66
      %s81 = sphi 0, %s67
      %s87 = sphi 0, %s89
      %s90 = sphi 0, %s87
      %s91 = sphi 0, %s90
      %s107 = sphi 0, %s91
    $region4: #{transfer_net_forward.6} parent=1 // loop_header_branch
      %12 = sbr.rel (%p10) target = $region8
    $region5: #{transfer_net_forward.6} parent=1 // loop_body
      %s14 = ssub.s32 %s9, 1
      %s15 = ssub.s32 %s9, 2
      %s16 = sadd.s32 %s9, 1
      %s17 = ssub.s32 %s9, %s16
      %p18 = scmp.eq.s32.totalorder %s17, 0
      %s20 = sadd.s32 %s19, 1
      %s21 = scalar_select %p18, %s19, %s20
      %p24 = pneg %p18
      %p25 = scmp.eq.s32.totalorder %s9, 1
      %p26 = por %p24, %p25
      %p27 = scmp.ne.s32.totalorder %s19, %s22
      %p28 = scmp.eq.s32.totalorder %s9, 0
      %p29 = por %p27, %p28
      %p30 = scmp.ne.s32.totalorder %s19, %s22
      %p31 = scmp.eq.s32.totalorder %s14, 1
      %p32 = por %p30, %p31
      %p33 = scmp.ne.s32.totalorder %s22, %s23
      %p34 = scmp.eq.s32.totalorder %s14, 0
      %p35 = por %p33, %p34
      %p36 = scmp.ne.s32.totalorder %s22, %s23
      %p37 = scmp.eq.s32.totalorder %s15, 1
      %p38 = por %p36, %p37
      %p40 = scmp.ne.s32.totalorder %s23, %s39
      %p41 = scmp.eq.s32.totalorder %s15, 0
      %p42 = por %p40, %p41
      %s44 = sadd.s32 %s43, 1
      %p47 = scmp.eq.s32.totalorder %s9, 1
      %p48 = scmp.ne.s32.totalorder %s43, %s45
      %p49 = scmp.eq.s32.totalorder %s9, 0
      %p50 = por %p48, %p49
      %p51 = scmp.ne.s32.totalorder %s43, %s45
      %p52 = scmp.eq.s32.totalorder %s14, 1
      %p53 = por %p51, %p52
      %p54 = scmp.ne.s32.totalorder %s45, %s46
      %p55 = scmp.eq.s32.totalorder %s14, 0
      %p56 = por %p54, %p55
      %p57 = scmp.ne.s32.totalorder %s45, %s46
      %p58 = scmp.eq.s32.totalorder %s15, 1
      %p59 = por %p57, %p58
      %p61 = scmp.ne.s32.totalorder %s46, %s60
      %p62 = scmp.eq.s32.totalorder %s15, 0
      %p63 = por %p61, %p62
      %s65 = sadd.s32 %s64, 1
      %p68 = scmp.eq.s32.totalorder %s9, 1
      %p69 = scmp.ne.s32.totalorder %s64, %s66
      %p70 = scmp.eq.s32.totalorder %s9, 0
      %p71 = por %p69, %p70
      %p72 = scmp.ne.s32.totalorder %s64, %s66
      %p73 = scmp.eq.s32.totalorder %s14, 1
      %p74 = por %p72, %p73
      %p75 = scmp.ne.s32.totalorder %s66, %s67
      %p76 = scmp.eq.s32.totalorder %s14, 0
      %p77 = por %p75, %p76
      %p78 = scmp.ne.s32.totalorder %s66, %s67
      %p79 = scmp.eq.s32.totalorder %s15, 1
      %p80 = por %p78, %p79
      %p82 = scmp.ne.s32.totalorder %s67, %s81
      %p83 = scmp.eq.s32.totalorder %s15, 0
      %p84 = por %p82, %p83
      %s85 = ssub.s32 %s9, %s16
      %p86 = scmp.eq.s32.totalorder %s85, 0
      %s88 = sadd.s32 %s87, 1
      %s89 = scalar_select %p86, %s87, %s88
      %p92 = pneg %p86
      %p93 = scmp.eq.s32.totalorder %s9, 1
      %p94 = por %p92, %p93
      %p95 = scmp.ne.s32.totalorder %s87, %s90
      %p96 = scmp.eq.s32.totalorder %s9, 0
      %p97 = por %p95, %p96
      %p98 = scmp.ne.s32.totalorder %s87, %s90
      %p99 = scmp.eq.s32.totalorder %s14, 1
      %p100 = por %p98, %p99
      %p101 = scmp.ne.s32.totalorder %s90, %s91
      %p102 = scmp.eq.s32.totalorder %s14, 0
      %p103 = por %p101, %p102
      %p104 = scmp.ne.s32.totalorder %s90, %s91
      %p105 = scmp.eq.s32.totalorder %s15, 1
      %p106 = por %p104, %p105
      %p108 = scmp.ne.s32.totalorder %s91, %s107
      %p109 = scmp.eq.s32.totalorder %s15, 0
      %p110 = por %p108, %p109
      %p111 = scmp.le.s32.totalorder 1, %s9
      %p112 = scmp.lt.s32.totalorder %s9, 3
      %p113 = pnand %p111, %p112
      %p114 = pneg %p113
      // Predicated region
      $region9: #{transfer_net_forward.6} parent=5 // pred_check
        _
      $region10: #{transfer_net_forward.6} parent=5 // pred_check_branch
        %116 = sbr.rel (%p113) target = $region12
      $region11: #{transfer_net_forward.6} parent=5 // pred_region
        %s117 = ssub.s32 %s9, 1
        // Predicated region
        $region13: #{transfer_net_forward.6} parent=11 // pred_check
          %p118 = pneg %p56
        $region14: #{transfer_net_forward.6} parent=11 // pred_check_branch
          %120 = sbr.rel (%p118) target = $region16
        $region15: #{transfer_net_forward.6} parent=11 // pred_region
          _
        $region16: #{transfer_net_forward.6} parent=11 // pred_fallthru
          _
        // Predicated region
        $region17: #{transfer_net_forward.6} parent=11 // pred_check
          %p121 = pneg %p77
        $region18: #{transfer_net_forward.6} parent=11 // pred_check_branch
          %123 = sbr.rel (%p121) target = $region20
        $region19: #{transfer_net_forward.6} parent=11 // pred_region
          _
        $region20: #{transfer_net_forward.6} parent=11 // pred_fallthru
          _
      $region12: #{transfer_net_forward.6} parent=5 // pred_fallthru
        _
      %p124 = scmp.lt.s32.totalorder %s9, 2
      // Predicated region
      $region21: #{transfer_net_forward.6} parent=5 // pred_check
        %p125 = pneg %p124
      $region22: #{transfer_net_forward.6} parent=5 // pred_check_branch
        %127 = sbr.rel (%p125) target = $region24
      $region23: #{transfer_net_forward.6} parent=5 // pred_region
        // Predicated region
        $region25: #{transfer_net_forward.6} parent=23 // pred_check
          %p128 = pneg %p29
        $region26: #{transfer_net_forward.6} parent=23 // pred_check_branch
          %130 = sbr.rel (%p128) target = $region28
        $region27: #{transfer_net_forward.6} parent=23 // pred_region
          %s131 = sand.u32 %s19, 1
          %s132 = sand.u32 %s19, 1
          %s133 = smul.addr %s132, 48
          %s134 = scalar_lea.vmem [#allocation2], %s133
          %s135 = smul.addr %s9, 3
          %s136 = smul.addr %s135, 4
          %s137 = scalar_lea.vmem %s0, %s136
          // Predicated region
          $region29: #{transfer_net_forward.6} parent=27 // pred_check
            _
          $region30: #{transfer_net_forward.6} parent=27 // pred_check_branch
            %139 = sbr.rel (0) target = $region32
          $region31: #{transfer_net_forward.6} parent=27 // pred_region
            // Predicated region
            $region33: #{transfer_net_forward.6} parent=31 // pred_check
              _
            $region34: #{transfer_net_forward.6} parent=31 // pred_check_branch
              %141 = sbr.rel (0) target = $region36
            $region35: #{transfer_net_forward.6} parent=31 // pred_region
              %s142 = scalar_lea.vmem %s137, 8
              %s143 = scalar_lea.vmem %s134, 8 [#allocation2]
              loop: start=0, step=1, limit=1
              $region37: #{transfer_net_forward.6} parent=35 // loop_pre_header
                _
              $region38: #{transfer_net_forward.6} parent=35 // loop_header
                %s145 = sphi 0, %s149
                %p146 = scmp.ge.s32.totalorder %s145, 1
                %s150 = sphi %s137, %s137
                %s151 = sphi %s134, %s134
              $region39: #{transfer_net_forward.6} parent=35 // loop_header_branch
                %148 = sbr.rel (%p146) target = $region43
              $region40: #{transfer_net_forward.6} parent=35 // loop_body
                %v152 = vld [vmem:[%s150] sm:$0xff]
                %153 = vst [vmem:[%s151] sm:$0xff] %v152
                %v154 = vld [vmem:[%s150 + $0x18] sm:$0xff]
                %155 = vst [vmem:[%s151 + $0xc] sm:$0xff] %v154
                %v156 = vld [vmem:[%s150 + $0x30] sm:$0xff]
                %157 = vst [vmem:[%s151 + $0x18] sm:$0xff] %v156
                %v158 = vld [vmem:[%s150 + $0x48] sm:$0xff]
                %159 = vst [vmem:[%s151 + $0x24] sm:$0xff] %v158
              $region41: #{transfer_net_forward.6} parent=35 // loop_footer
                %s149 = sadd.s32 1, %s145
              $region42: #{transfer_net_forward.6} parent=35 // loop_footer_branch
                %144 = sbr.rel target = $region38
              $region43: #{transfer_net_forward.6} parent=35 // loop_exit
                _
              loop: start=0, step=1, limit=1
              $region44: #{transfer_net_forward.6} parent=35 // loop_pre_header
                _
              $region45: #{transfer_net_forward.6} parent=35 // loop_header
                %s162 = sphi 0, %s166
                %p163 = scmp.ge.s32.totalorder %s162, 1
                %s167 = sphi %s142, %s142
                %s168 = sphi %s143, %s143
              $region46: #{transfer_net_forward.6} parent=35 // loop_header_branch
                %165 = sbr.rel (%p163) target = $region50
              $region47: #{transfer_net_forward.6} parent=35 // loop_body
                %v169 = vld [vmem:[%s167] sm:$0xf]
                %170 = vst [vmem:[%s168] sm:$0xf] %v169
                %v171 = vld [vmem:[%s167 + $0x18] sm:$0xf]
                %172 = vst [vmem:[%s168 + $0xc] sm:$0xf] %v171
                %v173 = vld [vmem:[%s167 + $0x30] sm:$0xf]
                %174 = vst [vmem:[%s168 + $0x18] sm:$0xf] %v173
                %v175 = vld [vmem:[%s167 + $0x48] sm:$0xf]
                %176 = vst [vmem:[%s168 + $0x24] sm:$0xf] %v175
              $region48: #{transfer_net_forward.6} parent=35 // loop_footer
                %s166 = sadd.s32 1, %s162
              $region49: #{transfer_net_forward.6} parent=35 // loop_footer_branch
                %161 = sbr.rel target = $region45
              $region50: #{transfer_net_forward.6} parent=35 // loop_exit
                _
            $region36: #{transfer_net_forward.6} parent=31 // pred_fallthru
              _
          $region32: #{transfer_net_forward.6} parent=27 // pred_fallthru
            _
          %177 = vnop
        $region28: #{transfer_net_forward.6} parent=23 // pred_fallthru
          _
      $region24: #{transfer_net_forward.6} parent=5 // pred_fallthru
        _
      %p178 = scmp.le.s32.totalorder 1, %s9
      %p179 = scmp.lt.s32.totalorder %s9, 3
      %p180 = pnand %p178, %p179
      %p181 = pneg %p180
      // Predicated region
      $region51: #{transfer_net_forward.6} parent=5 // pred_check
        _
      $region52: #{transfer_net_forward.6} parent=5 // pred_check_branch
        %183 = sbr.rel (%p180) target = $region54
      $region53: #{transfer_net_forward.6} parent=5 // pred_region
        %s184 = ssub.s32 %s9, 1
        %s185 = sand.u32 %s22, 1
        %s186 = sand.u32 %s22, 1
        %s187 = smul.addr %s186, 48
        %s188 = scalar_lea.vmem [#allocation2], %s187
        // Predicated region
        $region55: #{transfer_net_forward.6} parent=53 // pred_check
          %p189 = pneg %p35
        $region56: #{transfer_net_forward.6} parent=53 // pred_check_branch
          %191 = sbr.rel (%p189) target = $region58
        $region57: #{transfer_net_forward.6} parent=53 // pred_region
          _
        $region58: #{transfer_net_forward.6} parent=53 // pred_fallthru
          _
        %s192 = sand.u32 %s22, 1
        %s193 = sand.u32 %s22, 1
        %s194 = smul.addr %s193, 48
        %s195 = scalar_lea.vmem [#allocation2], %s194
        %p196 = pneg %p35
        %p197 = pneg %p32
        %p198 = pneg %p56
        %p199 = pneg %p53
        %p200 = pneg %p77
        %p201 = pneg %p74
        %p202 = pneg %p103
        %p203 = pneg %p100
        %p204 = scmp.lt.s32.totalorder %s14, 1
        %s205 = scalar_select %p204, %s14, 1
        %s206 = smul.addr %s205, 4
        %s207 = scalar_lea.vmem %s3, %s206
        %p208 = scmp.lt.s32.totalorder %s14, 1
        %s209 = scalar_select %p208, %s14, 1
        %s210 = smul.addr %s209, 4
        %s211 = scalar_lea.vmem %s3, %s210
        %v213 = vld [vmem:[%s188] sm:$0xff]
        %v214 = vld [vmem:[%s188 + $0x8] sm:$0xf]
        %v215 = vld [vmem:[%s188 + $0xc] sm:$0xff]
        %v216 = vld [vmem:[%s188 + $0x14] sm:$0xf]
        %v217 = vld [vmem:[%s188 + $0x18] sm:$0xff]
        %v218 = vld [vmem:[%s188 + $0x20] sm:$0xf]
        %v219 = vld [vmem:[%s188 + $0x24] sm:$0xff]
        %v220 = vld [vmem:[%s188 + $0x2c] sm:$0xf]
        %v221 = vld [vmem:[%s1] sm:$0xf]
        %v222 = vld [vmem:[%s1 + $0x4] sm:$0xf]
        %v223 = vld [vmem:[%s1 + $0x8] sm:$0xf]
        %v224 = vld [vmem:[%s1 + $0xc] sm:$0xf]
        %v225 = vld [vmem:[%s1 + $0x10] sm:$0xf]
        %v226 = vld [vmem:[%s1 + $0x14] sm:$0xf]
        %v227 = vld [vmem:[%s1 + $0x18] sm:$0xf]
        %v228 = vld [vmem:[%s1 + $0x1c] sm:$0xf]
        %v229 = vld [vmem:[%s1 + $0x20] sm:$0xf]
        %v230 = vld [vmem:[%s1 + $0x24] sm:$0xf]
        %v231 = vld [vmem:[%s1 + $0x28] sm:$0xf]
        %v232 = vld [vmem:[%s1 + $0x2c] sm:$0xf]
        %v233 = vld [vmem:[%s1 + $0x30] sm:$0xf]
        %v234 = vld [vmem:[%s1 + $0x34] sm:$0xf]
        %v235 = vld [vmem:[%s1 + $0x38] sm:$0xf]
        %v236 = vld [vmem:[%s1 + $0x3c] sm:$0xf]
        %v237 = vld [vmem:[%s1 + $0x40] sm:$0xf]
        %v238 = vld [vmem:[%s1 + $0x44] sm:$0xf]
        %v239 = vld [vmem:[%s1 + $0x48] sm:$0xf]
        %v240 = vld [vmem:[%s1 + $0x4c] sm:$0xf]
        %v241 = vld [vmem:[%s1 + $0x50] sm:$0xf]
        %v242 = vld [vmem:[%s1 + $0x54] sm:$0xf]
        %v243 = vld [vmem:[%s1 + $0x58] sm:$0xf]
        %v244 = vld [vmem:[%s1 + $0x5c] sm:$0xf]
        %v245 = vld [vmem:[%s1 + $0x60] sm:$0xf]
        %v246 = vld [vmem:[%s1 + $0x64] sm:$0xf]
        %v247 = vld [vmem:[%s1 + $0x68] sm:$0xf]
        %v248 = vld [vmem:[%s1 + $0x6c] sm:$0xf]
        %v249 = vld [vmem:[%s1 + $0x70] sm:$0xf]
        %v250 = vld [vmem:[%s1 + $0x74] sm:$0xf]
        %v251 = vld [vmem:[%s1 + $0x78] sm:$0xf]
        %v252 = vld [vmem:[%s1 + $0x7c] sm:$0xf]
        %v253 = vld [vmem:[%s1 + $0x80] sm:$0xf]
        %v254 = vld [vmem:[%s1 + $0x84] sm:$0xf]
        %v255 = vld [vmem:[%s1 + $0x88] sm:$0xf]
        %v256 = vld [vmem:[%s1 + $0x8c] sm:$0xf]
        %v257 = vld [vmem:[%s1 + $0x90] sm:$0xf]
        %v258 = vld [vmem:[%s1 + $0x94] sm:$0xf]
        %v259 = vld [vmem:[%s1 + $0x98] sm:$0xf]
        %v260 = vld [vmem:[%s1 + $0x9c] sm:$0xf]
        %v261 = vld [vmem:[%s1 + $0xa0] sm:$0xf]
        %v262 = vld [vmem:[%s1 + $0xa4] sm:$0xf]
        %v263 = vld [vmem:[%s1 + $0xa8] sm:$0xf]
        %v264 = vld [vmem:[%s1 + $0xac] sm:$0xf]
        %v265 = vld [vmem:[%s1 + $0xb0] sm:$0xf]
        %v266 = vld [vmem:[%s1 + $0xb4] sm:$0xf]
        %v267 = vld [vmem:[%s1 + $0xb8] sm:$0xf]
        %v268 = vld [vmem:[%s1 + $0xbc] sm:$0xf]
        %v277 = vunpack.c.l.b16 %v213
        %v278 = vunpack.c.h.b16 %v213
        %v279 = vunpack.c.l.b16 %v214
        %v280 = vunpack.c.l.b16 %v215
        %v281 = vunpack.c.h.b16 %v215
        %v282 = vunpack.c.l.b16 %v216
        %v283 = vunpack.c.l.b16 %v217
        %v284 = vunpack.c.h.b16 %v217
        %v285 = vunpack.c.l.b16 %v218
        %v286 = vunpack.c.l.b16 %v219
        %v287 = vunpack.c.h.b16 %v219
        %v288 = vunpack.c.l.b16 %v220
        %v289 = vpack.c.b16 %v280, %v277
        %v290 = vpack.c.b16 %v281, %v278
        %v291 = vpack.c.b16 %v282, %v279
        %v292 = vpack.c.b16 %v286, %v283
        %v293 = vpack.c.b16 %v287, %v284
        %v294 = vpack.c.b16 %v288, %v285
        %v349 = vunpack.c.l.b16 %v221
        %v350 = vunpack.c.l.b16 %v222
        %v351 = vunpack.c.l.b16 %v223
        %v352 = vunpack.c.l.b16 %v224
        %v353 = vunpack.c.l.b16 %v225
        %v354 = vunpack.c.l.b16 %v226
        %v355 = vunpack.c.l.b16 %v227
        %v356 = vunpack.c.l.b16 %v228
        %v357 = vunpack.c.l.b16 %v229
        %v358 = vunpack.c.l.b16 %v230
        %v359 = vunpack.c.l.b16 %v231
        %v360 = vunpack.c.l.b16 %v232
        %v361 = vunpack.c.l.b16 %v233
        %v362 = vunpack.c.l.b16 %v234
        %v363 = vunpack.c.l.b16 %v235
        %v364 = vunpack.c.l.b16 %v236
        %v365 = vunpack.c.l.b16 %v237
        %v366 = vunpack.c.l.b16 %v238
        %v367 = vunpack.c.l.b16 %v239
        %v368 = vunpack.c.l.b16 %v240
        %v369 = vunpack.c.l.b16 %v241
        %v370 = vunpack.c.l.b16 %v242
        %v371 = vunpack.c.l.b16 %v243
        %v372 = vunpack.c.l.b16 %v244
        %v373 = vunpack.c.l.b16 %v245
        %v374 = vunpack.c.l.b16 %v246
        %v375 = vunpack.c.l.b16 %v247
        %v376 = vunpack.c.l.b16 %v248
        %v377 = vunpack.c.l.b16 %v249
        %v378 = vunpack.c.l.b16 %v250
        %v379 = vunpack.c.l.b16 %v251
        %v380 = vunpack.c.l.b16 %v252
        %v381 = vunpack.c.l.b16 %v253
        %v382 = vunpack.c.l.b16 %v254
        %v383 = vunpack.c.l.b16 %v255
        %v384 = vunpack.c.l.b16 %v256
        %v385 = vunpack.c.l.b16 %v257
        %v386 = vunpack.c.l.b16 %v258
        %v387 = vunpack.c.l.b16 %v259
        %v388 = vunpack.c.l.b16 %v260
        %v389 = vunpack.c.l.b16 %v261
        %v390 = vunpack.c.l.b16 %v262
        %v391 = vunpack.c.l.b16 %v263
        %v392 = vunpack.c.l.b16 %v264
        %v393 = vunpack.c.l.b16 %v265
        %v394 = vunpack.c.l.b16 %v266
        %v395 = vunpack.c.l.b16 %v267
        %v396 = vunpack.c.l.b16 %v268
        %v397 = vpack.c.b16 %v350, %v349
        %v398 = vpack.c.b16 %v352, %v351
        %v399 = vpack.c.b16 %v354, %v353
        %v400 = vpack.c.b16 %v356, %v355
        %v401 = vpack.c.b16 %v358, %v357
        %v402 = vpack.c.b16 %v360, %v359
        %v403 = vpack.c.b16 %v362, %v361
        %v404 = vpack.c.b16 %v364, %v363
        %v405 = vpack.c.b16 %v366, %v365
        %v406 = vpack.c.b16 %v368, %v367
        %v407 = vpack.c.b16 %v370, %v369
        %v408 = vpack.c.b16 %v372, %v371
        %v409 = vpack.c.b16 %v374, %v373
        %v410 = vpack.c.b16 %v376, %v375
        %v411 = vpack.c.b16 %v378, %v377
        %v412 = vpack.c.b16 %v380, %v379
        %v413 = vpack.c.b16 %v382, %v381
        %v414 = vpack.c.b16 %v384, %v383
        %v415 = vpack.c.b16 %v386, %v385
        %v416 = vpack.c.b16 %v388, %v387
        %v417 = vpack.c.b16 %v390, %v389
        %v418 = vpack.c.b16 %v392, %v391
        %v419 = vpack.c.b16 %v394, %v393
        %v420 = vpack.c.b16 %v396, %v395
        %445 = vmatprep.subr.bf16.mxu0 0
        %446 = vmatpush1.bf16.msra.mxu0 %v397
        %447 = vmatprep.subr.bf16.mxu0 0
        %448 = vmatpush1.bf16.msra.mxu0 %v398
        %449 = vmatprep.subr.bf16.mxu0 0
        %450 = vmatpush1.bf16.msra.mxu0 %v399
        %451 = vmatprep.subr.bf16.mxu0 0
        %452 = vmatpush1.bf16.msra.mxu0 %v400
        %453 = vmatprep.subr.bf16.mxu0 0
        %454 = vmatpush1.bf16.msra.mxu0 %v401
        %455 = vmatprep.subr.bf16.mxu0 0
        %456 = vmatpush1.bf16.msra.mxu0 %v402
        %457 = vmatprep.subr.bf16.mxu0 0
        %458 = vmatpush1.bf16.msra.mxu0 %v403
        %459 = vmatprep.subr.bf16.mxu0 0
        %460 = vmatpush1.bf16.msra.mxu0 %v404
        %461 = vmatprep.subr.bf16.mxu0 0
        %462 = vmatpush1.bf16.msra.mxu0 %v405
        %463 = vmatprep.subr.bf16.mxu0 0
        %464 = vmatpush1.bf16.msra.mxu0 %v406
        %465 = vmatprep.subr.bf16.mxu0 0
        %466 = vmatpush1.bf16.msra.mxu0 %v407
        %467 = vmatprep.subr.bf16.mxu0 0
        %468 = vmatpush1.bf16.msra.mxu0 %v408
        %469 = vmatprep.subr.bf16.mxu0 0
        %470 = vmatpush1.bf16.msra.mxu0 %v409
        %471 = vmatprep.subr.bf16.mxu0 0
        %472 = vmatpush1.bf16.msra.mxu0 %v410
        %473 = vmatprep.subr.bf16.mxu0 0
        %474 = vmatpush1.bf16.msra.mxu0 %v411
        %475 = vmatprep.subr.bf16.mxu0 0
        %476 = vmatpush1.bf16.msra.mxu0 %v412
        %477 = vmatprep.mubr.bf16.mxu0 %v290
        %478 = vmatmul.mubr.bf16.gmra.mrb[0].mxu0 %v289
        %v479 = vpop.f32.mrb[0].mxu0
        %v480 = vadd.f32 0.0, %v479
        %v481 = vpop.f32.mrb[0].mxu0
        %v482 = vpop.f32.mrb[0].mxu0
        %v483 = vadd.f32 0.0, %v482
        %v484 = vpop.f32.mrb[0].mxu0
        %485 = vmatprep.mubr.bf16.mxu0 %v293
        %486 = vmatmul.mubr.bf16.gmra.mrb[0].mxu0 %v292
        %v487 = vpop.f32.mrb[0].mxu0
        %v488 = vadd.f32 0.0, %v487
        %v489 = vpop.f32.mrb[0].mxu0
        %v490 = vpop.f32.mrb[0].mxu0
        %v491 = vadd.f32 0.0, %v490
        %v492 = vpop.f32.mrb[0].mxu0
        %493 = vdwg.mxu0
        %494 = vmatprep.subr.bf16.mxu0 0
        %495 = vmatpush1.bf16.msra.mxu0 %v413
        %496 = vmatprep.subr.bf16.mxu0 0
        %497 = vmatpush1.bf16.msra.mxu0 %v414
        %498 = vmatprep.subr.bf16.mxu0 0
        %499 = vmatpush1.bf16.msra.mxu0 %v415
        %500 = vmatprep.subr.bf16.mxu0 0
        %501 = vmatpush1.bf16.msra.mxu0 %v416
        %502 = vmatprep.subr.bf16.mxu0 0
        %503 = vmatpush1.bf16.msra.mxu0 %v417
        %504 = vmatprep.subr.bf16.mxu0 0
        %505 = vmatpush1.bf16.msra.mxu0 %v418
        %506 = vmatprep.subr.bf16.mxu0 0
        %507 = vmatpush1.bf16.msra.mxu0 %v419
        %508 = vmatprep.subr.bf16.mxu0 0
        %509 = vmatpush1.bf16.msra.mxu0 %v420
        %510 = vmatprep.subr.bf16.mxu0 0
        %511 = vmatpush1.bf16.msra.mxu0 0
        %512 = vmatprep.subr.bf16.mxu0 0
        %513 = vmatpush1.bf16.msra.mxu0 0
        %514 = vmatprep.subr.bf16.mxu0 0
        %515 = vmatpush1.bf16.msra.mxu0 0
        %516 = vmatprep.subr.bf16.mxu0 0
        %517 = vmatpush1.bf16.msra.mxu0 0
        %518 = vmatprep.subr.bf16.mxu0 0
        %519 = vmatpush1.bf16.msra.mxu0 0
        %520 = vmatprep.subr.bf16.mxu0 0
        %521 = vmatpush1.bf16.msra.mxu0 0
        %522 = vmatprep.subr.bf16.mxu0 0
        %523 = vmatpush1.bf16.msra.mxu0 0
        %524 = vmatprep.subr.bf16.mxu0 0
        %525 = vmatpush1.bf16.msra.mxu0 0
        %526 = vmatprep.mubr.bf16.mxu0 0
        %527 = vmatmul.mubr.bf16.gmra.mrb[0].mxu0 %v291
        %v528 = vpop.f32.mrb[0].mxu0
        %v529 = vadd.f32 %v480, %v528
        %v530 = vpop.f32.mrb[0].mxu0
        %v531 = vpop.f32.mrb[0].mxu0
        %v532 = vadd.f32 %v483, %v531
        %v533 = vpop.f32.mrb[0].mxu0
        %534 = vmatprep.mubr.bf16.mxu0 0
        %535 = vmatmul.mubr.bf16.gmra.mrb[0].mxu0 %v294
        %v536 = vpop.f32.mrb[0].mxu0
        %v537 = vadd.f32 %v488, %v536
        %v538 = vpop.f32.mrb[0].mxu0
        %v539 = vpop.f32.mrb[0].mxu0
        %v540 = vadd.f32 %v491, %v539
        %v541 = vpop.f32.mrb[0].mxu0
        %542 = vdwg.mxu0
        %v543 = vmax.f32 %v529, %v532
        %v544 = vmax.f32 %v537, %v540
        %v545 = vmax.f32 %v543, %v544
        %v546 = vld [vmem:[%s2] sm:$0x1]
        %v548 = vlaneseq
        %v549 = vshrl.u32 %v548, 7
        %v550 = vsub.s32 0, %v549
        %v551 = vrot.slane %v546, %v550
        %v553 = vadd.f32 %v545, %v551
        %v554 = vmax.f32 %v553, 0.0
        %v555 = vpack.c.bf16 %v554, %v554
        %556 = vst [vmem:[%s211] sm:$0xf] %v555
        %p557 = scmp.lt.s32.totalorder %s14, 1
        %s558 = scalar_select %p557, %s14, 1
        %s559 = smul.addr %s558, 4
        %s560 = scalar_lea.vmem %s3, %s559
        // Predicated region
        $region59: #{transfer_net_forward.6} parent=53 // pred_check
          %p561 = pneg %p100
        $region60: #{transfer_net_forward.6} parent=53 // pred_check_branch
          %563 = sbr.rel (%p561) target = $region62
        $region61: #{transfer_net_forward.6} parent=53 // pred_region
          _
        $region62: #{transfer_net_forward.6} parent=53 // pred_fallthru
          _
      $region54: #{transfer_net_forward.6} parent=5 // pred_fallthru
        _
      %p564 = scmp.le.s32.totalorder 2, %s9
      // Predicated region
      $region63: #{transfer_net_forward.6} parent=5 // pred_check
        %p565 = pneg %p564
      $region64: #{transfer_net_forward.6} parent=5 // pred_check_branch
        %567 = sbr.rel (%p565) target = $region66
      $region65: #{transfer_net_forward.6} parent=5 // pred_region
        %s568 = ssub.s32 %s9, 2
        // Predicated region
        $region67: #{transfer_net_forward.6} parent=65 // pred_check
          %p569 = pneg %p106
        $region68: #{transfer_net_forward.6} parent=65 // pred_check_branch
          %571 = sbr.rel (%p569) target = $region70
        $region69: #{transfer_net_forward.6} parent=65 // pred_region
          %p572 = scmp.lt.s32.totalorder %s15, 1
          %s573 = scalar_select %p572, %s15, 1
          %s574 = smul.addr %s573, 4
          %s575 = scalar_lea.vmem %s3, %s574
        $region70: #{transfer_net_forward.6} parent=65 // pred_fallthru
          _
      $region66: #{transfer_net_forward.6} parent=5 // pred_fallthru
        _
    $region6: #{transfer_net_forward.6} parent=1 // loop_footer
      %s13 = sadd.s32 1, %s9
    $region7: #{transfer_net_forward.6} parent=1 // loop_footer_branch
      %8 = sbr.rel target = $region3
    $region8: #{transfer_net_forward.6} parent=1 // loop_exit
      _

// kernel: transfer_net_forward.7
$region0: #{transfer_net_forward.7}
  #allocation0 [shape = 'u32[]', space=smem, size = 0x4, offset = 0x4, fixed_abs, tag = 'smem constant byte address 0x4 - core index']
  #allocation1 [shape = 'u32[144,128]{1,0:T(1,128)}', space=vmem, size = 0x12000, scoped, tag = 'internal scratch']
  %s0 = inlined_call_operand.vmem [shape: bf16[4,4,384], index: 0, kind: input, shape index: {}]
  %s1 = inlined_call_operand.vmem [shape: bf16[384,128], index: 1, kind: input, shape index: {}]
  %s2 = inlined_call_operand.vmem [shape: f32[1,128], index: 2, kind: input, shape index: {}]
  %s3 = inlined_call_operand.vmem [shape: f32[128,128], index: 3, kind: input, shape index: {}]
  %s4 = inlined_call_operand.vmem [shape: f32[1,128], index: 4, kind: input, shape index: {}]
  %s5 = inlined_call_operand.vmem [shape: f32[2,128], index: 5, kind: input, shape index: {}]
  %s6 = inlined_call_operand.hbm [shape: f32[1,1], index: 6, kind: output, shape index: {0}]
  %s7 = inlined_call_operand.hbm [shape: f32[1,1], index: 7, kind: output, shape index: {1}]
  %8 = xla_tuple %s6, %s7
  %s9 = sld [smem:[#allocation0]]
  $region42: #{transfer_net_forward.7} parent=0
    _
  %s11 = ssub.s32 1, %s9
  %s12 = scalar_select 0, %s11, %s9
  $region1: #{transfer_net_forward.7} parent=0
    #allocation2 [shape = 'u8[512]{0}', space=vmem, size = 0x400, scoped, tag = 'output window, operand 0, single buffered']
    #allocation3 [shape = 's32[1]{0}', space=sflag, size = 0x4, scoped, tag = 'scoped memory for transfer_net_forward.7']
    #allocation4 [shape = 'u8[512]{0}', space=vmem, size = 0x400, scoped, tag = 'output window, operand 1, single buffered']
    #allocation5 [shape = 's32[1]{0}', space=sflag, size = 0x4, scoped, tag = 'scoped memory for transfer_net_forward.7']
    %13 = vsyncpa [#allocation3], 0
    %14 = vsyncpa [#allocation5], 0
    // Predicated region
    $region2: #{transfer_net_forward.7} parent=1 // pred_check
      _
    $region3: #{transfer_net_forward.7} parent=1 // pred_check_branch
      %16 = sbr.rel (0) target = $region5
    $region4: #{transfer_net_forward.7} parent=1 // pred_region
      _
    $region5: #{transfer_net_forward.7} parent=1 // pred_fallthru
      _
    // Predicated region
    $region6: #{transfer_net_forward.7} parent=1 // pred_check
      _
    $region7: #{transfer_net_forward.7} parent=1 // pred_check_branch
      %18 = sbr.rel (0) target = $region9
    $region8: #{transfer_net_forward.7} parent=1 // pred_region
      _
    $region9: #{transfer_net_forward.7} parent=1 // pred_fallthru
      _
    // Predicated region
    $region10: #{transfer_net_forward.7} parent=1 // pred_check
      _
    $region11: #{transfer_net_forward.7} parent=1 // pred_check_branch
      %20 = sbr.rel (0) target = $region13
    $region12: #{transfer_net_forward.7} parent=1 // pred_region
      _
    $region13: #{transfer_net_forward.7} parent=1 // pred_fallthru
      _
    // Predicated region
    $region14: #{transfer_net_forward.7} parent=1 // pred_check
      _
    $region15: #{transfer_net_forward.7} parent=1 // pred_check_branch
      %22 = sbr.rel (0) target = $region17
    $region16: #{transfer_net_forward.7} parent=1 // pred_region
      _
    $region17: #{transfer_net_forward.7} parent=1 // pred_fallthru
      _
    // Predicated region
    $region18: #{transfer_net_forward.7} parent=1 // pred_check
      _
    $region19: #{transfer_net_forward.7} parent=1 // pred_check_branch
      %24 = sbr.rel (0) target = $region21
    $region20: #{transfer_net_forward.7} parent=1 // pred_region
      _
    $region21: #{transfer_net_forward.7} parent=1 // pred_fallthru
      _
    // Predicated region
    $region22: #{transfer_net_forward.7} parent=1 // pred_check
      _
    $region23: #{transfer_net_forward.7} parent=1 // pred_check_branch
      %26 = sbr.rel (0) target = $region25
    $region24: #{transfer_net_forward.7} parent=1 // pred_region
      _
    $region25: #{transfer_net_forward.7} parent=1 // pred_fallthru
      _
    %v28 = vld [vmem:[%s1] sm:$0xf]
    %v29 = vld [vmem:[%s1 + $0x4] sm:$0xf]
    %v30 = vld [vmem:[%s1 + $0x8] sm:$0xf]
    %v31 = vld [vmem:[%s1 + $0xc] sm:$0xf]
    %v32 = vld [vmem:[%s1 + $0x10] sm:$0xf]
    %v33 = vld [vmem:[%s1 + $0x14] sm:$0xf]
    %v34 = vld [vmem:[%s1 + $0x18] sm:$0xf]
    %v35 = vld [vmem:[%s1 + $0x1c] sm:$0xf]
    %v36 = vld [vmem:[%s1 + $0x20] sm:$0xf]
    %v37 = vld [vmem:[%s1 + $0x24] sm:$0xf]
    %v38 = vld [vmem:[%s1 + $0x28] sm:$0xf]
    %v39 = vld [vmem:[%s1 + $0x2c] sm:$0xf]
    %v40 = vld [vmem:[%s1 + $0x30] sm:$0xf]
    %v41 = vld [vmem:[%s1 + $0x34] sm:$0xf]
    %v42 = vld [vmem:[%s1 + $0x38] sm:$0xf]
    %v43 = vld [vmem:[%s1 + $0x3c] sm:$0xf]
    %v44 = vld [vmem:[%s1 + $0x40] sm:$0xf]
    %v45 = vld [vmem:[%s1 + $0x44] sm:$0xf]
    %v46 = vld [vmem:[%s1 + $0x48] sm:$0xf]
    %v47 = vld [vmem:[%s1 + $0x4c] sm:$0xf]
    %v48 = vld [vmem:[%s1 + $0x50] sm:$0xf]
    %v49 = vld [vmem:[%s1 + $0x54] sm:$0xf]
    %v50 = vld [vmem:[%s1 + $0x58] sm:$0xf]
    %v51 = vld [vmem:[%s1 + $0x5c] sm:$0xf]
    %v52 = vld [vmem:[%s1 + $0x60] sm:$0xf]
    %v53 = vld [vmem:[%s1 + $0x64] sm:$0xf]
    %v54 = vld [vmem:[%s1 + $0x68] sm:$0xf]
    %v55 = vld [vmem:[%s1 + $0x6c] sm:$0xf]
    %v56 = vld [vmem:[%s1 + $0x70] sm:$0xf]
    %v57 = vld [vmem:[%s1 + $0x74] sm:$0xf]
    %v58 = vld [vmem:[%s1 + $0x78] sm:$0xf]
    %v59 = vld [vmem:[%s1 + $0x7c] sm:$0xf]
    %v60 = vld [vmem:[%s1 + $0x80] sm:$0xf]
    %v61 = vld [vmem:[%s1 + $0x84] sm:$0xf]
    %v62 = vld [vmem:[%s1 + $0x88] sm:$0xf]
    %v63 = vld [vmem:[%s1 + $0x8c] sm:$0xf]
    %v64 = vld [vmem:[%s1 + $0x90] sm:$0xf]
    %v65 = vld [vmem:[%s1 + $0x94] sm:$0xf]
    %v66 = vld [vmem:[%s1 + $0x98] sm:$0xf]
    %v67 = vld [vmem:[%s1 + $0x9c] sm:$0xf]
    %v68 = vld [vmem:[%s1 + $0xa0] sm:$0xf]
    %v69 = vld [vmem:[%s1 + $0xa4] sm:$0xf]
    %v70 = vld [vmem:[%s1 + $0xa8] sm:$0xf]
    %v71 = vld [vmem:[%s1 + $0xac] sm:$0xf]
    %v72 = vld [vmem:[%s1 + $0xb0] sm:$0xf]
    %v73 = vld [vmem:[%s1 + $0xb4] sm:$0xf]
    %v74 = vld [vmem:[%s1 + $0xb8] sm:$0xf]
    %v75 = vld [vmem:[%s1 + $0xbc] sm:$0xf]
    %v76 = vld [vmem:[%s0] sm:$0x3f]
    %v78 = vcombine.high %v76, %v76
    %v80 = vunpack.c.l.s4 1983009808
    %v81 = vunpack.c.0.s8 %v80
    %v82 = vlaneseq
    %v83 = vshrl.u32 %v82, 7
    %v84 = vsub.s32 %v81, %v83
    %v85 = vrot.slane %v76, %v84
    %v87 = vunpack.c.l.s4 1983009808
    %v88 = vunpack.c.0.s8 %v87
    %v89 = vlaneseq
    %v90 = vshrl.u32 %v89, 7
    %v91 = vsub.s32 %v88, %v90
    %v92 = vrot.slane %v78, %v91
    %v93 = vcombine.high %v85, %v85
    %v145 = vunpack.c.l.b16 %v28
    %v146 = vunpack.c.l.b16 %v29
    %v147 = vunpack.c.l.b16 %v30
    %v148 = vunpack.c.l.b16 %v31
    %v149 = vunpack.c.l.b16 %v32
    %v150 = vunpack.c.l.b16 %v33
    %v151 = vunpack.c.l.b16 %v34
    %v152 = vunpack.c.l.b16 %v35
    %v153 = vunpack.c.l.b16 %v36
    %v154 = vunpack.c.l.b16 %v37
    %v155 = vunpack.c.l.b16 %v38
    %v156 = vunpack.c.l.b16 %v39
    %v157 = vunpack.c.l.b16 %v40
    %v158 = vunpack.c.l.b16 %v41
    %v159 = vunpack.c.l.b16 %v42
    %v160 = vunpack.c.l.b16 %v43
    %v161 = vunpack.c.l.b16 %v44
    %v162 = vunpack.c.l.b16 %v45
    %v163 = vunpack.c.l.b16 %v46
    %v164 = vunpack.c.l.b16 %v47
    %v165 = vunpack.c.l.b16 %v48
    %v166 = vunpack.c.l.b16 %v49
    %v167 = vunpack.c.l.b16 %v50
    %v168 = vunpack.c.l.b16 %v51
    %v169 = vunpack.c.l.b16 %v52
    %v170 = vunpack.c.l.b16 %v53
    %v171 = vunpack.c.l.b16 %v54
    %v172 = vunpack.c.l.b16 %v55
    %v173 = vunpack.c.l.b16 %v56
    %v174 = vunpack.c.l.b16 %v57
    %v175 = vunpack.c.l.b16 %v58
    %v176 = vunpack.c.l.b16 %v59
    %v177 = vunpack.c.l.b16 %v60
    %v178 = vunpack.c.l.b16 %v61
    %v179 = vunpack.c.l.b16 %v62
    %v180 = vunpack.c.l.b16 %v63
    %v181 = vunpack.c.l.b16 %v64
    %v182 = vunpack.c.l.b16 %v65
    %v183 = vunpack.c.l.b16 %v66
    %v184 = vunpack.c.l.b16 %v67
    %v185 = vunpack.c.l.b16 %v68
    %v186 = vunpack.c.l.b16 %v69
    %v187 = vunpack.c.l.b16 %v70
    %v188 = vunpack.c.l.b16 %v71
    %v189 = vunpack.c.l.b16 %v72
    %v190 = vunpack.c.l.b16 %v73
    %v191 = vunpack.c.l.b16 %v74
    %v192 = vunpack.c.l.b16 %v75
    %v193 = vpack.c.b16 %v146, %v145
    %v194 = vpack.c.b16 %v148, %v147
    %v195 = vpack.c.b16 %v150, %v149
    %v196 = vpack.c.b16 %v152, %v151
    %v197 = vpack.c.b16 %v154, %v153
    %v198 = vpack.c.b16 %v156, %v155
    %v199 = vpack.c.b16 %v158, %v157
    %v200 = vpack.c.b16 %v160, %v159
    %v201 = vpack.c.b16 %v162, %v161
    %v202 = vpack.c.b16 %v164, %v163
    %v203 = vpack.c.b16 %v166, %v165
    %v204 = vpack.c.b16 %v168, %v167
    %v205 = vpack.c.b16 %v170, %v169
    %v206 = vpack.c.b16 %v172, %v171
    %v207 = vpack.c.b16 %v174, %v173
    %v208 = vpack.c.b16 %v176, %v175
    %v209 = vpack.c.b16 %v178, %v177
    %v210 = vpack.c.b16 %v180, %v179
    %v211 = vpack.c.b16 %v182, %v181
    %v212 = vpack.c.b16 %v184, %v183
    %v213 = vpack.c.b16 %v186, %v185
    %v214 = vpack.c.b16 %v188, %v187
    %v215 = vpack.c.b16 %v190, %v189
    %v216 = vpack.c.b16 %v192, %v191
    %241 = vmatprep.subr.bf16.mxu0 0
    %242 = vmatpush1.bf16.msra.mxu0 %v193
    %243 = vmatprep.subr.bf16.mxu0 0
    %244 = vmatpush1.bf16.msra.mxu0 %v194
    %245 = vmatprep.subr.bf16.mxu0 0
    %246 = vmatpush1.bf16.msra.mxu0 %v195
    %247 = vmatprep.subr.bf16.mxu0 0
    %248 = vmatpush1.bf16.msra.mxu0 %v196
    %249 = vmatprep.subr.bf16.mxu0 0
    %250 = vmatpush1.bf16.msra.mxu0 %v197
    %251 = vmatprep.subr.bf16.mxu0 0
    %252 = vmatpush1.bf16.msra.mxu0 %v198
    %253 = vmatprep.subr.bf16.mxu0 0
    %254 = vmatpush1.bf16.msra.mxu0 %v199
    %255 = vmatprep.subr.bf16.mxu0 0
    %256 = vmatpush1.bf16.msra.mxu0 %v200
    %257 = vmatprep.subr.bf16.mxu0 0
    %258 = vmatpush1.bf16.msra.mxu0 %v201
    %259 = vmatprep.subr.bf16.mxu0 0
    %260 = vmatpush1.bf16.msra.mxu0 %v202
    %261 = vmatprep.subr.bf16.mxu0 0
    %262 = vmatpush1.bf16.msra.mxu0 %v203
    %263 = vmatprep.subr.bf16.mxu0 0
    %264 = vmatpush1.bf16.msra.mxu0 %v204
    %265 = vmatprep.subr.bf16.mxu0 0
    %266 = vmatpush1.bf16.msra.mxu0 %v205
    %267 = vmatprep.subr.bf16.mxu0 0
    %268 = vmatpush1.bf16.msra.mxu0 %v206
    %269 = vmatprep.subr.bf16.mxu0 0
    %270 = vmatpush1.bf16.msra.mxu0 %v207
    %271 = vmatprep.subr.bf16.mxu0 0
    %272 = vmatpush1.bf16.msra.mxu0 %v208
    %273 = vmatprep.mubr.bf16.mxu0 %v93
    %274 = vmatmul.mubr.bf16.gmra.mrb[0].mxu0 %v85
    %v275 = vpop.f32.mrb[0].mxu0
    %v276 = vadd.f32 0.0, %v275
    %v277 = vpop.f32.mrb[0].mxu0
    %v278 = vpop.f32.mrb[0].mxu0
    %v279 = vpop.f32.mrb[0].mxu0
    %280 = vdwg.mxu0
    %281 = vmatprep.subr.bf16.mxu0 0
    %282 = vmatpush1.bf16.msra.mxu0 %v209
    %283 = vmatprep.subr.bf16.mxu0 0
    %284 = vmatpush1.bf16.msra.mxu0 %v210
    %285 = vmatprep.subr.bf16.mxu0 0
    %286 = vmatpush1.bf16.msra.mxu0 %v211
    %287 = vmatprep.subr.bf16.mxu0 0
    %288 = vmatpush1.bf16.msra.mxu0 %v212
    %289 = vmatprep.subr.bf16.mxu0 0
    %290 = vmatpush1.bf16.msra.mxu0 %v213
    %291 = vmatprep.subr.bf16.mxu0 0
    %292 = vmatpush1.bf16.msra.mxu0 %v214
    %293 = vmatprep.subr.bf16.mxu0 0
    %294 = vmatpush1.bf16.msra.mxu0 %v215
    %295 = vmatprep.subr.bf16.mxu0 0
    %296 = vmatpush1.bf16.msra.mxu0 %v216
    %297 = vmatprep.subr.bf16.mxu0 0
    %298 = vmatpush1.bf16.msra.mxu0 0
    %299 = vmatprep.subr.bf16.mxu0 0
    %300 = vmatpush1.bf16.msra.mxu0 0
    %301 = vmatprep.subr.bf16.mxu0 0
    %302 = vmatpush1.bf16.msra.mxu0 0
    %303 = vmatprep.subr.bf16.mxu0 0
    %304 = vmatpush1.bf16.msra.mxu0 0
    %305 = vmatprep.subr.bf16.mxu0 0
    %306 = vmatpush1.bf16.msra.mxu0 0
    %307 = vmatprep.subr.bf16.mxu0 0
    %308 = vmatpush1.bf16.msra.mxu0 0
    %309 = vmatprep.subr.bf16.mxu0 0
    %310 = vmatpush1.bf16.msra.mxu0 0
    %311 = vmatprep.subr.bf16.mxu0 0
    %312 = vmatpush1.bf16.msra.mxu0 0
    %313 = vmatprep.mubr.bf16.mxu0 0
    %314 = vmatmul.mubr.bf16.gmra.mrb[0].mxu0 %v92
    %v315 = vpop.f32.mrb[0].mxu0
    %v316 = vadd.f32 %v276, %v315
    %v317 = vpop.f32.mrb[0].mxu0
    %v318 = vpop.f32.mrb[0].mxu0
    %v319 = vpop.f32.mrb[0].mxu0
    %320 = vdwg.mxu0
    %s321 = scalar_lea.vmem %s0, 6
    %v322 = vld [vmem:[%s321] sm:$0x3f]
    %v324 = vcombine.high %v322, %v322
    %v326 = vunpack.c.l.s4 1983009808
    %v327 = vunpack.c.0.s8 %v326
    %v328 = vlaneseq
    %v329 = vshrl.u32 %v328, 7
    %v330 = vsub.s32 %v327, %v329
    %v331 = vrot.slane %v322, %v330
    %v333 = vunpack.c.l.s4 1983009808
    %v334 = vunpack.c.0.s8 %v333
    %v335 = vlaneseq
    %v336 = vshrl.u32 %v335, 7
    %v337 = vsub.s32 %v334, %v336
    %v338 = vrot.slane %v324, %v337
    %v339 = vcombine.high %v331, %v331
    %343 = vmatprep.subr.bf16.mxu0 0
    %344 = vmatpush1.bf16.msra.mxu0 %v193
    %345 = vmatprep.subr.bf16.mxu0 0
    %346 = vmatpush1.bf16.msra.mxu0 %v194
    %347 = vmatprep.subr.bf16.mxu0 0
    %348 = vmatpush1.bf16.msra.mxu0 %v195
    %349 = vmatprep.subr.bf16.mxu0 0
    %350 = vmatpush1.bf16.msra.mxu0 %v196
    %351 = vmatprep.subr.bf16.mxu0 0
    %352 = vmatpush1.bf16.msra.mxu0 %v197
    %353 = vmatprep.subr.bf16.mxu0 0
    %354 = vmatpush1.bf16.msra.mxu0 %v198
    %355 = vmatprep.subr.bf16.mxu0 0
    %356 = vmatpush1.bf16.msra.mxu0 %v199
    %357 = vmatprep.subr.bf16.mxu0 0
    %358 = vmatpush1.bf16.msra.mxu0 %v200
    %359 = vmatprep.subr.bf16.mxu0 0
    %360 = vmatpush1.bf16.msra.mxu0 %v201
    %361 = vmatprep.subr.bf16.mxu0 0
    %362 = vmatpush1.bf16.msra.mxu0 %v202
    %363 = vmatprep.subr.bf16.mxu0 0
    %364 = vmatpush1.bf16.msra.mxu0 %v203
    %365 = vmatprep.subr.bf16.mxu0 0
    %366 = vmatpush1.bf16.msra.mxu0 %v204
    %367 = vmatprep.subr.bf16.mxu0 0
    %368 = vmatpush1.bf16.msra.mxu0 %v205
    %369 = vmatprep.subr.bf16.mxu0 0
    %370 = vmatpush1.bf16.msra.mxu0 %v206
    %371 = vmatprep.subr.bf16.mxu0 0
    %372 = vmatpush1.bf16.msra.mxu0 %v207
    %373 = vmatprep.subr.bf16.mxu0 0
    %374 = vmatpush1.bf16.msra.mxu0 %v208
    %375 = vmatprep.mubr.bf16.mxu0 %v339
    %376 = vmatmul.mubr.bf16.gmra.mrb[0].mxu0 %v331
    %v377 = vpop.f32.mrb[0].mxu0
    %v378 = vadd.f32 0.0, %v377
    %v379 = vpop.f32.mrb[0].mxu0
    %v380 = vpop.f32.mrb[0].mxu0
    %v381 = vpop.f32.mrb[0].mxu0
    %382 = vdwg.mxu0
    %383 = vmatprep.subr.bf16.mxu0 0
    %384 = vmatpush1.bf16.msra.mxu0 %v209
    %385 = vmatprep.subr.bf16.mxu0 0
    %386 = vmatpush1.bf16.msra.mxu0 %v210
    %387 = vmatprep.subr.bf16.mxu0 0
    %388 = vmatpush1.bf16.msra.mxu0 %v211
    %389 = vmatprep.subr.bf16.mxu0 0
    %390 = vmatpush1.bf16.msra.mxu0 %v212
    %391 = vmatprep.subr.bf16.mxu0 0
    %392 = vmatpush1.bf16.msra.mxu0 %v213
    %393 = vmatprep.subr.bf16.mxu0 0
    %394 = vmatpush1.bf16.msra.mxu0 %v214
    %395 = vmatprep.subr.bf16.mxu0 0
    %396 = vmatpush1.bf16.msra.mxu0 %v215
    %397 = vmatprep.subr.bf16.mxu0 0
    %398 = vmatpush1.bf16.msra.mxu0 %v216
    %399 = vmatprep.subr.bf16.mxu0 0
    %400 = vmatpush1.bf16.msra.mxu0 0
    %401 = vmatprep.subr.bf16.mxu0 0
    %402 = vmatpush1.bf16.msra.mxu0 0
    %403 = vmatprep.subr.bf16.mxu0 0
    %404 = vmatpush1.bf16.msra.mxu0 0
    %405 = vmatprep.subr.bf16.mxu0 0
    %406 = vmatpush1.bf16.msra.mxu0 0
    %407 = vmatprep.subr.bf16.mxu0 0
    %408 = vmatpush1.bf16.msra.mxu0 0
    %409 = vmatprep.subr.bf16.mxu0 0
    %410 = vmatpush1.bf16.msra.mxu0 0
    %411 = vmatprep.subr.bf16.mxu0 0
    %412 = vmatpush1.bf16.msra.mxu0 0
    %413 = vmatprep.subr.bf16.mxu0 0
    %414 = vmatpush1.bf16.msra.mxu0 0
    %415 = vmatprep.mubr.bf16.mxu0 0
    %416 = vmatmul.mubr.bf16.gmra.mrb[0].mxu0 %v338
    %v417 = vpop.f32.mrb[0].mxu0
    %v418 = vadd.f32 %v378, %v417
    %v419 = vpop.f32.mrb[0].mxu0
    %v420 = vpop.f32.mrb[0].mxu0
    %v421 = vpop.f32.mrb[0].mxu0
    %422 = vdwg.mxu0
    %v423 = vmax.f32 %v316, %v418
    %s424 = scalar_lea.vmem %s0, 12
    %v425 = vld [vmem:[%s424] sm:$0x3f]
    %v427 = vcombine.high %v425, %v425
    %v429 = vunpack.c.l.s4 1983009808
    %v430 = vunpack.c.0.s8 %v429
    %v431 = vlaneseq
    %v432 = vshrl.u32 %v431, 7
    %v433 = vsub.s32 %v430, %v432
    %v434 = vrot.slane %v425, %v433
    %v436 = vunpack.c.l.s4 1983009808
    %v437 = vunpack.c.0.s8 %v436
    %v438 = vlaneseq
    %v439 = vshrl.u32 %v438, 7
    %v440 = vsub.s32 %v437, %v439
    %v441 = vrot.slane %v427, %v440
    %v442 = vcombine.high %v434, %v434
    %446 = vmatprep.subr.bf16.mxu0 0
    %447 = vmatpush1.bf16.msra.mxu0 %v193
    %448 = vmatprep.subr.bf16.mxu0 0
    %449 = vmatpush1.bf16.msra.mxu0 %v194
    %450 = vmatprep.subr.bf16.mxu0 0
    %451 = vmatpush1.bf16.msra.mxu0 %v195
    %452 = vmatprep.subr.bf16.mxu0 0
    %453 = vmatpush1.bf16.msra.mxu0 %v196
    %454 = vmatprep.subr.bf16.mxu0 0
    %455 = vmatpush1.bf16.msra.mxu0 %v197
    %456 = vmatprep.subr.bf16.mxu0 0
    %457 = vmatpush1.bf16.msra.mxu0 %v198
    %458 = vmatprep.subr.bf16.mxu0 0
    %459 = vmatpush1.bf16.msra.mxu0 %v199
    %460 = vmatprep.subr.bf16.mxu0 0
    %461 = vmatpush1.bf16.msra.mxu0 %v200
    %462 = vmatprep.subr.bf16.mxu0 0
    %463 = vmatpush1.bf16.msra.mxu0 %v201
    %464 = vmatprep.subr.bf16.mxu0 0
    %465 = vmatpush1.bf16.msra.mxu0 %v202
    %466 = vmatprep.subr.bf16.mxu0 0
    %467 = vmatpush1.bf16.msra.mxu0 %v203
    %468 = vmatprep.subr.bf16.mxu0 0
    %469 = vmatpush1.bf16.msra.mxu0 %v204
    %470 = vmatprep.subr.bf16.mxu0 0
    %471 = vmatpush1.bf16.msra.mxu0 %v205
    %472 = vmatprep.subr.bf16.mxu0 0
    %473 = vmatpush1.bf16.msra.mxu0 %v206
    %474 = vmatprep.subr.bf16.mxu0 0
    %475 = vmatpush1.bf16.msra.mxu0 %v207
    %476 = vmatprep.subr.bf16.mxu0 0
    %477 = vmatpush1.bf16.msra.mxu0 %v208
    %478 = vmatprep.mubr.bf16.mxu0 %v442
    %479 = vmatmul.mubr.bf16.gmra.mrb[0].mxu0 %v434
    %v480 = vpop.f32.mrb[0].mxu0
    %v481 = vadd.f32 0.0, %v480
    %v482 = vpop.f32.mrb[0].mxu0
    %v483 = vpop.f32.mrb[0].mxu0
    %v484 = vpop.f32.mrb[0].mxu0
    %485 = vdwg.mxu0
    %486 = vmatprep.subr.bf16.mxu0 0
    %487 = vmatpush1.bf16.msra.mxu0 %v209
    %488 = vmatprep.subr.bf16.mxu0 0
    %489 = vmatpush1.bf16.msra.mxu0 %v210
    %490 = vmatprep.subr.bf16.mxu0 0
    %491 = vmatpush1.bf16.msra.mxu0 %v211
    %492 = vmatprep.subr.bf16.mxu0 0
    %493 = vmatpush1.bf16.msra.mxu0 %v212
    %494 = vmatprep.subr.bf16.mxu0 0
    %495 = vmatpush1.bf16.msra.mxu0 %v213
    %496 = vmatprep.subr.bf16.mxu0 0
    %497 = vmatpush1.bf16.msra.mxu0 %v214
    %498 = vmatprep.subr.bf16.mxu0 0
    %499 = vmatpush1.bf16.msra.mxu0 %v215
    %500 = vmatprep.subr.bf16.mxu0 0
    %501 = vmatpush1.bf16.msra.mxu0 %v216
    %502 = vmatprep.subr.bf16.mxu0 0
    %503 = vmatpush1.bf16.msra.mxu0 0
    %504 = vmatprep.subr.bf16.mxu0 0
    %505 = vmatpush1.bf16.msra.mxu0 0
    %506 = vmatprep.subr.bf16.mxu0 0
    %507 = vmatpush1.bf16.msra.mxu0 0
    %508 = vmatprep.subr.bf16.mxu0 0
    %509 = vmatpush1.bf16.msra.mxu0 0
    %510 = vmatprep.subr.bf16.mxu0 0
    %511 = vmatpush1.bf16.msra.mxu0 0
    %512 = vmatprep.subr.bf16.mxu0 0
    %513 = vmatpush1.bf16.msra.mxu0 0
    %514 = vmatprep.subr.bf16.mxu0 0
    %515 = vmatpush1.bf16.msra.mxu0 0
    %516 = vmatprep.subr.bf16.mxu0 0
    %517 = vmatpush1.bf16.msra.mxu0 0
    %518 = vmatprep.mubr.bf16.mxu0 0
    %519 = vmatmul.mubr.bf16.gmra.mrb[0].mxu0 %v441
    %v520 = vpop.f32.mrb[0].mxu0
    %v521 = vadd.f32 %v481, %v520
    %v522 = vpop.f32.mrb[0].mxu0
    %v523 = vpop.f32.mrb[0].mxu0
    %v524 = vpop.f32.mrb[0].mxu0
    %525 = vdwg.mxu0
    %s526 = scalar_lea.vmem %s0, 18
    %v527 = vld [vmem:[%s526] sm:$0x3f]
    %v529 = vcombine.high %v527, %v527
    %v531 = vunpack.c.l.s4 1983009808
    %v532 = vunpack.c.0.s8 %v531
    %v533 = vlaneseq
    %v534 = vshrl.u32 %v533, 7
    %v535 = vsub.s32 %v532, %v534
    %v536 = vrot.slane %v527, %v535
    %v538 = vunpack.c.l.s4 1983009808
    %v539 = vunpack.c.0.s8 %v538
    %v540 = vlaneseq
    %v541 = vshrl.u32 %v540, 7
    %v542 = vsub.s32 %v539, %v541
    %v543 = vrot.slane %v529, %v542
    %v544 = vcombine.high %v536, %v536
    %548 = vmatprep.subr.bf16.mxu0 0
    %549 = vmatpush1.bf16.msra.mxu0 %v193
    %550 = vmatprep.subr.bf16.mxu0 0
    %551 = vmatpush1.bf16.msra.mxu0 %v194
    %552 = vmatprep.subr.bf16.mxu0 0
    %553 = vmatpush1.bf16.msra.mxu0 %v195
    %554 = vmatprep.subr.bf16.mxu0 0
    %555 = vmatpush1.bf16.msra.mxu0 %v196
    %556 = vmatprep.subr.bf16.mxu0 0
    %557 = vmatpush1.bf16.msra.mxu0 %v197
    %558 = vmatprep.subr.bf16.mxu0 0
    %559 = vmatpush1.bf16.msra.mxu0 %v198
    %560 = vmatprep.subr.bf16.mxu0 0
    %561 = vmatpush1.bf16.msra.mxu0 %v199
    %562 = vmatprep.subr.bf16.mxu0 0
    %563 = vmatpush1.bf16.msra.mxu0 %v200
    %564 = vmatprep.subr.bf16.mxu0 0
    %565 = vmatpush1.bf16.msra.mxu0 %v201
    %566 = vmatprep.subr.bf16.mxu0 0
    %567 = vmatpush1.bf16.msra.mxu0 %v202
    %568 = vmatprep.subr.bf16.mxu0 0
    %569 = vmatpush1.bf16.msra.mxu0 %v203
    %570 = vmatprep.subr.bf16.mxu0 0
    %571 = vmatpush1.bf16.msra.mxu0 %v204
    %572 = vmatprep.subr.bf16.mxu0 0
    %573 = vmatpush1.bf16.msra.mxu0 %v205
    %574 = vmatprep.subr.bf16.mxu0 0
    %575 = vmatpush1.bf16.msra.mxu0 %v206
    %576 = vmatprep.subr.bf16.mxu0 0
    %577 = vmatpush1.bf16.msra.mxu0 %v207
    %578 = vmatprep.subr.bf16.mxu0 0
    %579 = vmatpush1.bf16.msra.mxu0 %v208
    %580 = vmatprep.mubr.bf16.mxu0 %v544
    %581 = vmatmul.mubr.bf16.gmra.mrb[0].mxu0 %v536
    %v582 = vpop.f32.mrb[0].mxu0
    %v583 = vadd.f32 0.0, %v582
    %v584 = vpop.f32.mrb[0].mxu0
    %v585 = vpop.f32.mrb[0].mxu0
    %v586 = vpop.f32.mrb[0].mxu0
    %587 = vdwg.mxu0
    %588 = vmatprep.subr.bf16.mxu0 0
    %589 = vmatpush1.bf16.msra.mxu0 %v209
    %590 = vmatprep.subr.bf16.mxu0 0
    %591 = vmatpush1.bf16.msra.mxu0 %v210
    %592 = vmatprep.subr.bf16.mxu0 0
    %593 = vmatpush1.bf16.msra.mxu0 %v211
    %594 = vmatprep.subr.bf16.mxu0 0
    %595 = vmatpush1.bf16.msra.mxu0 %v212
    %596 = vmatprep.subr.bf16.mxu0 0
    %597 = vmatpush1.bf16.msra.mxu0 %v213
    %598 = vmatprep.subr.bf16.mxu0 0
    %599 = vmatpush1.bf16.msra.mxu0 %v214
    %600 = vmatprep.subr.bf16.mxu0 0
    %601 = vmatpush1.bf16.msra.mxu0 %v215
    %602 = vmatprep.subr.bf16.mxu0 0
    %603 = vmatpush1.bf16.msra.mxu0 %v216
    %604 = vmatprep.subr.bf16.mxu0 0
    %605 = vmatpush1.bf16.msra.mxu0 0
    %606 = vmatprep.subr.bf16.mxu0 0
    %607 = vmatpush1.bf16.msra.mxu0 0
    %608 = vmatprep.subr.bf16.mxu0 0
    %609 = vmatpush1.bf16.msra.mxu0 0
    %610 = vmatprep.subr.bf16.mxu0 0
    %611 = vmatpush1.bf16.msra.mxu0 0
    %612 = vmatprep.subr.bf16.mxu0 0
    %613 = vmatpush1.bf16.msra.mxu0 0
    %614 = vmatprep.subr.bf16.mxu0 0
    %615 = vmatpush1.bf16.msra.mxu0 0
    %616 = vmatprep.subr.bf16.mxu0 0
    %617 = vmatpush1.bf16.msra.mxu0 0
    %618 = vmatprep.subr.bf16.mxu0 0
    %619 = vmatpush1.bf16.msra.mxu0 0
    %620 = vmatprep.mubr.bf16.mxu0 0
    %621 = vmatmul.mubr.bf16.gmra.mrb[0].mxu0 %v543
    %v622 = vpop.f32.mrb[0].mxu0
    %v623 = vadd.f32 %v583, %v622
    %v624 = vpop.f32.mrb[0].mxu0
    %v625 = vpop.f32.mrb[0].mxu0
    %v626 = vpop.f32.mrb[0].mxu0
    %627 = vdwg.mxu0
    %v628 = vmax.f32 %v521, %v623
    %v629 = vmax.f32 %v423, %v628
    %v630 = vld [vmem:[%s2] sm:$0x1]
    %v632 = vlaneseq
    %v633 = vshrl.u32 %v632, 7
    %v634 = vsub.s32 0, %v633
    %v635 = vrot.slane %v630, %v634
    %v637 = vadd.f32 %v629, %v635
    %v638 = vmax.f32 %v637, 0.0
    %v639 = vld [vmem:[%s3] sm:$0xff]
    %v640 = vld [vmem:[%s3 + $0x8] sm:$0xff]
    %v641 = vld [vmem:[%s3 + $0x10] sm:$0xff]
    %v642 = vld [vmem:[%s3 + $0x18] sm:$0xff]
    %v643 = vld [vmem:[%s3 + $0x20] sm:$0xff]
    %v644 = vld [vmem:[%s3 + $0x28] sm:$0xff]
    %v645 = vld [vmem:[%s3 + $0x30] sm:$0xff]
    %v646 = vld [vmem:[%s3 + $0x38] sm:$0xff]
    %v647 = vld [vmem:[%s3 + $0x40] sm:$0xff]
    %v648 = vld [vmem:[%s3 + $0x48] sm:$0xff]
    %v649 = vld [vmem:[%s3 + $0x50] sm:$0xff]
    %v650 = vld [vmem:[%s3 + $0x58] sm:$0xff]
    %v651 = vld [vmem:[%s3 + $0x60] sm:$0xff]
    %v652 = vld [vmem:[%s3 + $0x68] sm:$0xff]
    %v653 = vld [vmem:[%s3 + $0x70] sm:$0xff]
    %v654 = vld [vmem:[%s3 + $0x78] sm:$0xff]
    %v655 = vld [vmem:[%s4] sm:$0x1]
    %v657 = vlaneseq
    %v658 = vshrl.u32 %v657, 7
    %v659 = vsub.s32 0, %v658
    %v660 = vrot.slane %v655, %v659
    %662 = vmatprep.subr.mxu0 0.0
    %663 = vmatpush1.msra.mxu0 %v639
    %664 = vmatprep.subr.mxu0 0.0
    %665 = vmatpush1.msra.mxu0 %v640
    %666 = vmatprep.subr.mxu0 0.0
    %667 = vmatpush1.msra.mxu0 %v641
    %668 = vmatprep.subr.mxu0 0.0
    %669 = vmatpush1.msra.mxu0 %v642
    %670 = vmatprep.subr.mxu0 0.0
    %671 = vmatpush1.msra.mxu0 %v643
    %672 = vmatprep.subr.mxu0 0.0
    %673 = vmatpush1.msra.mxu0 %v644
    %674 = vmatprep.subr.mxu0 0.0
    %675 = vmatpush1.msra.mxu0 %v645
    %676 = vmatprep.subr.mxu0 0.0
    %677 = vmatpush1.msra.mxu0 %v646
    %678 = vmatprep.subr.mxu0 0.0
    %679 = vmatpush1.msra.mxu0 %v647
    %680 = vmatprep.subr.mxu0 0.0
    %681 = vmatpush1.msra.mxu0 %v648
    %682 = vmatprep.subr.mxu0 0.0
    %683 = vmatpush1.msra.mxu0 %v649
    %684 = vmatprep.subr.mxu0 0.0
    %685 = vmatpush1.msra.mxu0 %v650
    %686 = vmatprep.subr.mxu0 0.0
    %687 = vmatpush1.msra.mxu0 %v651
    %688 = vmatprep.subr.mxu0 0.0
    %689 = vmatpush1.msra.mxu0 %v652
    %690 = vmatprep.subr.mxu0 0.0
    %691 = vmatpush1.msra.mxu0 %v653
    %692 = vmatprep.subr.mxu0 0.0
    %693 = vmatpush1.msra.mxu0 %v654
    %694 = vmatprep.subr.mxu0 0.0
    %695 = vmatpush1.msra.mxu0 0.0
    %696 = vmatprep.subr.mxu0 0.0
    %697 = vmatpush1.msra.mxu0 0.0
    %698 = vmatprep.subr.mxu0 0.0
    %699 = vmatpush1.msra.mxu0 0.0
    %700 = vmatprep.subr.mxu0 0.0
    %701 = vmatpush1.msra.mxu0 0.0
    %702 = vmatprep.subr.mxu0 0.0
    %703 = vmatpush1.msra.mxu0 0.0
    %704 = vmatprep.subr.mxu0 0.0
    %705 = vmatpush1.msra.mxu0 0.0
    %706 = vmatprep.subr.mxu0 0.0
    %707 = vmatpush1.msra.mxu0 0.0
    %708 = vmatprep.subr.mxu0 0.0
    %709 = vmatpush1.msra.mxu0 0.0
    %710 = vmatprep.subr.mxu0 0.0
    %711 = vmatpush1.msra.mxu0 0.0
    %712 = vmatprep.subr.mxu0 0.0
    %713 = vmatpush1.msra.mxu0 0.0
    %714 = vmatprep.subr.mxu0 0.0
    %715 = vmatpush1.msra.mxu0 0.0
    %716 = vmatprep.subr.mxu0 0.0
    %717 = vmatpush1.msra.mxu0 0.0
    %718 = vmatprep.subr.mxu0 0.0
    %719 = vmatpush1.msra.mxu0 0.0
    %720 = vmatprep.subr.mxu0 0.0
    %721 = vmatpush1.msra.mxu0 0.0
    %722 = vmatprep.subr.mxu0 0.0
    %723 = vmatpush1.msra.mxu0 0.0
    %724 = vmatprep.subr.mxu0 0.0
    %725 = vmatpush1.msra.mxu0 0.0
    %726 = vmatprep.mubr.f32.mxu0 0.0
    %727 = vmatmul.mubr.f32.gmra.mrb[0].mxu0 %v638
    %v728 = vpop.f32.mrb[0].mxu0
    %v729 = vadd.f32 %v660, %v728
    %v730 = vpop.f32.mrb[0].mxu0
    %731 = vdwg.mxu0
    %v732 = vlaneseq
    %v733 = vand.u32 %v732, 127
    %vm734 = vcmp.lt.s32.totalorder %v733, 8
    %v735 = vsel %vm734, %v729, -1e+30
    %vm736 = vcmask 1041408
    %v737 = vsel %vm736, %v735, -inf
    %738 = vmax.xlane.f32.xlu0 %v737
    %v739 = vpop.xlane.xlu0 %738
    %v740 = vsub.f32 %v735, %v739
    %v741 = vmul.f32 %v740, 1.442695
    %v742 = vpow.pop %v741
    %v743 = vsel %vm736, %v742, 0.0
    %744 = vadd.xlane.f32.xlu0 %v743
    %v745 = vpop.xlane.xlu0 %744
    %v746 = vlog2.pop %v745
    %v747 = vmul.f32 %v746, 0.6931472
    %v748 = vadd.f32 %v747, %v739
    %v749 = vld [vmem:[%s5] sm:$0x3]
    %v750 = vsub.f32 %v735, %v748
    %v751 = vmul.f32 %v749, %v750
    %v752 = vsel %vm736, %v751, 0.0
    %753 = vadd.xlane.f32.xlu0 %v752
    %v754 = vpop.xlane.xlu0 %753
    %v755 = vsub.f32 0.0, %v754
    %v756 = vsel %vm736, %v755, 0.0
    %v757 = vrot.slane %v756, 4
    %v758 = vadd.f32 %v756, %v757
    %v759 = vrot.slane %v758, 2
    %v760 = vadd.f32 %v758, %v759
    %v761 = vrot.slane %v760, 1
    %v762 = vadd.f32 %v760, %v761
    %v763 = vmul.f32 %v762, 0.5
    %vm764 = vcmask 0
    %765 = vst.msk [vmem:[#allocation2] sm:$0x1] %vm764, %v763
    %v766 = vmul.f32 %v638, %v638
    %vm767 = vcmask 1043456
    %v768 = vsel %vm767, %v766, 0.0
    %769 = vadd.xlane.f32.xlu0 %v768
    %v770 = vpop.xlane.xlu0 %769
    %771 = vmatprep.subr.mxu0 0.0
    %772 = vmatpush1.xpose.msra.mxu0 %v638
    %773 = vmatprep.subr.mxu0 0.0
    %774 = vmatpush1.xpose.msra.mxu0 0.0
    %775 = vmatprep.subr.mxu0 0.0
    %776 = vmatpush1.xpose.msra.mxu0 0.0
    %777 = vmatprep.subr.mxu0 0.0
    %778 = vmatpush1.xpose.msra.mxu0 0.0
    %779 = vmatprep.subr.mxu0 0.0
    %780 = vmatpush1.xpose.msra.mxu0 0.0
    %781 = vmatprep.subr.mxu0 0.0
    %782 = vmatpush1.xpose.msra.mxu0 0.0
    %783 = vmatprep.subr.mxu0 0.0
    %784 = vmatpush1.xpose.msra.mxu0 0.0
    %785 = vmatprep.subr.mxu0 0.0
    %786 = vmatpush1.xpose.msra.mxu0 0.0
    %787 = vmatprep.subr.mxu0 0.0
    %788 = vmatpush1.xpose.msra.mxu0 0.0
    %789 = vmatprep.subr.mxu0 0.0
    %790 = vmatpush1.xpose.msra.mxu0 0.0
    %791 = vmatprep.subr.mxu0 0.0
    %792 = vmatpush1.xpose.msra.mxu0 0.0
    %793 = vmatprep.subr.mxu0 0.0
    %794 = vmatpush1.xpose.msra.mxu0 0.0
    %795 = vmatprep.subr.mxu0 0.0
    %796 = vmatpush1.xpose.msra.mxu0 0.0
    %797 = vmatprep.subr.mxu0 0.0
    %798 = vmatpush1.xpose.msra.mxu0 0.0
    %799 = vmatprep.subr.mxu0 0.0
    %800 = vmatpush1.xpose.msra.mxu0 0.0
    %801 = vmatprep.subr.mxu0 0.0
    %802 = vmatpush1.xpose.msra.mxu0 0.0
    %803 = vmatprep.subr.mxu0 0.0
    %804 = vmatpush1.xpose.msra.mxu0 0.0
    %805 = vmatprep.subr.mxu0 0.0
    %806 = vmatpush1.xpose.msra.mxu0 0.0
    %807 = vmatprep.subr.mxu0 0.0
    %808 = vmatpush1.xpose.msra.mxu0 0.0
    %809 = vmatprep.subr.mxu0 0.0
    %810 = vmatpush1.xpose.msra.mxu0 0.0
    %811 = vmatprep.subr.mxu0 0.0
    %812 = vmatpush1.xpose.msra.mxu0 0.0
    %813 = vmatprep.subr.mxu0 0.0
    %814 = vmatpush1.xpose.msra.mxu0 0.0
    %815 = vmatprep.subr.mxu0 0.0
    %816 = vmatpush1.xpose.msra.mxu0 0.0
    %817 = vmatprep.subr.mxu0 0.0
    %818 = vmatpush1.xpose.msra.mxu0 0.0
    %819 = vmatprep.subr.mxu0 0.0
    %820 = vmatpush1.xpose.msra.mxu0 0.0
    %821 = vmatprep.subr.mxu0 0.0
    %822 = vmatpush1.xpose.msra.mxu0 0.0
    %823 = vmatprep.subr.mxu0 0.0
    %824 = vmatpush1.xpose.msra.mxu0 0.0
    %825 = vmatprep.subr.mxu0 0.0
    %826 = vmatpush1.xpose.msra.mxu0 0.0
    %827 = vmatprep.subr.mxu0 0.0
    %828 = vmatpush1.xpose.msra.mxu0 0.0
    %829 = vmatprep.subr.mxu0 0.0
    %830 = vmatpush1.xpose.msra.mxu0 0.0
    %831 = vmatprep.subr.mxu0 0.0
    %832 = vmatpush1.xpose.msra.mxu0 0.0
    %833 = vmatprep.subr.mxu0 0.0
    %834 = vmatpush1.xpose.msra.mxu0 0.0
    %835 = vmatprep.mubr.f32.mxu0 0.0
    %836 = vmatmul.mubr.f32.gmra.mrb[0].mxu0 %v638
    %v837 = vpop.f32.mrb[0].mxu0
    %v838 = vadd.f32 0.0, %v837
    %v839 = vpop.f32.mrb[0].mxu0
    %840 = vdwg.mxu0
    %841 = vxpose.xlu0.b32.start [1/16] %v770, 128
    %842 = vxpose.xlu0.b32.cont [2/16] 0.0, 128
    %843 = vxpose.xlu0.b32.cont [3/16] 0.0, 128
    %844 = vxpose.xlu0.b32.cont [4/16] 0.0, 128
    %845 = vxpose.xlu0.b32.cont [5/16] 0.0, 128
    %846 = vxpose.xlu0.b32.cont [6/16] 0.0, 128
    %847 = vxpose.xlu0.b32.cont [7/16] 0.0, 128
    %848 = vxpose.xlu0.b32.cont [8/16] 0.0, 128
    %849 = vxpose.xlu0.b32.cont [9/16] 0.0, 128
    %850 = vxpose.xlu0.b32.cont [10/16] 0.0, 128
    %851 = vxpose.xlu0.b32.cont [11/16] 0.0, 128
    %852 = vxpose.xlu0.b32.cont [12/16] 0.0, 128
    %853 = vxpose.xlu0.b32.cont [13/16] 0.0, 128
    %854 = vxpose.xlu0.b32.cont [14/16] 0.0, 128
    %855 = vxpose.xlu0.b32.cont [15/16] 0.0, 128
    %856 = vxpose.xlu0.b32.end [16/16] 0.0, 128
    %v857 = vpop.trf.xlu0
    %v858 = vpop.trf.xlu0
    %v859 = vpop.trf.xlu0
    %v860 = vpop.trf.xlu0
    %v861 = vpop.trf.xlu0
    %v862 = vpop.trf.xlu0
    %v863 = vpop.trf.xlu0
    %v864 = vpop.trf.xlu0
    %v865 = vpop.trf.xlu0
    %v866 = vpop.trf.xlu0
    %v867 = vpop.trf.xlu0
    %v868 = vpop.trf.xlu0
    %v869 = vpop.trf.xlu0
    %v870 = vpop.trf.xlu0
    %v871 = vpop.trf.xlu0
    %v872 = vpop.trf.xlu0
    %v873 = vlaneseq
    %v874 = vshrl.u32 %v873, 7
    %v875 = vsub.s32 0, %v874
    %v876 = vrot.slane %v857, %v875
    %v877 = vadd.f32 %v770, %v876
    %v878 = vmul.f32 %v838, 2.0
    %v879 = vsub.f32 %v877, %v878
    %v880 = vmax.f32 %v879, 0.0
    %vm881 = vcmask 27648
    %v882 = vsel %vm881, %v880, 0.0
    %883 = vadd.xlane.f32.xlu0 %v882
    %v884 = vpop.xlane.xlu0 %883
    %v885 = vrot.slane %v884, 4
    %v886 = vadd.f32 %v884, %v885
    %v887 = vrot.slane %v886, 2
    %v888 = vadd.f32 %v886, %v887
    %v889 = vrot.slane %v888, 1
    %v890 = vadd.f32 %v888, %v889
    %s891 = vtos %v890
    %v892 = vstv %s891
    %v893 = vrcp.pop 12.0
    %v894 = vmul.f32 %v892, %v893
    %v895 = vmax.f32 %v894, 1e-12
    %v896 = vmul.f32 %v895, 0.25
    %v897 = vlaneseq
    %v898 = vshrl.u32 %v897, 7
    %vm899 = vcmp.lt.s32.totalorder %v898, 2
    %vm900 = vcmp.lt.s32.totalorder %v733, 2
    %vm901 = vmxor %vm899, %vm900
    %vm902 = vmxor %vm901, 1
    %v903 = vsel %vm902, 1.0, -1.0
    %v904 = vmul.f32 %v896, 16.0
    %v905 = vrcp.pop %v904
    %v906 = vmul.f32 %v880, %v905
    %v907 = vsub.f32 0.0, %v906
    %v908 = vmul.f32 %v907, 1.442695
    %v909 = vpow.pop %v908
    %v910 = vmul.f32 %v903, %v909
    %v911 = vsel %vm881, %v910, 0.0
    %912 = vadd.xlane.f32.xlu0 %v911
    %v913 = vpop.xlane.xlu0 %912
    %v914 = vrot.slane %v913, 4
    %v915 = vadd.f32 %v913, %v914
    %v916 = vrot.slane %v915, 2
    %v917 = vadd.f32 %v915, %v916
    %v918 = vrot.slane %v917, 1
    %v919 = vadd.f32 %v917, %v918
    %s920 = vtos %v919
    %v921 = vstv %s920
    %v922 = vadd.f32 %v921, 0.0
    %v923 = vmul.f32 %v909, %v909
    %v924 = vmul.f32 %v903, %v923
    %v925 = vsel %vm881, %v924, 0.0
    %926 = vadd.xlane.f32.xlu0 %v925
    %v927 = vpop.xlane.xlu0 %926
    %v928 = vrot.slane %v927, 4
    %v929 = vadd.f32 %v927, %v928
    %v930 = vrot.slane %v929, 2
    %v931 = vadd.f32 %v929, %v930
    %v932 = vrot.slane %v931, 1
    %v933 = vadd.f32 %v931, %v932
    %s934 = vtos %v933
    %v935 = vstv %s934
    %v936 = vadd.f32 %v922, %v935
    %v937 = vmul.f32 %v923, %v923
    %v938 = vmul.f32 %v903, %v937
    %v939 = vsel %vm881, %v938, 0.0
    %940 = vadd.xlane.f32.xlu0 %v939
    %v941 = vpop.xlane.xlu0 %940
    %v942 = vrot.slane %v941, 4
    %v943 = vadd.f32 %v941, %v942
    %v944 = vrot.slane %v943, 2
    %v945 = vadd.f32 %v943, %v944
    %v946 = vrot.slane %v945, 1
    %v947 = vadd.f32 %v945, %v946
    %s948 = vtos %v947
    %v949 = vstv %s948
    %v950 = vadd.f32 %v936, %v949
    %v951 = vmul.f32 %v937, %v937
    %v952 = vmul.f32 %v903, %v951
    %v953 = vsel %vm881, %v952, 0.0
    %954 = vadd.xlane.f32.xlu0 %v953
    %v955 = vpop.xlane.xlu0 %954
    %v956 = vrot.slane %v955, 4
    %v957 = vadd.f32 %v955, %v956
    %v958 = vrot.slane %v957, 2
    %v959 = vadd.f32 %v957, %v958
    %v960 = vrot.slane %v959, 1
    %v961 = vadd.f32 %v959, %v960
    %s962 = vtos %v961
    %v963 = vstv %s962
    %v964 = vadd.f32 %v950, %v963
    %v965 = vmul.f32 %v951, %v951
    %v966 = vmul.f32 %v903, %v965
    %v967 = vsel %vm881, %v966, 0.0
    %968 = vadd.xlane.f32.xlu0 %v967
    %v969 = vpop.xlane.xlu0 %968
    %v970 = vrot.slane %v969, 4
    %v971 = vadd.f32 %v969, %v970
    %v972 = vrot.slane %v971, 2
    %v973 = vadd.f32 %v971, %v972
    %v974 = vrot.slane %v973, 1
    %v975 = vadd.f32 %v973, %v974
    %s976 = vtos %v975
    %v977 = vstv %s976
    %v978 = vadd.f32 %v964, %v977
    %v979 = vmul.f32 %v978, 0.25
    %980 = vst.msk [vmem:[#allocation4] sm:$0x1] %vm764, %v979
    // Predicated region
    $region26: #{transfer_net_forward.7} parent=1 // pred_check
      _
    $region27: #{transfer_net_forward.7} parent=1 // pred_check_branch
      %982 = sbr.rel (0) target = $region29
    $region28: #{transfer_net_forward.7} parent=1 // pred_region
      %s984 = ssub.s32 16, 16
      %985 = vsyncadd [#allocation3], %s984
      %s987 = sshll.u32 [#allocation2], 4
      %s988 = int_to_ptr.vmem [resolvable:$true] %s987
      %990 = dma.vmem_to_hbm [thread:$0]  %s988, 16, %s6, [#allocation3]
    $region29: #{transfer_net_forward.7} parent=1 // pred_fallthru
      _
    // Predicated region
    $region30: #{transfer_net_forward.7} parent=1 // pred_check
      _
    $region31: #{transfer_net_forward.7} parent=1 // pred_check_branch
      %992 = sbr.rel (0) target = $region33
    $region32: #{transfer_net_forward.7} parent=1 // pred_region
      %s994 = ssub.s32 16, 16
      %995 = vsyncadd [#allocation5], %s994
      %s997 = sshll.u32 [#allocation4], 4
      %s998 = int_to_ptr.vmem [resolvable:$true] %s997
      %1000 = dma.vmem_to_hbm [thread:$0]  %s998, 16, %s7, [#allocation5]
    $region33: #{transfer_net_forward.7} parent=1 // pred_fallthru
      _
    // Predicated region
    $region34: #{transfer_net_forward.7} parent=1 // pred_check
      _
    $region35: #{transfer_net_forward.7} parent=1 // pred_check_branch
      %1002 = sbr.rel (0) target = $region37
    $region36: #{transfer_net_forward.7} parent=1 // pred_region
      %1003 = dma.done [#allocation3], 16
    $region37: #{transfer_net_forward.7} parent=1 // pred_fallthru
      _
    // Predicated region
    $region38: #{transfer_net_forward.7} parent=1 // pred_check
      _
    $region39: #{transfer_net_forward.7} parent=1 // pred_check_branch
      %1005 = sbr.rel (0) target = $region41
    $region40: #{transfer_net_forward.7} parent=1 // pred_region
      %1006 = dma.done [#allocation5], 16
    $region41: #{transfer_net_forward.7} parent=1 // pred_fallthru
      _
    %1007 = vsyncpa [#allocation3], 1
    %1008 = vsyncpa [#allocation5], 1

</llo_original>
